<compile_context>
chip_gen: v7x
topology: tpu7x:2x2x1
jax: 0.10.0
libtpu: 0.0.40
codegen_flags: <defaults>
</compile_context>

<pallas_src>
import functools

import jax
import jax.numpy as jnp
from jax.experimental import pallas as pl
from jax.experimental.pallas import tpu as pltpu

BN_EPS = 1e-3

MODEL_CFG = dict(
    LAYER_NUMS=[1, 1],
    LAYER_STRIDES=[1, 2],
    NUM_FILTERS=[8, 16],
    UPSAMPLE_STRIDES=[1, 2],
    NUM_UPSAMPLE_FILTERS=[8, 8],
)
INPUT_CHANNELS = 4


# ----------------------------------------------------------------------------
# Fused whole-backbone kernel (one batch element per grid step).
# ----------------------------------------------------------------------------
def _bev_backbone_kernel(*args, plan):
    """args = [x_ref,
               (w_dy0, w_dy1, w_dy2, scale, bias) per conv per level,
               (w_blockdiag, scale, bias) per level's deblock,     # inputs
               up_ref per level,                                   # outputs
               H-halo pad scratch per conv]                        # scratch
    All activations are lane-packed (H, W*C).
    """
    num_levels = len(plan)
    n_in = 1 + sum(5 * len(lv["convs"]) + 3 for lv in plan)
    in_refs = args[:n_in]
    out_refs = args[n_in:n_in + num_levels]
    pad_refs = args[n_in + num_levels:]

    widx = 1
    pidx = 0
    act = in_refs[0][0]                      # (H0, W0*C0), batch dim squeezed

    for li, lv in enumerate(plan):
        for cv in lv["convs"]:
            w_refs = in_refs[widx:widx + 3]  # 3 block-Toeplitz weights (per dy)
            s_ref = in_refs[widx + 3]
            b_ref = in_refs[widx + 4]
            widx += 5
            pad_ref = pad_refs[pidx]
            pidx += 1
            hi, ho, stride = cv["h_in"], cv["h_out"], cv["stride"]
            wc_in = cv["w_in"] * cv["c_in"]

            # 1-row top/bottom halo only (W halo is folded into the weights).
            # Zeroed every iteration: megacore-safe, and only 2 small stores.
            zrow = jnp.zeros((1, wc_in), jnp.float32)
            pad_ref[pl.ds(0, 1), :] = zrow
            pad_ref[pl.ds(hi + 1, 1), :] = zrow
            pad_ref[pl.ds(1, hi), :] = act

            # 3x3 conv = 3 dense dots (one per kernel row dy); W taps + W
            # padding live inside the block-Toeplitz weight, so no lane work.
            acc = None
            for dy in range(3):
                if stride == 1:
                    rows = pad_ref[pl.ds(dy, ho), :]
                else:
                    rows = pad_ref[pl.ds(dy, ho, stride), :]
                part = jnp.dot(rows, w_refs[dy][...],
                               preferred_element_type=jnp.float32)
                acc = part if acc is None else acc + part

            # BN(eval) + ReLU epilogue; scale/bias pre-tiled to (1, Wo*Cout).
            act = jnp.maximum(acc * s_ref[...] + b_ref[...], 0.0)

        # Deblock: ConvTranspose2d(kernel == stride == k) as ONE dot against a
        # block-diagonal (W*Cf, W*Cup*k*k) weight -> output already lane-dense.
        wd_ref = in_refs[widx]
        sd_ref = in_refs[widx + 1]
        bd_ref = in_refs[widx + 2]
        widx += 3
        de = lv["deconv"]
        cols = de["c_out"] * de["k"] * de["k"]
        yd = jnp.dot(act, wd_ref[...], preferred_element_type=jnp.float32)
        yd = jnp.maximum(yd * sd_ref[...] + bd_ref[...], 0.0)
        out_refs[li][...] = yd.reshape(1, de["h"], de["w"] * cols)


# ----------------------------------------------------------------------------
# Wrapper-side weight packing helpers (static, built once per call).
# ----------------------------------------------------------------------------
def _toeplitz_w(w_torch, dy, wi, wo, stride, cin, cout):
    """Block-Toeplitz-along-W weight for kernel row `dy`.

    T[w_in*cin + c, o*cout + f] = W[f, c, dy, dx] with dx = w_in - o*stride + 1,
    zero when dx is outside [0, 2].  The W-direction ZeroPad2d(1) is folded in
    (padding columns simply contribute nothing)."""
    w_dy = w_torch.astype(jnp.float32)[:, :, dy, :]          # (cout, cin, 3)
    w_in = jnp.arange(wi)[:, None]
    o = jnp.arange(wo)[None, :]
    dx = w_in - o * stride + 1                               # (wi, wo)
    valid = (dx >= 0) & (dx <= 2)
    g = w_dy[:, :, jnp.clip(dx, 0, 2)]                       # (cout, cin, wi, wo)
    g = jnp.where(valid[None, None], g, 0.0)
    return jnp.transpose(g, (2, 1, 3, 0)).reshape(wi * cin, wo * cout)


# ----------------------------------------------------------------------------
# Wrapper: pack weights, build specs, one pallas_call, then layout glue.
# ----------------------------------------------------------------------------
def bev_backbone_forward(x_nhwc, blocks, deblocks):
    n, h0, w0, c0 = x_nhwc.shape
    x_pack = x_nhwc.reshape(n, h0, w0 * c0)        # lane-packed (N, H, W*C)

    plan = []
    params = []
    in_specs = [pl.BlockSpec((1, h0, w0 * c0), lambda b: (b, 0, 0))]
    scratch_shapes = []
    out_shapes = []
    out_specs = []

    # NOTE: whole-frame blocks and one pad scratch per conv are fine at these
    # toy shapes; at realistic BEV sizes (e.g. 496x432) tile H into row bands
    # with a 1-row halo, reuse one max-sized scratch (sequential pl.run_scoped
    # regions), tile the Toeplitz weight along W, and set vmem_limit_bytes so
    # double-buffering fits v7x's 64 MiB VMEM.
    # TODO(synk): add a second parallel grid axis over H row-bands so batch==1
    # still keeps both v7x TensorCores busy.
    ch, cw, cc = h0, w0, c0
    for convs, de in zip(blocks, deblocks):
        conv_plan = []
        for cv in convs:
            stride = int(cv["stride"])
            cout = int(cv["w"].shape[0])
            ho = (ch + 2 - 3) // stride + 1
            wo = (cw + 2 - 3) // stride + 1
            s = cv["bn"]["gamma"] / jnp.sqrt(cv["bn"]["var"] + BN_EPS)
            b = cv["bn"]["beta"] - cv["bn"]["mean"] * s
            for dy in range(3):
                params.append(_toeplitz_w(cv["w"], dy, cw, wo, stride, cc, cout))
            params.append(jnp.tile(s, wo).reshape(1, wo * cout).astype(jnp.float32))
            params.append(jnp.tile(b, wo).reshape(1, wo * cout).astype(jnp.float32))
            scratch_shapes.append(pltpu.VMEM((ch + 2, cw * cc), jnp.float32))
            conv_plan.append(dict(h_in=ch, w_in=cw, c_in=cc,
                                  h_out=ho, w_out=wo, c_out=cout, stride=stride))
            ch, cw, cc = ho, wo, cout

        k = int(de["k"])
        cup = int(de["w"].shape[1])
        cols = cup * k * k
        s = de["bn"]["gamma"] / jnp.sqrt(de["bn"]["var"] + BN_EPS)
        b = de["bn"]["beta"] - de["bn"]["mean"] * s
        # (Cin, Cout, k, k) -> (Cin, Cout*k*k), then block-diagonal over W so
        # the per-pixel matmul keeps the lane-packed layout end to end.
        wd = de["w"].astype(jnp.float32).reshape(cc, cols)
        wblk = jnp.kron(jnp.eye(cw, dtype=jnp.float32), wd)
        params += [wblk,
                   jnp.tile(jnp.repeat(s, k * k), cw).reshape(1, cw * cols).astype(jnp.float32),
                   jnp.tile(jnp.repeat(b, k * k), cw).reshape(1, cw * cols).astype(jnp.float32)]
        plan.append(dict(convs=tuple(conv_plan),
                         deconv=dict(k=k, c_in=cc, c_out=cup, h=ch, w=cw)))
        out_shapes.append(
            jax.ShapeDtypeStruct((n, ch, cw * cols), jnp.float32))
        out_specs.append(
            pl.BlockSpec((1, ch, cw * cols), lambda b: (b, 0, 0)))

    for p in params:
        in_specs.append(pl.BlockSpec(p.shape, lambda b: (0, 0)))

    kernel = functools.partial(_bev_backbone_kernel, plan=tuple(plan))
    ups = pl.pallas_call(
        kernel,
        out_shape=tuple(out_shapes),
        grid=(n,),
        in_specs=in_specs,
        out_specs=tuple(out_specs),
        scratch_shapes=scratch_shapes,
        compiler_params=pltpu.CompilerParams(
            dimension_semantics=("parallel",)),
    )(x_pack, *params)

    # Wrapper layout glue: pixel-shuffle each deblock output, concat on C.
    outs = []
    for lv, up in zip(plan, ups):
        de = lv["deconv"]
        k, cup, dh, dw = de["k"], de["c_out"], de["h"], de["w"]
        y = up.reshape(n, dh, dw, cup, k, k)
        y = jnp.transpose(y, (0, 1, 4, 2, 5, 3)).reshape(n, dh * k, dw * k, cup)
        outs.append(y)
    # TODO(synk): fractional UPSAMPLE_STRIDES (<1 -> strided Conv2d deblock),
    # the no-deblock path, and the extra trailing deblock
    # (len(UPSAMPLE_STRIDES) > num_levels) are valid in the PyTorch module but
    # not exercised by this config.
    return jnp.concatenate(outs, axis=-1) if len(outs) > 1 else outs[0]


# ----------------------------------------------------------------------------
# Parameter init (deterministic, synthetic) and pure-JAX reference.
# ----------------------------------------------------------------------------
def init_params(key):
    layer_nums = MODEL_CFG["LAYER_NUMS"]
    strides = MODEL_CFG["LAYER_STRIDES"]
    num_filters = MODEL_CFG["NUM_FILTERS"]
    up_strides = MODEL_CFG["UPSAMPLE_STRIDES"]
    up_filters = MODEL_CFG["NUM_UPSAMPLE_FILTERS"]
    c_in_list = [INPUT_CHANNELS] + num_filters[:-1]
    keys = iter(jax.random.split(key, 256))

    def bn(c):
        return dict(
            gamma=jax.random.uniform(next(keys), (c,), minval=0.5, maxval=1.5),
            beta=jax.random.normal(next(keys), (c,)) * 0.1,
            mean=jax.random.normal(next(keys), (c,)) * 0.1,
            var=jax.random.uniform(next(keys), (c,), minval=0.5, maxval=1.5),
        )

    blocks, deblocks = [], []
    for i in range(len(layer_nums)):
        cin, cf = c_in_list[i], num_filters[i]
        convs = [dict(w=jax.random.normal(next(keys), (cf, cin, 3, 3)) * 0.1,
                      stride=strides[i], bn=bn(cf))]
        for _ in range(layer_nums[i]):
            convs.append(dict(w=jax.random.normal(next(keys), (cf, cf, 3, 3)) * 0.1,
                              stride=1, bn=bn(cf)))
        blocks.append(convs)
        k = up_strides[i]
        deblocks.append(dict(w=jax.random.normal(next(keys), (cf, up_filters[i], k, k)) * 0.1,
                             k=k, bn=bn(up_filters[i])))
    return blocks, deblocks


def ref_forward(x_nhwc, blocks, deblocks):
    def bn_relu(y, bn):
        s = bn["gamma"] / jnp.sqrt(bn["var"] + BN_EPS)
        b = bn["beta"] - bn["mean"] * s
        return jnp.maximum(y * s + b, 0.0)

    ups = []
    x = x_nhwc
    for convs, de in zip(blocks, deblocks):
        for c in convs:
            y = jax.lax.conv_general_dilated(
                x, jnp.transpose(c["w"], (2, 3, 1, 0)),
                window_strides=(c["stride"], c["stride"]),
                padding=((1, 1), (1, 1)),
                dimension_numbers=("NHWC", "HWIO", "NHWC"))
            x = bn_relu(y, c["bn"])
        k = de["k"]
        n, h, w, _ = x.shape
        cout = de["w"].shape[1]
        y = jnp.einsum("bhwc,cfij->bhiwjf", x, de["w"]).reshape(n, h * k, w * k, cout)
        ups.append(bn_relu(y, de["bn"]))
    return jnp.concatenate(ups, axis=-1) if len(ups) > 1 else ups[0]


if __name__ == "__main__":
    key = jax.random.PRNGKey(0)
    pkey, xkey = jax.random.split(key)
    blocks, deblocks = init_params(pkey)

    # PyTorch-convention NCHW input, small shapes: (B=2, C=4, H=16, W=16)
    x_nchw = jax.random.normal(xkey, (2, INPUT_CHANNELS, 16, 16), jnp.float32)
    x_nhwc = jnp.transpose(x_nchw, (0, 2, 3, 1))

    out_nhwc = jax.block_until_ready(bev_backbone_forward(x_nhwc, blocks, deblocks))
    out_nchw = jnp.transpose(out_nhwc, (0, 3, 1, 2))  # back to PyTorch layout

    ref_nhwc = ref_forward(x_nhwc, blocks, deblocks)
    assert out_nchw.shape == (2, sum(MODEL_CFG["NUM_UPSAMPLE_FILTERS"]), 16, 16), out_nchw.shape
    err = float(jnp.max(jnp.abs(out_nhwc - ref_nhwc)))
    assert jnp.allclose(out_nhwc, ref_nhwc, atol=1e-3, rtol=1e-3), err

    print("KERNEL_OK")
</pallas_src>

<mosaic_0001>
module attributes {stable_mosaic.version = 11 : i64} {
  func.func @_bev_backbone_kernel(%arg0: i32, %arg1: memref<1x16x64xf32, #tpu.memory_space<vmem>>, %arg2: memref<64x128xf32, #tpu.memory_space<vmem>>, %arg3: memref<64x128xf32, #tpu.memory_space<vmem>>, %arg4: memref<64x128xf32, #tpu.memory_space<vmem>>, %arg5: memref<1x128xf32, #tpu.memory_space<vmem>>, %arg6: memref<1x128xf32, #tpu.memory_space<vmem>>, %arg7: memref<128x128xf32, #tpu.memory_space<vmem>>, %arg8: memref<128x128xf32, #tpu.memory_space<vmem>>, %arg9: memref<128x128xf32, #tpu.memory_space<vmem>>, %arg10: memref<1x128xf32, #tpu.memory_space<vmem>>, %arg11: memref<1x128xf32, #tpu.memory_space<vmem>>, %arg12: memref<128x128xf32, #tpu.memory_space<vmem>>, %arg13: memref<1x128xf32, #tpu.memory_space<vmem>>, %arg14: memref<1x128xf32, #tpu.memory_space<vmem>>, %arg15: memref<128x128xf32, #tpu.memory_space<vmem>>, %arg16: memref<128x128xf32, #tpu.memory_space<vmem>>, %arg17: memref<128x128xf32, #tpu.memory_space<vmem>>, %arg18: memref<1x128xf32, #tpu.memory_space<vmem>>, %arg19: memref<1x128xf32, #tpu.memory_space<vmem>>, %arg20: memref<128x128xf32, #tpu.memory_space<vmem>>, %arg21: memref<128x128xf32, #tpu.memory_space<vmem>>, %arg22: memref<128x128xf32, #tpu.memory_space<vmem>>, %arg23: memref<1x128xf32, #tpu.memory_space<vmem>>, %arg24: memref<1x128xf32, #tpu.memory_space<vmem>>, %arg25: memref<128x256xf32, #tpu.memory_space<vmem>>, %arg26: memref<1x256xf32, #tpu.memory_space<vmem>>, %arg27: memref<1x256xf32, #tpu.memory_space<vmem>>, %arg28: memref<1x16x128xf32, #tpu.memory_space<vmem>>, %arg29: memref<1x8x256xf32, #tpu.memory_space<vmem>>, %arg30: memref<18x64xf32, #tpu.memory_space<vmem>>, %arg31: memref<18x128xf32, #tpu.memory_space<vmem>>, %arg32: memref<18x128xf32, #tpu.memory_space<vmem>>, %arg33: memref<10x128xf32, #tpu.memory_space<vmem>>) attributes {dimension_semantics = [#tpu.dimension_semantics<parallel>], iteration_bounds = array<i64: 2>, scalar_prefetch = 0 : i64, scratch_operands = 4 : i64, tpu.core_type = #tpu.core_type<tc>, window_params = [{transform_indices = @transform_0, window_bounds = array<i64: 1, 16, 64>}, {pipeline_mode = #tpu.pipeline_mode<synchronous>, transform_indices = @transform_1, window_bounds = array<i64: 64, 128>}, {pipeline_mode = #tpu.pipeline_mode<synchronous>, transform_indices = @transform_2, window_bounds = array<i64: 64, 128>}, {pipeline_mode = #tpu.pipeline_mode<synchronous>, transform_indices = @transform_3, window_bounds = array<i64: 64, 128>}, {pipeline_mode = #tpu.pipeline_mode<synchronous>, transform_indices = @transform_4, window_bounds = array<i64: 1, 128>}, {pipeline_mode = #tpu.pipeline_mode<synchronous>, transform_indices = @transform_5, window_bounds = array<i64: 1, 128>}, {pipeline_mode = #tpu.pipeline_mode<synchronous>, transform_indices = @transform_6, window_bounds = array<i64: 128, 128>}, {pipeline_mode = #tpu.pipeline_mode<synchronous>, transform_indices = @transform_7, window_bounds = array<i64: 128, 128>}, {pipeline_mode = #tpu.pipeline_mode<synchronous>, transform_indices = @transform_8, window_bounds = array<i64: 128, 128>}, {pipeline_mode = #tpu.pipeline_mode<synchronous>, transform_indices = @transform_9, window_bounds = array<i64: 1, 128>}, {pipeline_mode = #tpu.pipeline_mode<synchronous>, transform_indices = @transform_10, window_bounds = array<i64: 1, 128>}, {pipeline_mode = #tpu.pipeline_mode<synchronous>, transform_indices = @transform_11, window_bounds = array<i64: 128, 128>}, {pipeline_mode = #tpu.pipeline_mode<synchronous>, transform_indices = @transform_12, window_bounds = array<i64: 1, 128>}, {pipeline_mode = #tpu.pipeline_mode<synchronous>, transform_indices = @transform_13, window_bounds = array<i64: 1, 128>}, {pipeline_mode = #tpu.pipeline_mode<synchronous>, transform_indices = @transform_14, window_bounds = array<i64: 128, 128>}, {pipeline_mode = #tpu.pipeline_mode<synchronous>, transform_indices = @transform_15, window_bounds = array<i64: 128, 128>}, {pipeline_mode = #tpu.pipeline_mode<synchronous>, transform_indices = @transform_16, window_bounds = array<i64: 128, 128>}, {pipeline_mode = #tpu.pipeline_mode<synchronous>, transform_indices = @transform_17, window_bounds = array<i64: 1, 128>}, {pipeline_mode = #tpu.pipeline_mode<synchronous>, transform_indices = @transform_18, window_bounds = array<i64: 1, 128>}, {pipeline_mode = #tpu.pipeline_mode<synchronous>, transform_indices = @transform_19, window_bounds = array<i64: 128, 128>}, {pipeline_mode = #tpu.pipeline_mode<synchronous>, transform_indices = @transform_20, window_bounds = array<i64: 128, 128>}, {pipeline_mode = #tpu.pipeline_mode<synchronous>, transform_indices = @transform_21, window_bounds = array<i64: 128, 128>}, {pipeline_mode = #tpu.pipeline_mode<synchronous>, transform_indices = @transform_22, window_bounds = array<i64: 1, 128>}, {pipeline_mode = #tpu.pipeline_mode<synchronous>, transform_indices = @transform_23, window_bounds = array<i64: 1, 128>}, {pipeline_mode = #tpu.pipeline_mode<synchronous>, transform_indices = @transform_24, window_bounds = array<i64: 128, 256>}, {pipeline_mode = #tpu.pipeline_mode<synchronous>, transform_indices = @transform_25, window_bounds = array<i64: 1, 256>}, {pipeline_mode = #tpu.pipeline_mode<synchronous>, transform_indices = @transform_26, window_bounds = array<i64: 1, 256>}, {transform_indices = @transform_27, window_bounds = array<i64: 1, 16, 128>}, {transform_indices = @transform_28, window_bounds = array<i64: 1, 8, 256>}]} {
    %c0 = arith.constant 0 : index
    %c0_0 = arith.constant 0 : index
    %c0_1 = arith.constant 0 : index
    %0 = vector.load %arg1[%c0, %c0_0, %c0_1] : memref<1x16x64xf32, #tpu.memory_space<vmem>>, vector<1x16x64xf32>
    %1 = vector.shape_cast %0 : vector<1x16x64xf32> to vector<16x64xf32>
    %cst = arith.constant 0.000000e+00 : f32
    %2 = vector.broadcast %cst : f32 to vector<1x64xf32>
    %c0_2 = arith.constant 0 : index
    %c0_3 = arith.constant 0 : index
    %3 = vector.load %arg30[%c0_2, %c0_3] : memref<18x64xf32, #tpu.memory_space<vmem>>, vector<1x64xf32>
    tpu.vector_store %arg30[%c0_2, %c0_3], %2 {strides = array<i32>} : memref<18x64xf32, #tpu.memory_space<vmem>>, vector<1x64xf32>,
    %c17 = arith.constant 17 : index
    %c0_4 = arith.constant 0 : index
    %4 = vector.load %arg30[%c17, %c0_4] : memref<18x64xf32, #tpu.memory_space<vmem>>, vector<1x64xf32>
    tpu.vector_store %arg30[%c17, %c0_4], %2 {strides = array<i32>} : memref<18x64xf32, #tpu.memory_space<vmem>>, vector<1x64xf32>,
    %c1 = arith.constant 1 : index
    %c0_5 = arith.constant 0 : index
    %5 = vector.load %arg30[%c1, %c0_5] : memref<18x64xf32, #tpu.memory_space<vmem>>, vector<16x64xf32>
    tpu.vector_store %arg30[%c1, %c0_5], %1 {strides = array<i32>} : memref<18x64xf32, #tpu.memory_space<vmem>>, vector<16x64xf32>,
    %c0_6 = arith.constant 0 : index
    %c0_7 = arith.constant 0 : index
    %6 = vector.load %arg30[%c0_6, %c0_7] : memref<18x64xf32, #tpu.memory_space<vmem>>, vector<16x64xf32>
    %c0_8 = arith.constant 0 : index
    %c0_9 = arith.constant 0 : index
    %7 = vector.load %arg2[%c0_8, %c0_9] : memref<64x128xf32, #tpu.memory_space<vmem>>, vector<64x128xf32>
    %cst_10 = arith.constant dense<0.000000e+00> : vector<16x128xf32>
    %8 = tpu.matmul %6, %7, %cst_10 {dimension_numbers = #tpu.dot_dimension_numbers<[1], [0], [0], [1], [0, 0, 1, 1], [], []>} : vector<16x64xf32>, vector<64x128xf32>, vector<16x128xf32> -> vector<16x128xf32>
    %c1_11 = arith.constant 1 : index
    %c0_12 = arith.constant 0 : index
    %9 = vector.load %arg30[%c1_11, %c0_12] : memref<18x64xf32, #tpu.memory_space<vmem>>, vector<16x64xf32>
    %c0_13 = arith.constant 0 : index
    %c0_14 = arith.constant 0 : index
    %10 = vector.load %arg3[%c0_13, %c0_14] : memref<64x128xf32, #tpu.memory_space<vmem>>, vector<64x128xf32>
    %cst_15 = arith.constant dense<0.000000e+00> : vector<16x128xf32>
    %11 = tpu.matmul %9, %10, %cst_15 {dimension_numbers = #tpu.dot_dimension_numbers<[1], [0], [0], [1], [0, 0, 1, 1], [], []>} : vector<16x64xf32>, vector<64x128xf32>, vector<16x128xf32> -> vector<16x128xf32>
    %12 = arith.addf %8, %11 : vector<16x128xf32>
    %c2 = arith.constant 2 : index
    %c0_16 = arith.constant 0 : index
    %13 = vector.load %arg30[%c2, %c0_16] : memref<18x64xf32, #tpu.memory_space<vmem>>, vector<16x64xf32>
    %c0_17 = arith.constant 0 : index
    %c0_18 = arith.constant 0 : index
    %14 = vector.load %arg4[%c0_17, %c0_18] : memref<64x128xf32, #tpu.memory_space<vmem>>, vector<64x128xf32>
    %cst_19 = arith.constant dense<0.000000e+00> : vector<16x128xf32>
    %15 = tpu.matmul %13, %14, %cst_19 {dimension_numbers = #tpu.dot_dimension_numbers<[1], [0], [0], [1], [0, 0, 1, 1], [], []>} : vector<16x64xf32>, vector<64x128xf32>, vector<16x128xf32> -> vector<16x128xf32>
    %16 = arith.addf %12, %15 : vector<16x128xf32>
    %c0_20 = arith.constant 0 : index
    %c0_21 = arith.constant 0 : index
    %17 = vector.load %arg5[%c0_20, %c0_21] : memref<1x128xf32, #tpu.memory_space<vmem>>, vector<1x128xf32>
    %18 = vector.broadcast %17 : vector<1x128xf32> to vector<16x128xf32>
    %19 = arith.mulf %16, %18 : vector<16x128xf32>
    %c0_22 = arith.constant 0 : index
    %c0_23 = arith.constant 0 : index
    %20 = vector.load %arg6[%c0_22, %c0_23] : memref<1x128xf32, #tpu.memory_space<vmem>>, vector<1x128xf32>
    %21 = vector.broadcast %20 : vector<1x128xf32> to vector<16x128xf32>
    %22 = arith.addf %19, %21 : vector<16x128xf32>
    %cst_24 = arith.constant 0.000000e+00 : f32
    %23 = vector.broadcast %cst_24 : f32 to vector<16x128xf32>
    %24 = arith.maximumf %22, %23 : vector<16x128xf32>
    %cst_25 = arith.constant 0.000000e+00 : f32
    %25 = vector.broadcast %cst_25 : f32 to vector<1x128xf32>
    %c0_26 = arith.constant 0 : index
    %c0_27 = arith.constant 0 : index
    %26 = vector.load %arg31[%c0_26, %c0_27] : memref<18x128xf32, #tpu.memory_space<vmem>>, vector<1x128xf32>
    tpu.vector_store %arg31[%c0_26, %c0_27], %25 {strides = array<i32>} : memref<18x128xf32, #tpu.memory_space<vmem>>, vector<1x128xf32>,
    %c17_28 = arith.constant 17 : index
    %c0_29 = arith.constant 0 : index
    %27 = vector.load %arg31[%c17_28, %c0_29] : memref<18x128xf32, #tpu.memory_space<vmem>>, vector<1x128xf32>
    tpu.vector_store %arg31[%c17_28, %c0_29], %25 {strides = array<i32>} : memref<18x128xf32, #tpu.memory_space<vmem>>, vector<1x128xf32>,
    %c1_30 = arith.constant 1 : index
    %c0_31 = arith.constant 0 : index
    %28 = vector.load %arg31[%c1_30, %c0_31] : memref<18x128xf32, #tpu.memory_space<vmem>>, vector<16x128xf32>
    tpu.vector_store %arg31[%c1_30, %c0_31], %24 {strides = array<i32>} : memref<18x128xf32, #tpu.memory_space<vmem>>, vector<16x128xf32>,
    %c0_32 = arith.constant 0 : index
    %c0_33 = arith.constant 0 : index
    %29 = vector.load %arg31[%c0_32, %c0_33] : memref<18x128xf32, #tpu.memory_space<vmem>>, vector<16x128xf32>
    %c0_34 = arith.constant 0 : index
    %c0_35 = arith.constant 0 : index
    %30 = vector.load %arg7[%c0_34, %c0_35] : memref<128x128xf32, #tpu.memory_space<vmem>>, vector<128x128xf32>
    %cst_36 = arith.constant dense<0.000000e+00> : vector<16x128xf32>
    %31 = tpu.matmul %29, %30, %cst_36 {dimension_numbers = #tpu.dot_dimension_numbers<[1], [0], [0], [1], [0, 0, 1, 1], [], []>} : vector<16x128xf32>, vector<128x128xf32>, vector<16x128xf32> -> vector<16x128xf32>
    %c1_37 = arith.constant 1 : index
    %c0_38 = arith.constant 0 : index
    %32 = vector.load %arg31[%c1_37, %c0_38] : memref<18x128xf32, #tpu.memory_space<vmem>>, vector<16x128xf32>
    %c0_39 = arith.constant 0 : index
    %c0_40 = arith.constant 0 : index
    %33 = vector.load %arg8[%c0_39, %c0_40] : memref<128x128xf32, #tpu.memory_space<vmem>>, vector<128x128xf32>
    %cst_41 = arith.constant dense<0.000000e+00> : vector<16x128xf32>
    %34 = tpu.matmul %32, %33, %cst_41 {dimension_numbers = #tpu.dot_dimension_numbers<[1], [0], [0], [1], [0, 0, 1, 1], [], []>} : vector<16x128xf32>, vector<128x128xf32>, vector<16x128xf32> -> vector<16x128xf32>
    %35 = arith.addf %31, %34 : vector<16x128xf32>
    %c2_42 = arith.constant 2 : index
    %c0_43 = arith.constant 0 : index
    %36 = vector.load %arg31[%c2_42, %c0_43] : memref<18x128xf32, #tpu.memory_space<vmem>>, vector<16x128xf32>
    %c0_44 = arith.constant 0 : index
    %c0_45 = arith.constant 0 : index
    %37 = vector.load %arg9[%c0_44, %c0_45] : memref<128x128xf32, #tpu.memory_space<vmem>>, vector<128x128xf32>
    %cst_46 = arith.constant dense<0.000000e+00> : vector<16x128xf32>
    %38 = tpu.matmul %36, %37, %cst_46 {dimension_numbers = #tpu.dot_dimension_numbers<[1], [0], [0], [1], [0, 0, 1, 1], [], []>} : vector<16x128xf32>, vector<128x128xf32>, vector<16x128xf32> -> vector<16x128xf32>
    %39 = arith.addf %35, %38 : vector<16x128xf32>
    %c0_47 = arith.constant 0 : index
    %c0_48 = arith.constant 0 : index
    %40 = vector.load %arg10[%c0_47, %c0_48] : memref<1x128xf32, #tpu.memory_space<vmem>>, vector<1x128xf32>
    %41 = vector.broadcast %40 : vector<1x128xf32> to vector<16x128xf32>
    %42 = arith.mulf %39, %41 : vector<16x128xf32>
    %c0_49 = arith.constant 0 : index
    %c0_50 = arith.constant 0 : index
    %43 = vector.load %arg11[%c0_49, %c0_50] : memref<1x128xf32, #tpu.memory_space<vmem>>, vector<1x128xf32>
    %44 = vector.broadcast %43 : vector<1x128xf32> to vector<16x128xf32>
    %45 = arith.addf %42, %44 : vector<16x128xf32>
    %cst_51 = arith.constant 0.000000e+00 : f32
    %46 = vector.broadcast %cst_51 : f32 to vector<16x128xf32>
    %47 = arith.maximumf %45, %46 : vector<16x128xf32>
    %c0_52 = arith.constant 0 : index
    %c0_53 = arith.constant 0 : index
    %48 = vector.load %arg12[%c0_52, %c0_53] : memref<128x128xf32, #tpu.memory_space<vmem>>, vector<128x128xf32>
    %cst_54 = arith.constant dense<0.000000e+00> : vector<16x128xf32>
    %49 = tpu.matmul %47, %48, %cst_54 {dimension_numbers = #tpu.dot_dimension_numbers<[1], [0], [0], [1], [0, 0, 1, 1], [], []>} : vector<16x128xf32>, vector<128x128xf32>, vector<16x128xf32> -> vector<16x128xf32>
    %c0_55 = arith.constant 0 : index
    %c0_56 = arith.constant 0 : index
    %50 = vector.load %arg13[%c0_55, %c0_56] : memref<1x128xf32, #tpu.memory_space<vmem>>, vector<1x128xf32>
    %51 = vector.broadcast %50 : vector<1x128xf32> to vector<16x128xf32>
    %52 = arith.mulf %49, %51 : vector<16x128xf32>
    %c0_57 = arith.constant 0 : index
    %c0_58 = arith.constant 0 : index
    %53 = vector.load %arg14[%c0_57, %c0_58] : memref<1x128xf32, #tpu.memory_space<vmem>>, vector<1x128xf32>
    %54 = vector.broadcast %53 : vector<1x128xf32> to vector<16x128xf32>
    %55 = arith.addf %52, %54 : vector<16x128xf32>
    %cst_59 = arith.constant 0.000000e+00 : f32
    %56 = vector.broadcast %cst_59 : f32 to vector<16x128xf32>
    %57 = arith.maximumf %55, %56 : vector<16x128xf32>
    %58 = vector.shape_cast %57 : vector<16x128xf32> to vector<1x16x128xf32>
    %c0_60 = arith.constant 0 : index
    %c0_61 = arith.constant 0 : index
    %c0_62 = arith.constant 0 : index
    %59 = vector.load %arg28[%c0_60, %c0_61, %c0_62] : memref<1x16x128xf32, #tpu.memory_space<vmem>>, vector<1x16x128xf32>
    tpu.vector_store %arg28[%c0_60, %c0_61, %c0_62], %58 {strides = array<i32>} : memref<1x16x128xf32, #tpu.memory_space<vmem>>, vector<1x16x128xf32>,
    %cst_63 = arith.constant 0.000000e+00 : f32
    %60 = vector.broadcast %cst_63 : f32 to vector<1x128xf32>
    %c0_64 = arith.constant 0 : index
    %c0_65 = arith.constant 0 : index
    %61 = vector.load %arg32[%c0_64, %c0_65] : memref<18x128xf32, #tpu.memory_space<vmem>>, vector<1x128xf32>
    tpu.vector_store %arg32[%c0_64, %c0_65], %60 {strides = array<i32>} : memref<18x128xf32, #tpu.memory_space<vmem>>, vector<1x128xf32>,
    %c17_66 = arith.constant 17 : index
    %c0_67 = arith.constant 0 : index
    %62 = vector.load %arg32[%c17_66, %c0_67] : memref<18x128xf32, #tpu.memory_space<vmem>>, vector<1x128xf32>
    tpu.vector_store %arg32[%c17_66, %c0_67], %60 {strides = array<i32>} : memref<18x128xf32, #tpu.memory_space<vmem>>, vector<1x128xf32>,
    %c1_68 = arith.constant 1 : index
    %c0_69 = arith.constant 0 : index
    %63 = vector.load %arg32[%c1_68, %c0_69] : memref<18x128xf32, #tpu.memory_space<vmem>>, vector<16x128xf32>
    tpu.vector_store %arg32[%c1_68, %c0_69], %47 {strides = array<i32>} : memref<18x128xf32, #tpu.memory_space<vmem>>, vector<16x128xf32>,
    %c0_70 = arith.constant 0 : index
    %c0_71 = arith.constant 0 : index
    %64 = tpu.strided_load %arg32[%c0_70, %c0_71] {strides = array<i32: 2, 1>} : memref<18x128xf32, #tpu.memory_space<vmem>>, vector<8x128xf32>
    %c0_72 = arith.constant 0 : index
    %c0_73 = arith.constant 0 : index
    %65 = vector.load %arg15[%c0_72, %c0_73] : memref<128x128xf32, #tpu.memory_space<vmem>>, vector<128x128xf32>
    %cst_74 = arith.constant dense<0.000000e+00> : vector<8x128xf32>
    %66 = tpu.matmul %64, %65, %cst_74 {dimension_numbers = #tpu.dot_dimension_numbers<[1], [0], [0], [1], [0, 0, 1, 1], [], []>} : vector<8x128xf32>, vector<128x128xf32>, vector<8x128xf32> -> vector<8x128xf32>
    %c1_75 = arith.constant 1 : index
    %c0_76 = arith.constant 0 : index
    %67 = tpu.strided_load %arg32[%c1_75, %c0_76] {strides = array<i32: 2, 1>} : memref<18x128xf32, #tpu.memory_space<vmem>>, vector<8x128xf32>
    %c0_77 = arith.constant 0 : index
    %c0_78 = arith.constant 0 : index
    %68 = vector.load %arg16[%c0_77, %c0_78] : memref<128x128xf32, #tpu.memory_space<vmem>>, vector<128x128xf32>
    %cst_79 = arith.constant dense<0.000000e+00> : vector<8x128xf32>
    %69 = tpu.matmul %67, %68, %cst_79 {dimension_numbers = #tpu.dot_dimension_numbers<[1], [0], [0], [1], [0, 0, 1, 1], [], []>} : vector<8x128xf32>, vector<128x128xf32>, vector<8x128xf32> -> vector<8x128xf32>
    %70 = arith.addf %66, %69 : vector<8x128xf32>
    %c2_80 = arith.constant 2 : index
    %c0_81 = arith.constant 0 : index
    %71 = tpu.strided_load %arg32[%c2_80, %c0_81] {strides = array<i32: 2, 1>} : memref<18x128xf32, #tpu.memory_space<vmem>>, vector<8x128xf32>
    %c0_82 = arith.constant 0 : index
    %c0_83 = arith.constant 0 : index
    %72 = vector.load %arg17[%c0_82, %c0_83] : memref<128x128xf32, #tpu.memory_space<vmem>>, vector<128x128xf32>
    %cst_84 = arith.constant dense<0.000000e+00> : vector<8x128xf32>
    %73 = tpu.matmul %71, %72, %cst_84 {dimension_numbers = #tpu.dot_dimension_numbers<[1], [0], [0], [1], [0, 0, 1, 1], [], []>} : vector<8x128xf32>, vector<128x128xf32>, vector<8x128xf32> -> vector<8x128xf32>
    %74 = arith.addf %70, %73 : vector<8x128xf32>
    %c0_85 = arith.constant 0 : index
    %c0_86 = arith.constant 0 : index
    %75 = vector.load %arg18[%c0_85, %c0_86] : memref<1x128xf32, #tpu.memory_space<vmem>>, vector<1x128xf32>
    %76 = vector.broadcast %75 : vector<1x128xf32> to vector<8x128xf32>
    %77 = arith.mulf %74, %76 : vector<8x128xf32>
    %c0_87 = arith.constant 0 : index
    %c0_88 = arith.constant 0 : index
    %78 = vector.load %arg19[%c0_87, %c0_88] : memref<1x128xf32, #tpu.memory_space<vmem>>, vector<1x128xf32>
    %79 = vector.broadcast %78 : vector<1x128xf32> to vector<8x128xf32>
    %80 = arith.addf %77, %79 : vector<8x128xf32>
    %cst_89 = arith.constant 0.000000e+00 : f32
    %81 = vector.broadcast %cst_89 : f32 to vector<8x128xf32>
    %82 = arith.maximumf %80, %81 : vector<8x128xf32>
    %cst_90 = arith.constant 0.000000e+00 : f32
    %83 = vector.broadcast %cst_90 : f32 to vector<1x128xf32>
    %c0_91 = arith.constant 0 : index
    %c0_92 = arith.constant 0 : index
    %84 = vector.load %arg33[%c0_91, %c0_92] : memref<10x128xf32, #tpu.memory_space<vmem>>, vector<1x128xf32>
    tpu.vector_store %arg33[%c0_91, %c0_92], %83 {strides = array<i32>} : memref<10x128xf32, #tpu.memory_space<vmem>>, vector<1x128xf32>,
    %c9 = arith.constant 9 : index
    %c0_93 = arith.constant 0 : index
    %85 = vector.load %arg33[%c9, %c0_93] : memref<10x128xf32, #tpu.memory_space<vmem>>, vector<1x128xf32>
    tpu.vector_store %arg33[%c9, %c0_93], %83 {strides = array<i32>} : memref<10x128xf32, #tpu.memory_space<vmem>>, vector<1x128xf32>,
    %c1_94 = arith.constant 1 : index
    %c0_95 = arith.constant 0 : index
    %86 = vector.load %arg33[%c1_94, %c0_95] : memref<10x128xf32, #tpu.memory_space<vmem>>, vector<8x128xf32>
    tpu.vector_store %arg33[%c1_94, %c0_95], %82 {strides = array<i32>} : memref<10x128xf32, #tpu.memory_space<vmem>>, vector<8x128xf32>,
    %c0_96 = arith.constant 0 : index
    %c0_97 = arith.constant 0 : index
    %87 = vector.load %arg33[%c0_96, %c0_97] : memref<10x128xf32, #tpu.memory_space<vmem>>, vector<8x128xf32>
    %c0_98 = arith.constant 0 : index
    %c0_99 = arith.constant 0 : index
    %88 = vector.load %arg20[%c0_98, %c0_99] : memref<128x128xf32, #tpu.memory_space<vmem>>, vector<128x128xf32>
    %cst_100 = arith.constant dense<0.000000e+00> : vector<8x128xf32>
    %89 = tpu.matmul %87, %88, %cst_100 {dimension_numbers = #tpu.dot_dimension_numbers<[1], [0], [0], [1], [0, 0, 1, 1], [], []>} : vector<8x128xf32>, vector<128x128xf32>, vector<8x128xf32> -> vector<8x128xf32>
    %c1_101 = arith.constant 1 : index
    %c0_102 = arith.constant 0 : index
    %90 = vector.load %arg33[%c1_101, %c0_102] : memref<10x128xf32, #tpu.memory_space<vmem>>, vector<8x128xf32>
    %c0_103 = arith.constant 0 : index
    %c0_104 = arith.constant 0 : index
    %91 = vector.load %arg21[%c0_103, %c0_104] : memref<128x128xf32, #tpu.memory_space<vmem>>, vector<128x128xf32>
    %cst_105 = arith.constant dense<0.000000e+00> : vector<8x128xf32>
    %92 = tpu.matmul %90, %91, %cst_105 {dimension_numbers = #tpu.dot_dimension_numbers<[1], [0], [0], [1], [0, 0, 1, 1], [], []>} : vector<8x128xf32>, vector<128x128xf32>, vector<8x128xf32> -> vector<8x128xf32>
    %93 = arith.addf %89, %92 : vector<8x128xf32>
    %c2_106 = arith.constant 2 : index
    %c0_107 = arith.constant 0 : index
    %94 = vector.load %arg33[%c2_106, %c0_107] : memref<10x128xf32, #tpu.memory_space<vmem>>, vector<8x128xf32>
    %c0_108 = arith.constant 0 : index
    %c0_109 = arith.constant 0 : index
    %95 = vector.load %arg22[%c0_108, %c0_109] : memref<128x128xf32, #tpu.memory_space<vmem>>, vector<128x128xf32>
    %cst_110 = arith.constant dense<0.000000e+00> : vector<8x128xf32>
    %96 = tpu.matmul %94, %95, %cst_110 {dimension_numbers = #tpu.dot_dimension_numbers<[1], [0], [0], [1], [0, 0, 1, 1], [], []>} : vector<8x128xf32>, vector<128x128xf32>, vector<8x128xf32> -> vector<8x128xf32>
    %97 = arith.addf %93, %96 : vector<8x128xf32>
    %c0_111 = arith.constant 0 : index
    %c0_112 = arith.constant 0 : index
    %98 = vector.load %arg23[%c0_111, %c0_112] : memref<1x128xf32, #tpu.memory_space<vmem>>, vector<1x128xf32>
    %99 = vector.broadcast %98 : vector<1x128xf32> to vector<8x128xf32>
    %100 = arith.mulf %97, %99 : vector<8x128xf32>
    %c0_113 = arith.constant 0 : index
    %c0_114 = arith.constant 0 : index
    %101 = vector.load %arg24[%c0_113, %c0_114] : memref<1x128xf32, #tpu.memory_space<vmem>>, vector<1x128xf32>
    %102 = vector.broadcast %101 : vector<1x128xf32> to vector<8x128xf32>
    %103 = arith.addf %100, %102 : vector<8x128xf32>
    %cst_115 = arith.constant 0.000000e+00 : f32
    %104 = vector.broadcast %cst_115 : f32 to vector<8x128xf32>
    %105 = arith.maximumf %103, %104 : vector<8x128xf32>
    %c0_116 = arith.constant 0 : index
    %c0_117 = arith.constant 0 : index
    %106 = vector.load %arg25[%c0_116, %c0_117] : memref<128x256xf32, #tpu.memory_space<vmem>>, vector<128x256xf32>
    %cst_118 = arith.constant dense<0.000000e+00> : vector<8x256xf32>
    %107 = tpu.matmul %105, %106, %cst_118 {dimension_numbers = #tpu.dot_dimension_numbers<[1], [0], [0], [1], [0, 0, 1, 1], [], []>} : vector<8x128xf32>, vector<128x256xf32>, vector<8x256xf32> -> vector<8x256xf32>
    %c0_119 = arith.constant 0 : index
    %c0_120 = arith.constant 0 : index
    %108 = vector.load %arg26[%c0_119, %c0_120] : memref<1x256xf32, #tpu.memory_space<vmem>>, vector<1x256xf32>
    %109 = vector.broadcast %108 : vector<1x256xf32> to vector<8x256xf32>
    %110 = arith.mulf %107, %109 : vector<8x256xf32>
    %c0_121 = arith.constant 0 : index
    %c0_122 = arith.constant 0 : index
    %111 = vector.load %arg27[%c0_121, %c0_122] : memref<1x256xf32, #tpu.memory_space<vmem>>, vector<1x256xf32>
    %112 = vector.broadcast %111 : vector<1x256xf32> to vector<8x256xf32>
    %113 = arith.addf %110, %112 : vector<8x256xf32>
    %cst_123 = arith.constant 0.000000e+00 : f32
    %114 = vector.broadcast %cst_123 : f32 to vector<8x256xf32>
    %115 = arith.maximumf %113, %114 : vector<8x256xf32>
    %116 = vector.shape_cast %115 : vector<8x256xf32> to vector<1x8x256xf32>
    %c0_124 = arith.constant 0 : index
    %c0_125 = arith.constant 0 : index
    %c0_126 = arith.constant 0 : index
    %117 = vector.load %arg29[%c0_124, %c0_125, %c0_126] : memref<1x8x256xf32, #tpu.memory_space<vmem>>, vector<1x8x256xf32>
    tpu.vector_store %arg29[%c0_124, %c0_125, %c0_126], %116 {strides = array<i32>} : memref<1x8x256xf32, #tpu.memory_space<vmem>>, vector<1x8x256xf32>,
    return
  }
  func.func @transform_0(%arg0: i32) -> (i32, i32, i32) {
    %c0_i32 = arith.constant 0 : i32
    %c0_i32_0 = arith.constant 0 : i32
    %c0_i32_1 = arith.constant 0 : i32
    return %arg0, %c0_i32, %c0_i32_0 : i32, i32, i32
  }
  func.func @transform_1(%arg0: i32) -> (i32, i32) {
    %c0_i32 = arith.constant 0 : i32
    %c0_i32_0 = arith.constant 0 : i32
    %c0_i32_1 = arith.constant 0 : i32
    return %c0_i32, %c0_i32_0 : i32, i32
  }
  func.func @transform_2(%arg0: i32) -> (i32, i32) {
    %c0_i32 = arith.constant 0 : i32
    %c0_i32_0 = arith.constant 0 : i32
    %c0_i32_1 = arith.constant 0 : i32
    return %c0_i32, %c0_i32_0 : i32, i32
  }
  func.func @transform_3(%arg0: i32) -> (i32, i32) {
    %c0_i32 = arith.constant 0 : i32
    %c0_i32_0 = arith.constant 0 : i32
    %c0_i32_1 = arith.constant 0 : i32
    return %c0_i32, %c0_i32_0 : i32, i32
  }
  func.func @transform_4(%arg0: i32) -> (i32, i32) {
    %c0_i32 = arith.constant 0 : i32
    %c0_i32_0 = arith.constant 0 : i32
    %c0_i32_1 = arith.constant 0 : i32
    return %c0_i32, %c0_i32_0 : i32, i32
  }
  func.func @transform_5(%arg0: i32) -> (i32, i32) {
    %c0_i32 = arith.constant 0 : i32
    %c0_i32_0 = arith.constant 0 : i32
    %c0_i32_1 = arith.constant 0 : i32
    return %c0_i32, %c0_i32_0 : i32, i32
  }
  func.func @transform_6(%arg0: i32) -> (i32, i32) {
    %c0_i32 = arith.constant 0 : i32
    %c0_i32_0 = arith.constant 0 : i32
    %c0_i32_1 = arith.constant 0 : i32
    return %c0_i32, %c0_i32_0 : i32, i32
  }
  func.func @transform_7(%arg0: i32) -> (i32, i32) {
    %c0_i32 = arith.constant 0 : i32
    %c0_i32_0 = arith.constant 0 : i32
    %c0_i32_1 = arith.constant 0 : i32
    return %c0_i32, %c0_i32_0 : i32, i32
  }
  func.func @transform_8(%arg0: i32) -> (i32, i32) {
    %c0_i32 = arith.constant 0 : i32
    %c0_i32_0 = arith.constant 0 : i32
    %c0_i32_1 = arith.constant 0 : i32
    return %c0_i32, %c0_i32_0 : i32, i32
  }
  func.func @transform_9(%arg0: i32) -> (i32, i32) {
    %c0_i32 = arith.constant 0 : i32
    %c0_i32_0 = arith.constant 0 : i32
    %c0_i32_1 = arith.constant 0 : i32
    return %c0_i32, %c0_i32_0 : i32, i32
  }
  func.func @transform_10(%arg0: i32) -> (i32, i32) {
    %c0_i32 = arith.constant 0 : i32
    %c0_i32_0 = arith.constant 0 : i32
    %c0_i32_1 = arith.constant 0 : i32
    return %c0_i32, %c0_i32_0 : i32, i32
  }
  func.func @transform_11(%arg0: i32) -> (i32, i32) {
    %c0_i32 = arith.constant 0 : i32
    %c0_i32_0 = arith.constant 0 : i32
    %c0_i32_1 = arith.constant 0 : i32
    return %c0_i32, %c0_i32_0 : i32, i32
  }
  func.func @transform_12(%arg0: i32) -> (i32, i32) {
    %c0_i32 = arith.constant 0 : i32
    %c0_i32_0 = arith.constant 0 : i32
    %c0_i32_1 = arith.constant 0 : i32
    return %c0_i32, %c0_i32_0 : i32, i32
  }
  func.func @transform_13(%arg0: i32) -> (i32, i32) {
    %c0_i32 = arith.constant 0 : i32
    %c0_i32_0 = arith.constant 0 : i32
    %c0_i32_1 = arith.constant 0 : i32
    return %c0_i32, %c0_i32_0 : i32, i32
  }
  func.func @transform_14(%arg0: i32) -> (i32, i32) {
    %c0_i32 = arith.constant 0 : i32
    %c0_i32_0 = arith.constant 0 : i32
    %c0_i32_1 = arith.constant 0 : i32
    return %c0_i32, %c0_i32_0 : i32, i32
  }
  func.func @transform_15(%arg0: i32) -> (i32, i32) {
    %c0_i32 = arith.constant 0 : i32
    %c0_i32_0 = arith.constant 0 : i32
    %c0_i32_1 = arith.constant 0 : i32
    return %c0_i32, %c0_i32_0 : i32, i32
  }
  func.func @transform_16(%arg0: i32) -> (i32, i32) {
    %c0_i32 = arith.constant 0 : i32
    %c0_i32_0 = arith.constant 0 : i32
    %c0_i32_1 = arith.constant 0 : i32
    return %c0_i32, %c0_i32_0 : i32, i32
  }
  func.func @transform_17(%arg0: i32) -> (i32, i32) {
    %c0_i32 = arith.constant 0 : i32
    %c0_i32_0 = arith.constant 0 : i32
    %c0_i32_1 = arith.constant 0 : i32
    return %c0_i32, %c0_i32_0 : i32, i32
  }
  func.func @transform_18(%arg0: i32) -> (i32, i32) {
    %c0_i32 = arith.constant 0 : i32
    %c0_i32_0 = arith.constant 0 : i32
    %c0_i32_1 = arith.constant 0 : i32
    return %c0_i32, %c0_i32_0 : i32, i32
  }
  func.func @transform_19(%arg0: i32) -> (i32, i32) {
    %c0_i32 = arith.constant 0 : i32
    %c0_i32_0 = arith.constant 0 : i32
    %c0_i32_1 = arith.constant 0 : i32
    return %c0_i32, %c0_i32_0 : i32, i32
  }
  func.func @transform_20(%arg0: i32) -> (i32, i32) {
    %c0_i32 = arith.constant 0 : i32
    %c0_i32_0 = arith.constant 0 : i32
    %c0_i32_1 = arith.constant 0 : i32
    return %c0_i32, %c0_i32_0 : i32, i32
  }
  func.func @transform_21(%arg0: i32) -> (i32, i32) {
    %c0_i32 = arith.constant 0 : i32
    %c0_i32_0 = arith.constant 0 : i32
    %c0_i32_1 = arith.constant 0 : i32
    return %c0_i32, %c0_i32_0 : i32, i32
  }
  func.func @transform_22(%arg0: i32) -> (i32, i32) {
    %c0_i32 = arith.constant 0 : i32
    %c0_i32_0 = arith.constant 0 : i32
    %c0_i32_1 = arith.constant 0 : i32
    return %c0_i32, %c0_i32_0 : i32, i32
  }
  func.func @transform_23(%arg0: i32) -> (i32, i32) {
    %c0_i32 = arith.constant 0 : i32
    %c0_i32_0 = arith.constant 0 : i32
    %c0_i32_1 = arith.constant 0 : i32
    return %c0_i32, %c0_i32_0 : i32, i32
  }
  func.func @transform_24(%arg0: i32) -> (i32, i32) {
    %c0_i32 = arith.constant 0 : i32
    %c0_i32_0 = arith.constant 0 : i32
    %c0_i32_1 = arith.constant 0 : i32
    return %c0_i32, %c0_i32_0 : i32, i32
  }
  func.func @transform_25(%arg0: i32) -> (i32, i32) {
    %c0_i32 = arith.constant 0 : i32
    %c0_i32_0 = arith.constant 0 : i32
    %c0_i32_1 = arith.constant 0 : i32
    return %c0_i32, %c0_i32_0 : i32, i32
  }
  func.func @transform_26(%arg0: i32) -> (i32, i32) {
    %c0_i32 = arith.constant 0 : i32
    %c0_i32_0 = arith.constant 0 : i32
    %c0_i32_1 = arith.constant 0 : i32
    return %c0_i32, %c0_i32_0 : i32, i32
  }
  func.func @transform_27(%arg0: i32) -> (i32, i32, i32) {
    %c0_i32 = arith.constant 0 : i32
    %c0_i32_0 = arith.constant 0 : i32
    %c0_i32_1 = arith.constant 0 : i32
    return %arg0, %c0_i32, %c0_i32_0 : i32, i32, i32
  }
  func.func @transform_28(%arg0: i32) -> (i32, i32, i32) {
    %c0_i32 = arith.constant 0 : i32
    %c0_i32_0 = arith.constant 0 : i32
    %c0_i32_1 = arith.constant 0 : i32
    return %arg0, %c0_i32, %c0_i32_0 : i32, i32, i32
  }
}

</mosaic_0001>

<llo_original>
// kernel: tpu_custom_call.1
$region0: #{tpu_custom_call.1}
  #allocation0 [shape = 'u32[]', space=smem, size = 0x4, offset = 0x4, fixed_abs, tag = 'smem constant byte address 0x4 - core index']
  #allocation1 [shape = 'u32[144,128]{1,0:T(1,128)}', space=vmem, size = 0x12000, scoped, tag = 'internal scratch']
  #allocation2 [shape = 'f32[18,64]{1,0:T(8,128)}', space=vmem, size = 0x3000, scoped, tag = 'scratch operand']
  #allocation3 [shape = 'f32[18,128]{1,0:T(8,128)}', space=vmem, size = 0x3000, scoped, tag = 'scratch operand']
  #allocation4 [shape = 'f32[18,128]{1,0:T(8,128)}', space=vmem, size = 0x3000, scoped, tag = 'scratch operand']
  #allocation5 [shape = 'f32[10,128]{1,0:T(8,128)}', space=vmem, size = 0x2000, scoped, tag = 'scratch operand']
  %s0 = inlined_call_operand.hbm [shape: f32[2,16,64], index: 0, kind: input, shape index: {}]
  %s1 = inlined_call_operand.hbm [shape: f32[64,128], index: 1, kind: input, shape index: {}]
  %s2 = inlined_call_operand.hbm [shape: f32[64,128], index: 2, kind: input, shape index: {}]
  %s3 = inlined_call_operand.hbm [shape: f32[64,128], index: 3, kind: input, shape index: {}]
  %s4 = inlined_call_operand.vmem [shape: f32[1,128], index: 4, kind: input, shape index: {}]
  %s5 = inlined_call_operand.vmem [shape: f32[1,128], index: 5, kind: input, shape index: {}]
  %s6 = inlined_call_operand.hbm [shape: f32[128,128], index: 6, kind: input, shape index: {}]
  %s7 = inlined_call_operand.hbm [shape: f32[128,128], index: 7, kind: input, shape index: {}]
  %s8 = inlined_call_operand.hbm [shape: f32[128,128], index: 8, kind: input, shape index: {}]
  %s9 = inlined_call_operand.vmem [shape: f32[1,128], index: 9, kind: input, shape index: {}]
  %s10 = inlined_call_operand.vmem [shape: f32[1,128], index: 10, kind: input, shape index: {}]
  %s11 = inlined_call_operand.hbm [shape: f32[128,128], index: 11, kind: input, shape index: {}]
  %s12 = inlined_call_operand.vmem [shape: f32[1,128], index: 12, kind: input, shape index: {}]
  %s13 = inlined_call_operand.vmem [shape: f32[1,128], index: 13, kind: input, shape index: {}]
  %s14 = inlined_call_operand.hbm [shape: f32[128,128], index: 14, kind: input, shape index: {}]
  %s15 = inlined_call_operand.hbm [shape: f32[128,128], index: 15, kind: input, shape index: {}]
  %s16 = inlined_call_operand.hbm [shape: f32[128,128], index: 16, kind: input, shape index: {}]
  %s17 = inlined_call_operand.vmem [shape: f32[1,128], index: 17, kind: input, shape index: {}]
  %s18 = inlined_call_operand.vmem [shape: f32[1,128], index: 18, kind: input, shape index: {}]
  %s19 = inlined_call_operand.hbm [shape: f32[128,128], index: 19, kind: input, shape index: {}]
  %s20 = inlined_call_operand.hbm [shape: f32[128,128], index: 20, kind: input, shape index: {}]
  %s21 = inlined_call_operand.hbm [shape: f32[128,128], index: 21, kind: input, shape index: {}]
  %s22 = inlined_call_operand.vmem [shape: f32[1,128], index: 22, kind: input, shape index: {}]
  %s23 = inlined_call_operand.vmem [shape: f32[1,128], index: 23, kind: input, shape index: {}]
  %s24 = inlined_call_operand.hbm [shape: f32[128,256], index: 24, kind: input, shape index: {}]
  %s25 = inlined_call_operand.vmem [shape: f32[1,256], index: 25, kind: input, shape index: {}]
  %s26 = inlined_call_operand.vmem [shape: f32[1,256], index: 26, kind: input, shape index: {}]
  %s27 = inlined_call_operand.hbm [shape: f32[2,16,128], index: 27, kind: output, shape index: {0}]
  %s28 = inlined_call_operand.hbm [shape: f32[2,8,256], index: 28, kind: output, shape index: {1}]
  %29 = xla_tuple %s27, %s28
  %s30 = sld [smem:[#allocation0]]
  $region209: #{tpu_custom_call.1} parent=0
    _
  %s32 = ssub.s32 1, %s30
  %s33 = scalar_select 0, %s32, %s30
  $region1: #{tpu_custom_call.1} parent=0
    #allocation6 [shape = 'u8[16384]{0}', space=vmem, size = 0x4000, scoped, tag = 'input window, operand 0']
    #allocation7 [shape = 's32[2]{0}', space=sflag, size = 0x8, scoped, tag = 'scoped memory for tpu_custom_call.1']
    #allocation8 [shape = 's32[2]{0}', space=sflag, size = 0x8, scoped, tag = 'scoped memory for tpu_custom_call.1']
    #allocation9 [shape = 'u8[32768]{0}', space=vmem, size = 0x8000, scoped, tag = 'input window, operand 1, single buffered']
    #allocation10 [shape = 's32[1]{0}', space=sflag, size = 0x4, scoped, tag = 'scoped memory for tpu_custom_call.1']
    #allocation11 [shape = 'u8[32768]{0}', space=vmem, size = 0x8000, scoped, tag = 'input window, operand 2, single buffered']
    #allocation12 [shape = 'u8[32768]{0}', space=vmem, size = 0x8000, scoped, tag = 'input window, operand 3, single buffered']
    #allocation13 [shape = 's32[1]{0}', space=sflag, size = 0x4, scoped, tag = 'scoped memory for tpu_custom_call.1']
    #allocation14 [shape = 'u8[65536]{0}', space=vmem, size = 0x10000, scoped, tag = 'input window, operand 6, single buffered']
    #allocation15 [shape = 'u8[65536]{0}', space=vmem, size = 0x10000, scoped, tag = 'input window, operand 7, single buffered']
    #allocation16 [shape = 's32[1]{0}', space=sflag, size = 0x4, scoped, tag = 'scoped memory for tpu_custom_call.1']
    #allocation17 [shape = 'u8[65536]{0}', space=vmem, size = 0x10000, scoped, tag = 'input window, operand 8, single buffered']
    #allocation18 [shape = 'u8[65536]{0}', space=vmem, size = 0x10000, scoped, tag = 'input window, operand 11, single buffered']
    #allocation19 [shape = 's32[1]{0}', space=sflag, size = 0x4, scoped, tag = 'scoped memory for tpu_custom_call.1']
    #allocation20 [shape = 'u8[65536]{0}', space=vmem, size = 0x10000, scoped, tag = 'input window, operand 14, single buffered']
    #allocation21 [shape = 'u8[65536]{0}', space=vmem, size = 0x10000, scoped, tag = 'input window, operand 15, single buffered']
    #allocation22 [shape = 's32[1]{0}', space=sflag, size = 0x4, scoped, tag = 'scoped memory for tpu_custom_call.1']
    #allocation23 [shape = 'u8[65536]{0}', space=vmem, size = 0x10000, scoped, tag = 'input window, operand 16, single buffered']
    #allocation24 [shape = 'u8[65536]{0}', space=vmem, size = 0x10000, scoped, tag = 'input window, operand 19, single buffered']
    #allocation25 [shape = 's32[1]{0}', space=sflag, size = 0x4, scoped, tag = 'scoped memory for tpu_custom_call.1']
    #allocation26 [shape = 'u8[65536]{0}', space=vmem, size = 0x10000, scoped, tag = 'input window, operand 20, single buffered']
    #allocation27 [shape = 'u8[65536]{0}', space=vmem, size = 0x10000, scoped, tag = 'input window, operand 21, single buffered']
    #allocation28 [shape = 's32[1]{0}', space=sflag, size = 0x4, scoped, tag = 'scoped memory for tpu_custom_call.1']
    #allocation29 [shape = 'u8[131072]{0}', space=vmem, size = 0x20000, scoped, tag = 'input window, operand 24, single buffered']
    #allocation30 [shape = 'u8[16384]{0}', space=vmem, size = 0x4000, scoped, tag = 'output window, operand 0']
    #allocation31 [shape = 'u8[16384]{0}', space=vmem, size = 0x4000, scoped, tag = 'output window, operand 1']
    #allocation32 [shape = 's32[2]{0}', space=sflag, size = 0x8, scoped, tag = 'scoped memory for tpu_custom_call.1']
    %34 = vsyncpa [#allocation7], 0
    %s35 = scalar_lea.sflag [#allocation7], 1
    %36 = vsyncpa %s35, 0
    %37 = vsyncpa [#allocation10], 0
    %38 = vsyncpa [#allocation13], 0
    %39 = vsyncpa [#allocation16], 0
    %40 = vsyncpa [#allocation19], 0
    %41 = vsyncpa [#allocation22], 0
    %42 = vsyncpa [#allocation25], 0
    %43 = vsyncpa [#allocation28], 0
    %44 = vsyncpa [#allocation8], 0
    %s45 = scalar_lea.sflag [#allocation8], 1
    %46 = vsyncpa %s45, 0
    %47 = vsyncpa [#allocation32], 0
    %s48 = scalar_lea.sflag [#allocation32], 1
    %49 = vsyncpa %s48, 0
    loop: start=0, step=1, limit=4
    $region2: #{tpu_custom_call.1} parent=1 // loop_pre_header
      _
    $region3: #{tpu_custom_call.1} parent=1 // loop_header
      %s51 = sphi 0, %s55
      %p52 = scmp.ge.s32.totalorder %s51, 4
      %s61 = sphi 0, %s63
      %s64 = sphi 0, %s61
      %s65 = sphi 0, %s64
      %s81 = sphi 0, %s65
      %s85 = sphi 0, %s85
      %s87 = sphi 0, %s85
      %s88 = sphi 0, %s87
      %s102 = sphi 0, %s88
      %s106 = sphi 0, %s106
      %s108 = sphi 0, %s106
      %s109 = sphi 0, %s108
      %s123 = sphi 0, %s109
      %s127 = sphi 0, %s127
      %s129 = sphi 0, %s127
      %s130 = sphi 0, %s129
      %s144 = sphi 0, %s130
      %s148 = sphi 0, %s148
      %s150 = sphi 0, %s148
      %s151 = sphi 0, %s150
      %s165 = sphi 0, %s151
      %s169 = sphi 0, %s169
      %s171 = sphi 0, %s169
      %s172 = sphi 0, %s171
      %s186 = sphi 0, %s172
      %s190 = sphi 0, %s190
      %s192 = sphi 0, %s190
      %s193 = sphi 0, %s192
      %s207 = sphi 0, %s193
      %s211 = sphi 0, %s211
      %s213 = sphi 0, %s211
      %s214 = sphi 0, %s213
      %s228 = sphi 0, %s214
      %s232 = sphi 0, %s232
      %s234 = sphi 0, %s232
      %s235 = sphi 0, %s234
      %s249 = sphi 0, %s235
      %s253 = sphi 0, %s253
      %s255 = sphi 0, %s253
      %s256 = sphi 0, %s255
      %s270 = sphi 0, %s256
      %s274 = sphi 0, %s274
      %s276 = sphi 0, %s274
      %s277 = sphi 0, %s276
      %s291 = sphi 0, %s277
      %s295 = sphi 0, %s295
      %s297 = sphi 0, %s295
      %s298 = sphi 0, %s297
      %s312 = sphi 0, %s298
      %s316 = sphi 0, %s316
      %s318 = sphi 0, %s316
      %s319 = sphi 0, %s318
      %s333 = sphi 0, %s319
      %s337 = sphi 0, %s337
      %s339 = sphi 0, %s337
      %s340 = sphi 0, %s339
      %s354 = sphi 0, %s340
      %s358 = sphi 0, %s358
      %s360 = sphi 0, %s358
      %s361 = sphi 0, %s360
      %s375 = sphi 0, %s361
      %s379 = sphi 0, %s379
      %s381 = sphi 0, %s379
      %s382 = sphi 0, %s381
      %s396 = sphi 0, %s382
      %s400 = sphi 0, %s400
      %s402 = sphi 0, %s400
      %s403 = sphi 0, %s402
      %s417 = sphi 0, %s403
      %s421 = sphi 0, %s421
      %s423 = sphi 0, %s421
      %s424 = sphi 0, %s423
      %s438 = sphi 0, %s424
      %s442 = sphi 0, %s442
      %s444 = sphi 0, %s442
      %s445 = sphi 0, %s444
      %s459 = sphi 0, %s445
      %s463 = sphi 0, %s463
      %s465 = sphi 0, %s463
      %s466 = sphi 0, %s465
      %s480 = sphi 0, %s466
      %s484 = sphi 0, %s484
      %s486 = sphi 0, %s484
      %s487 = sphi 0, %s486
      %s501 = sphi 0, %s487
      %s505 = sphi 0, %s505
      %s507 = sphi 0, %s505
      %s508 = sphi 0, %s507
      %s522 = sphi 0, %s508
      %s526 = sphi 0, %s526
      %s528 = sphi 0, %s526
      %s529 = sphi 0, %s528
      %s543 = sphi 0, %s529
      %s547 = sphi 0, %s547
      %s549 = sphi 0, %s547
      %s550 = sphi 0, %s549
      %s564 = sphi 0, %s550
      %s568 = sphi 0, %s568
      %s570 = sphi 0, %s568
      %s571 = sphi 0, %s570
      %s585 = sphi 0, %s571
      %s589 = sphi 0, %s589
      %s591 = sphi 0, %s589
      %s592 = sphi 0, %s591
      %s606 = sphi 0, %s592
      %s610 = sphi 0, %s610
      %s612 = sphi 0, %s610
      %s613 = sphi 0, %s612
      %s627 = sphi 0, %s613
      %s633 = sphi 0, %s635
      %s636 = sphi 0, %s633
      %s637 = sphi 0, %s636
      %s653 = sphi 0, %s637
      %s659 = sphi 0, %s661
      %s662 = sphi 0, %s659
      %s663 = sphi 0, %s662
      %s679 = sphi 0, %s663
    $region4: #{tpu_custom_call.1} parent=1 // loop_header_branch
      %54 = sbr.rel (%p52) target = $region8
    $region5: #{tpu_custom_call.1} parent=1 // loop_body
      %s56 = ssub.s32 %s51, 1
      %s57 = ssub.s32 %s51, 2
      %s58 = sadd.s32 %s51, 1
      %s59 = ssub.s32 %s51, %s58
      %p60 = scmp.eq.s32.totalorder %s59, 0
      %s62 = sadd.s32 %s61, 1
      %s63 = scalar_select %p60, %s61, %s62
      %p66 = pneg %p60
      %p67 = scmp.eq.s32.totalorder %s51, 1
      %p68 = por %p66, %p67
      %p69 = scmp.ne.s32.totalorder %s61, %s64
      %p70 = scmp.eq.s32.totalorder %s51, 0
      %p71 = por %p69, %p70
      %p72 = scmp.ne.s32.totalorder %s61, %s64
      %p73 = scmp.eq.s32.totalorder %s56, 1
      %p74 = por %p72, %p73
      %p75 = scmp.ne.s32.totalorder %s64, %s65
      %p76 = scmp.eq.s32.totalorder %s56, 0
      %p77 = por %p75, %p76
      %p78 = scmp.ne.s32.totalorder %s64, %s65
      %p79 = scmp.eq.s32.totalorder %s57, 1
      %p80 = por %p78, %p79
      %p82 = scmp.ne.s32.totalorder %s65, %s81
      %p83 = scmp.eq.s32.totalorder %s57, 0
      %p84 = por %p82, %p83
      %s86 = sadd.s32 %s85, 1
      %p89 = scmp.eq.s32.totalorder %s51, 1
      %p90 = scmp.ne.s32.totalorder %s85, %s87
      %p91 = scmp.eq.s32.totalorder %s51, 0
      %p92 = por %p90, %p91
      %p93 = scmp.ne.s32.totalorder %s85, %s87
      %p94 = scmp.eq.s32.totalorder %s56, 1
      %p95 = por %p93, %p94
      %p96 = scmp.ne.s32.totalorder %s87, %s88
      %p97 = scmp.eq.s32.totalorder %s56, 0
      %p98 = por %p96, %p97
      %p99 = scmp.ne.s32.totalorder %s87, %s88
      %p100 = scmp.eq.s32.totalorder %s57, 1
      %p101 = por %p99, %p100
      %p103 = scmp.ne.s32.totalorder %s88, %s102
      %p104 = scmp.eq.s32.totalorder %s57, 0
      %p105 = por %p103, %p104
      %s107 = sadd.s32 %s106, 1
      %p110 = scmp.eq.s32.totalorder %s51, 1
      %p111 = scmp.ne.s32.totalorder %s106, %s108
      %p112 = scmp.eq.s32.totalorder %s51, 0
      %p113 = por %p111, %p112
      %p114 = scmp.ne.s32.totalorder %s106, %s108
      %p115 = scmp.eq.s32.totalorder %s56, 1
      %p116 = por %p114, %p115
      %p117 = scmp.ne.s32.totalorder %s108, %s109
      %p118 = scmp.eq.s32.totalorder %s56, 0
      %p119 = por %p117, %p118
      %p120 = scmp.ne.s32.totalorder %s108, %s109
      %p121 = scmp.eq.s32.totalorder %s57, 1
      %p122 = por %p120, %p121
      %p124 = scmp.ne.s32.totalorder %s109, %s123
      %p125 = scmp.eq.s32.totalorder %s57, 0
      %p126 = por %p124, %p125
      %s128 = sadd.s32 %s127, 1
      %p131 = scmp.eq.s32.totalorder %s51, 1
      %p132 = scmp.ne.s32.totalorder %s127, %s129
      %p133 = scmp.eq.s32.totalorder %s51, 0
      %p134 = por %p132, %p133
      %p135 = scmp.ne.s32.totalorder %s127, %s129
      %p136 = scmp.eq.s32.totalorder %s56, 1
      %p137 = por %p135, %p136
      %p138 = scmp.ne.s32.totalorder %s129, %s130
      %p139 = scmp.eq.s32.totalorder %s56, 0
      %p140 = por %p138, %p139
      %p141 = scmp.ne.s32.totalorder %s129, %s130
      %p142 = scmp.eq.s32.totalorder %s57, 1
      %p143 = por %p141, %p142
      %p145 = scmp.ne.s32.totalorder %s130, %s144
      %p146 = scmp.eq.s32.totalorder %s57, 0
      %p147 = por %p145, %p146
      %s149 = sadd.s32 %s148, 1
      %p152 = scmp.eq.s32.totalorder %s51, 1
      %p153 = scmp.ne.s32.totalorder %s148, %s150
      %p154 = scmp.eq.s32.totalorder %s51, 0
      %p155 = por %p153, %p154
      %p156 = scmp.ne.s32.totalorder %s148, %s150
      %p157 = scmp.eq.s32.totalorder %s56, 1
      %p158 = por %p156, %p157
      %p159 = scmp.ne.s32.totalorder %s150, %s151
      %p160 = scmp.eq.s32.totalorder %s56, 0
      %p161 = por %p159, %p160
      %p162 = scmp.ne.s32.totalorder %s150, %s151
      %p163 = scmp.eq.s32.totalorder %s57, 1
      %p164 = por %p162, %p163
      %p166 = scmp.ne.s32.totalorder %s151, %s165
      %p167 = scmp.eq.s32.totalorder %s57, 0
      %p168 = por %p166, %p167
      %s170 = sadd.s32 %s169, 1
      %p173 = scmp.eq.s32.totalorder %s51, 1
      %p174 = scmp.ne.s32.totalorder %s169, %s171
      %p175 = scmp.eq.s32.totalorder %s51, 0
      %p176 = por %p174, %p175
      %p177 = scmp.ne.s32.totalorder %s169, %s171
      %p178 = scmp.eq.s32.totalorder %s56, 1
      %p179 = por %p177, %p178
      %p180 = scmp.ne.s32.totalorder %s171, %s172
      %p181 = scmp.eq.s32.totalorder %s56, 0
      %p182 = por %p180, %p181
      %p183 = scmp.ne.s32.totalorder %s171, %s172
      %p184 = scmp.eq.s32.totalorder %s57, 1
      %p185 = por %p183, %p184
      %p187 = scmp.ne.s32.totalorder %s172, %s186
      %p188 = scmp.eq.s32.totalorder %s57, 0
      %p189 = por %p187, %p188
      %s191 = sadd.s32 %s190, 1
      %p194 = scmp.eq.s32.totalorder %s51, 1
      %p195 = scmp.ne.s32.totalorder %s190, %s192
      %p196 = scmp.eq.s32.totalorder %s51, 0
      %p197 = por %p195, %p196
      %p198 = scmp.ne.s32.totalorder %s190, %s192
      %p199 = scmp.eq.s32.totalorder %s56, 1
      %p200 = por %p198, %p199
      %p201 = scmp.ne.s32.totalorder %s192, %s193
      %p202 = scmp.eq.s32.totalorder %s56, 0
      %p203 = por %p201, %p202
      %p204 = scmp.ne.s32.totalorder %s192, %s193
      %p205 = scmp.eq.s32.totalorder %s57, 1
      %p206 = por %p204, %p205
      %p208 = scmp.ne.s32.totalorder %s193, %s207
      %p209 = scmp.eq.s32.totalorder %s57, 0
      %p210 = por %p208, %p209
      %s212 = sadd.s32 %s211, 1
      %p215 = scmp.eq.s32.totalorder %s51, 1
      %p216 = scmp.ne.s32.totalorder %s211, %s213
      %p217 = scmp.eq.s32.totalorder %s51, 0
      %p218 = por %p216, %p217
      %p219 = scmp.ne.s32.totalorder %s211, %s213
      %p220 = scmp.eq.s32.totalorder %s56, 1
      %p221 = por %p219, %p220
      %p222 = scmp.ne.s32.totalorder %s213, %s214
      %p223 = scmp.eq.s32.totalorder %s56, 0
      %p224 = por %p222, %p223
      %p225 = scmp.ne.s32.totalorder %s213, %s214
      %p226 = scmp.eq.s32.totalorder %s57, 1
      %p227 = por %p225, %p226
      %p229 = scmp.ne.s32.totalorder %s214, %s228
      %p230 = scmp.eq.s32.totalorder %s57, 0
      %p231 = por %p229, %p230
      %s233 = sadd.s32 %s232, 1
      %p236 = scmp.eq.s32.totalorder %s51, 1
      %p237 = scmp.ne.s32.totalorder %s232, %s234
      %p238 = scmp.eq.s32.totalorder %s51, 0
      %p239 = por %p237, %p238
      %p240 = scmp.ne.s32.totalorder %s232, %s234
      %p241 = scmp.eq.s32.totalorder %s56, 1
      %p242 = por %p240, %p241
      %p243 = scmp.ne.s32.totalorder %s234, %s235
      %p244 = scmp.eq.s32.totalorder %s56, 0
      %p245 = por %p243, %p244
      %p246 = scmp.ne.s32.totalorder %s234, %s235
      %p247 = scmp.eq.s32.totalorder %s57, 1
      %p248 = por %p246, %p247
      %p250 = scmp.ne.s32.totalorder %s235, %s249
      %p251 = scmp.eq.s32.totalorder %s57, 0
      %p252 = por %p250, %p251
      %s254 = sadd.s32 %s253, 1
      %p257 = scmp.eq.s32.totalorder %s51, 1
      %p258 = scmp.ne.s32.totalorder %s253, %s255
      %p259 = scmp.eq.s32.totalorder %s51, 0
      %p260 = por %p258, %p259
      %p261 = scmp.ne.s32.totalorder %s253, %s255
      %p262 = scmp.eq.s32.totalorder %s56, 1
      %p263 = por %p261, %p262
      %p264 = scmp.ne.s32.totalorder %s255, %s256
      %p265 = scmp.eq.s32.totalorder %s56, 0
      %p266 = por %p264, %p265
      %p267 = scmp.ne.s32.totalorder %s255, %s256
      %p268 = scmp.eq.s32.totalorder %s57, 1
      %p269 = por %p267, %p268
      %p271 = scmp.ne.s32.totalorder %s256, %s270
      %p272 = scmp.eq.s32.totalorder %s57, 0
      %p273 = por %p271, %p272
      %s275 = sadd.s32 %s274, 1
      %p278 = scmp.eq.s32.totalorder %s51, 1
      %p279 = scmp.ne.s32.totalorder %s274, %s276
      %p280 = scmp.eq.s32.totalorder %s51, 0
      %p281 = por %p279, %p280
      %p282 = scmp.ne.s32.totalorder %s274, %s276
      %p283 = scmp.eq.s32.totalorder %s56, 1
      %p284 = por %p282, %p283
      %p285 = scmp.ne.s32.totalorder %s276, %s277
      %p286 = scmp.eq.s32.totalorder %s56, 0
      %p287 = por %p285, %p286
      %p288 = scmp.ne.s32.totalorder %s276, %s277
      %p289 = scmp.eq.s32.totalorder %s57, 1
      %p290 = por %p288, %p289
      %p292 = scmp.ne.s32.totalorder %s277, %s291
      %p293 = scmp.eq.s32.totalorder %s57, 0
      %p294 = por %p292, %p293
      %s296 = sadd.s32 %s295, 1
      %p299 = scmp.eq.s32.totalorder %s51, 1
      %p300 = scmp.ne.s32.totalorder %s295, %s297
      %p301 = scmp.eq.s32.totalorder %s51, 0
      %p302 = por %p300, %p301
      %p303 = scmp.ne.s32.totalorder %s295, %s297
      %p304 = scmp.eq.s32.totalorder %s56, 1
      %p305 = por %p303, %p304
      %p306 = scmp.ne.s32.totalorder %s297, %s298
      %p307 = scmp.eq.s32.totalorder %s56, 0
      %p308 = por %p306, %p307
      %p309 = scmp.ne.s32.totalorder %s297, %s298
      %p310 = scmp.eq.s32.totalorder %s57, 1
      %p311 = por %p309, %p310
      %p313 = scmp.ne.s32.totalorder %s298, %s312
      %p314 = scmp.eq.s32.totalorder %s57, 0
      %p315 = por %p313, %p314
      %s317 = sadd.s32 %s316, 1
      %p320 = scmp.eq.s32.totalorder %s51, 1
      %p321 = scmp.ne.s32.totalorder %s316, %s318
      %p322 = scmp.eq.s32.totalorder %s51, 0
      %p323 = por %p321, %p322
      %p324 = scmp.ne.s32.totalorder %s316, %s318
      %p325 = scmp.eq.s32.totalorder %s56, 1
      %p326 = por %p324, %p325
      %p327 = scmp.ne.s32.totalorder %s318, %s319
      %p328 = scmp.eq.s32.totalorder %s56, 0
      %p329 = por %p327, %p328
      %p330 = scmp.ne.s32.totalorder %s318, %s319
      %p331 = scmp.eq.s32.totalorder %s57, 1
      %p332 = por %p330, %p331
      %p334 = scmp.ne.s32.totalorder %s319, %s333
      %p335 = scmp.eq.s32.totalorder %s57, 0
      %p336 = por %p334, %p335
      %s338 = sadd.s32 %s337, 1
      %p341 = scmp.eq.s32.totalorder %s51, 1
      %p342 = scmp.ne.s32.totalorder %s337, %s339
      %p343 = scmp.eq.s32.totalorder %s51, 0
      %p344 = por %p342, %p343
      %p345 = scmp.ne.s32.totalorder %s337, %s339
      %p346 = scmp.eq.s32.totalorder %s56, 1
      %p347 = por %p345, %p346
      %p348 = scmp.ne.s32.totalorder %s339, %s340
      %p349 = scmp.eq.s32.totalorder %s56, 0
      %p350 = por %p348, %p349
      %p351 = scmp.ne.s32.totalorder %s339, %s340
      %p352 = scmp.eq.s32.totalorder %s57, 1
      %p353 = por %p351, %p352
      %p355 = scmp.ne.s32.totalorder %s340, %s354
      %p356 = scmp.eq.s32.totalorder %s57, 0
      %p357 = por %p355, %p356
      %s359 = sadd.s32 %s358, 1
      %p362 = scmp.eq.s32.totalorder %s51, 1
      %p363 = scmp.ne.s32.totalorder %s358, %s360
      %p364 = scmp.eq.s32.totalorder %s51, 0
      %p365 = por %p363, %p364
      %p366 = scmp.ne.s32.totalorder %s358, %s360
      %p367 = scmp.eq.s32.totalorder %s56, 1
      %p368 = por %p366, %p367
      %p369 = scmp.ne.s32.totalorder %s360, %s361
      %p370 = scmp.eq.s32.totalorder %s56, 0
      %p371 = por %p369, %p370
      %p372 = scmp.ne.s32.totalorder %s360, %s361
      %p373 = scmp.eq.s32.totalorder %s57, 1
      %p374 = por %p372, %p373
      %p376 = scmp.ne.s32.totalorder %s361, %s375
      %p377 = scmp.eq.s32.totalorder %s57, 0
      %p378 = por %p376, %p377
      %s380 = sadd.s32 %s379, 1
      %p383 = scmp.eq.s32.totalorder %s51, 1
      %p384 = scmp.ne.s32.totalorder %s379, %s381
      %p385 = scmp.eq.s32.totalorder %s51, 0
      %p386 = por %p384, %p385
      %p387 = scmp.ne.s32.totalorder %s379, %s381
      %p388 = scmp.eq.s32.totalorder %s56, 1
      %p389 = por %p387, %p388
      %p390 = scmp.ne.s32.totalorder %s381, %s382
      %p391 = scmp.eq.s32.totalorder %s56, 0
      %p392 = por %p390, %p391
      %p393 = scmp.ne.s32.totalorder %s381, %s382
      %p394 = scmp.eq.s32.totalorder %s57, 1
      %p395 = por %p393, %p394
      %p397 = scmp.ne.s32.totalorder %s382, %s396
      %p398 = scmp.eq.s32.totalorder %s57, 0
      %p399 = por %p397, %p398
      %s401 = sadd.s32 %s400, 1
      %p404 = scmp.eq.s32.totalorder %s51, 1
      %p405 = scmp.ne.s32.totalorder %s400, %s402
      %p406 = scmp.eq.s32.totalorder %s51, 0
      %p407 = por %p405, %p406
      %p408 = scmp.ne.s32.totalorder %s400, %s402
      %p409 = scmp.eq.s32.totalorder %s56, 1
      %p410 = por %p408, %p409
      %p411 = scmp.ne.s32.totalorder %s402, %s403
      %p412 = scmp.eq.s32.totalorder %s56, 0
      %p413 = por %p411, %p412
      %p414 = scmp.ne.s32.totalorder %s402, %s403
      %p415 = scmp.eq.s32.totalorder %s57, 1
      %p416 = por %p414, %p415
      %p418 = scmp.ne.s32.totalorder %s403, %s417
      %p419 = scmp.eq.s32.totalorder %s57, 0
      %p420 = por %p418, %p419
      %s422 = sadd.s32 %s421, 1
      %p425 = scmp.eq.s32.totalorder %s51, 1
      %p426 = scmp.ne.s32.totalorder %s421, %s423
      %p427 = scmp.eq.s32.totalorder %s51, 0
      %p428 = por %p426, %p427
      %p429 = scmp.ne.s32.totalorder %s421, %s423
      %p430 = scmp.eq.s32.totalorder %s56, 1
      %p431 = por %p429, %p430
      %p432 = scmp.ne.s32.totalorder %s423, %s424
      %p433 = scmp.eq.s32.totalorder %s56, 0
      %p434 = por %p432, %p433
      %p435 = scmp.ne.s32.totalorder %s423, %s424
      %p436 = scmp.eq.s32.totalorder %s57, 1
      %p437 = por %p435, %p436
      %p439 = scmp.ne.s32.totalorder %s424, %s438
      %p440 = scmp.eq.s32.totalorder %s57, 0
      %p441 = por %p439, %p440
      %s443 = sadd.s32 %s442, 1
      %p446 = scmp.eq.s32.totalorder %s51, 1
      %p447 = scmp.ne.s32.totalorder %s442, %s444
      %p448 = scmp.eq.s32.totalorder %s51, 0
      %p449 = por %p447, %p448
      %p450 = scmp.ne.s32.totalorder %s442, %s444
      %p451 = scmp.eq.s32.totalorder %s56, 1
      %p452 = por %p450, %p451
      %p453 = scmp.ne.s32.totalorder %s444, %s445
      %p454 = scmp.eq.s32.totalorder %s56, 0
      %p455 = por %p453, %p454
      %p456 = scmp.ne.s32.totalorder %s444, %s445
      %p457 = scmp.eq.s32.totalorder %s57, 1
      %p458 = por %p456, %p457
      %p460 = scmp.ne.s32.totalorder %s445, %s459
      %p461 = scmp.eq.s32.totalorder %s57, 0
      %p462 = por %p460, %p461
      %s464 = sadd.s32 %s463, 1
      %p467 = scmp.eq.s32.totalorder %s51, 1
      %p468 = scmp.ne.s32.totalorder %s463, %s465
      %p469 = scmp.eq.s32.totalorder %s51, 0
      %p470 = por %p468, %p469
      %p471 = scmp.ne.s32.totalorder %s463, %s465
      %p472 = scmp.eq.s32.totalorder %s56, 1
      %p473 = por %p471, %p472
      %p474 = scmp.ne.s32.totalorder %s465, %s466
      %p475 = scmp.eq.s32.totalorder %s56, 0
      %p476 = por %p474, %p475
      %p477 = scmp.ne.s32.totalorder %s465, %s466
      %p478 = scmp.eq.s32.totalorder %s57, 1
      %p479 = por %p477, %p478
      %p481 = scmp.ne.s32.totalorder %s466, %s480
      %p482 = scmp.eq.s32.totalorder %s57, 0
      %p483 = por %p481, %p482
      %s485 = sadd.s32 %s484, 1
      %p488 = scmp.eq.s32.totalorder %s51, 1
      %p489 = scmp.ne.s32.totalorder %s484, %s486
      %p490 = scmp.eq.s32.totalorder %s51, 0
      %p491 = por %p489, %p490
      %p492 = scmp.ne.s32.totalorder %s484, %s486
      %p493 = scmp.eq.s32.totalorder %s56, 1
      %p494 = por %p492, %p493
      %p495 = scmp.ne.s32.totalorder %s486, %s487
      %p496 = scmp.eq.s32.totalorder %s56, 0
      %p497 = por %p495, %p496
      %p498 = scmp.ne.s32.totalorder %s486, %s487
      %p499 = scmp.eq.s32.totalorder %s57, 1
      %p500 = por %p498, %p499
      %p502 = scmp.ne.s32.totalorder %s487, %s501
      %p503 = scmp.eq.s32.totalorder %s57, 0
      %p504 = por %p502, %p503
      %s506 = sadd.s32 %s505, 1
      %p509 = scmp.eq.s32.totalorder %s51, 1
      %p510 = scmp.ne.s32.totalorder %s505, %s507
      %p511 = scmp.eq.s32.totalorder %s51, 0
      %p512 = por %p510, %p511
      %p513 = scmp.ne.s32.totalorder %s505, %s507
      %p514 = scmp.eq.s32.totalorder %s56, 1
      %p515 = por %p513, %p514
      %p516 = scmp.ne.s32.totalorder %s507, %s508
      %p517 = scmp.eq.s32.totalorder %s56, 0
      %p518 = por %p516, %p517
      %p519 = scmp.ne.s32.totalorder %s507, %s508
      %p520 = scmp.eq.s32.totalorder %s57, 1
      %p521 = por %p519, %p520
      %p523 = scmp.ne.s32.totalorder %s508, %s522
      %p524 = scmp.eq.s32.totalorder %s57, 0
      %p525 = por %p523, %p524
      %s527 = sadd.s32 %s526, 1
      %p530 = scmp.eq.s32.totalorder %s51, 1
      %p531 = scmp.ne.s32.totalorder %s526, %s528
      %p532 = scmp.eq.s32.totalorder %s51, 0
      %p533 = por %p531, %p532
      %p534 = scmp.ne.s32.totalorder %s526, %s528
      %p535 = scmp.eq.s32.totalorder %s56, 1
      %p536 = por %p534, %p535
      %p537 = scmp.ne.s32.totalorder %s528, %s529
      %p538 = scmp.eq.s32.totalorder %s56, 0
      %p539 = por %p537, %p538
      %p540 = scmp.ne.s32.totalorder %s528, %s529
      %p541 = scmp.eq.s32.totalorder %s57, 1
      %p542 = por %p540, %p541
      %p544 = scmp.ne.s32.totalorder %s529, %s543
      %p545 = scmp.eq.s32.totalorder %s57, 0
      %p546 = por %p544, %p545
      %s548 = sadd.s32 %s547, 1
      %p551 = scmp.eq.s32.totalorder %s51, 1
      %p552 = scmp.ne.s32.totalorder %s547, %s549
      %p553 = scmp.eq.s32.totalorder %s51, 0
      %p554 = por %p552, %p553
      %p555 = scmp.ne.s32.totalorder %s547, %s549
      %p556 = scmp.eq.s32.totalorder %s56, 1
      %p557 = por %p555, %p556
      %p558 = scmp.ne.s32.totalorder %s549, %s550
      %p559 = scmp.eq.s32.totalorder %s56, 0
      %p560 = por %p558, %p559
      %p561 = scmp.ne.s32.totalorder %s549, %s550
      %p562 = scmp.eq.s32.totalorder %s57, 1
      %p563 = por %p561, %p562
      %p565 = scmp.ne.s32.totalorder %s550, %s564
      %p566 = scmp.eq.s32.totalorder %s57, 0
      %p567 = por %p565, %p566
      %s569 = sadd.s32 %s568, 1
      %p572 = scmp.eq.s32.totalorder %s51, 1
      %p573 = scmp.ne.s32.totalorder %s568, %s570
      %p574 = scmp.eq.s32.totalorder %s51, 0
      %p575 = por %p573, %p574
      %p576 = scmp.ne.s32.totalorder %s568, %s570
      %p577 = scmp.eq.s32.totalorder %s56, 1
      %p578 = por %p576, %p577
      %p579 = scmp.ne.s32.totalorder %s570, %s571
      %p580 = scmp.eq.s32.totalorder %s56, 0
      %p581 = por %p579, %p580
      %p582 = scmp.ne.s32.totalorder %s570, %s571
      %p583 = scmp.eq.s32.totalorder %s57, 1
      %p584 = por %p582, %p583
      %p586 = scmp.ne.s32.totalorder %s571, %s585
      %p587 = scmp.eq.s32.totalorder %s57, 0
      %p588 = por %p586, %p587
      %s590 = sadd.s32 %s589, 1
      %p593 = scmp.eq.s32.totalorder %s51, 1
      %p594 = scmp.ne.s32.totalorder %s589, %s591
      %p595 = scmp.eq.s32.totalorder %s51, 0
      %p596 = por %p594, %p595
      %p597 = scmp.ne.s32.totalorder %s589, %s591
      %p598 = scmp.eq.s32.totalorder %s56, 1
      %p599 = por %p597, %p598
      %p600 = scmp.ne.s32.totalorder %s591, %s592
      %p601 = scmp.eq.s32.totalorder %s56, 0
      %p602 = por %p600, %p601
      %p603 = scmp.ne.s32.totalorder %s591, %s592
      %p604 = scmp.eq.s32.totalorder %s57, 1
      %p605 = por %p603, %p604
      %p607 = scmp.ne.s32.totalorder %s592, %s606
      %p608 = scmp.eq.s32.totalorder %s57, 0
      %p609 = por %p607, %p608
      %s611 = sadd.s32 %s610, 1
      %p614 = scmp.eq.s32.totalorder %s51, 1
      %p615 = scmp.ne.s32.totalorder %s610, %s612
      %p616 = scmp.eq.s32.totalorder %s51, 0
      %p617 = por %p615, %p616
      %p618 = scmp.ne.s32.totalorder %s610, %s612
      %p619 = scmp.eq.s32.totalorder %s56, 1
      %p620 = por %p618, %p619
      %p621 = scmp.ne.s32.totalorder %s612, %s613
      %p622 = scmp.eq.s32.totalorder %s56, 0
      %p623 = por %p621, %p622
      %p624 = scmp.ne.s32.totalorder %s612, %s613
      %p625 = scmp.eq.s32.totalorder %s57, 1
      %p626 = por %p624, %p625
      %p628 = scmp.ne.s32.totalorder %s613, %s627
      %p629 = scmp.eq.s32.totalorder %s57, 0
      %p630 = por %p628, %p629
      %s631 = ssub.s32 %s51, %s58
      %p632 = scmp.eq.s32.totalorder %s631, 0
      %s634 = sadd.s32 %s633, 1
      %s635 = scalar_select %p632, %s633, %s634
      %p638 = pneg %p632
      %p639 = scmp.eq.s32.totalorder %s51, 1
      %p640 = por %p638, %p639
      %p641 = scmp.ne.s32.totalorder %s633, %s636
      %p642 = scmp.eq.s32.totalorder %s51, 0
      %p643 = por %p641, %p642
      %p644 = scmp.ne.s32.totalorder %s633, %s636
      %p645 = scmp.eq.s32.totalorder %s56, 1
      %p646 = por %p644, %p645
      %p647 = scmp.ne.s32.totalorder %s636, %s637
      %p648 = scmp.eq.s32.totalorder %s56, 0
      %p649 = por %p647, %p648
      %p650 = scmp.ne.s32.totalorder %s636, %s637
      %p651 = scmp.eq.s32.totalorder %s57, 1
      %p652 = por %p650, %p651
      %p654 = scmp.ne.s32.totalorder %s637, %s653
      %p655 = scmp.eq.s32.totalorder %s57, 0
      %p656 = por %p654, %p655
      %s657 = ssub.s32 %s51, %s58
      %p658 = scmp.eq.s32.totalorder %s657, 0
      %s660 = sadd.s32 %s659, 1
      %s661 = scalar_select %p658, %s659, %s660
      %p664 = pneg %p658
      %p665 = scmp.eq.s32.totalorder %s51, 1
      %p666 = por %p664, %p665
      %p667 = scmp.ne.s32.totalorder %s659, %s662
      %p668 = scmp.eq.s32.totalorder %s51, 0
      %p669 = por %p667, %p668
      %p670 = scmp.ne.s32.totalorder %s659, %s662
      %p671 = scmp.eq.s32.totalorder %s56, 1
      %p672 = por %p670, %p671
      %p673 = scmp.ne.s32.totalorder %s662, %s663
      %p674 = scmp.eq.s32.totalorder %s56, 0
      %p675 = por %p673, %p674
      %p676 = scmp.ne.s32.totalorder %s662, %s663
      %p677 = scmp.eq.s32.totalorder %s57, 1
      %p678 = por %p676, %p677
      %p680 = scmp.ne.s32.totalorder %s663, %s679
      %p681 = scmp.eq.s32.totalorder %s57, 0
      %p682 = por %p680, %p681
      %p683 = scmp.le.s32.totalorder 1, %s51
      %p684 = scmp.lt.s32.totalorder %s51, 3
      %p685 = pnand %p683, %p684
      %p686 = pneg %p685
      // Predicated region
      $region9: #{tpu_custom_call.1} parent=5 // pred_check
        _
      $region10: #{tpu_custom_call.1} parent=5 // pred_check_branch
        %688 = sbr.rel (%p685) target = $region12
      $region11: #{tpu_custom_call.1} parent=5 // pred_region
        %s689 = ssub.s32 %s51, 1
        // Predicated region
        $region13: #{tpu_custom_call.1} parent=11 // pred_check
          %p690 = pneg %p98
        $region14: #{tpu_custom_call.1} parent=11 // pred_check_branch
          %692 = sbr.rel (%p690) target = $region16
        $region15: #{tpu_custom_call.1} parent=11 // pred_region
          %s694 = ssub.s32 1024, 1024
          %695 = vsyncadd [#allocation10], %s694
          %s696 = sshll.u32 [#allocation9], 4
          %s697 = int_to_ptr.vmem [resolvable:$true] %s696
          %702 = dma.hbm_to_vmem [thread:$0]  %s1, 1024, %s697, [#allocation10], 128, 128, 8
        $region16: #{tpu_custom_call.1} parent=11 // pred_fallthru
          _
        // Predicated region
        $region17: #{tpu_custom_call.1} parent=11 // pred_check
          %p703 = pneg %p119
        $region18: #{tpu_custom_call.1} parent=11 // pred_check_branch
          %705 = sbr.rel (%p703) target = $region20
        $region19: #{tpu_custom_call.1} parent=11 // pred_region
          %s707 = ssub.s32 1024, 1024
          %708 = vsyncadd [#allocation10], %s707
          %s709 = sshll.u32 [#allocation11], 4
          %s710 = int_to_ptr.vmem [resolvable:$true] %s709
          %715 = dma.hbm_to_vmem [thread:$0]  %s2, 1024, %s710, [#allocation10], 128, 128, 8
        $region20: #{tpu_custom_call.1} parent=11 // pred_fallthru
          _
        // Predicated region
        $region21: #{tpu_custom_call.1} parent=11 // pred_check
          %p716 = pneg %p140
        $region22: #{tpu_custom_call.1} parent=11 // pred_check_branch
          %718 = sbr.rel (%p716) target = $region24
        $region23: #{tpu_custom_call.1} parent=11 // pred_region
          %s720 = ssub.s32 1024, 1024
          %721 = vsyncadd [#allocation13], %s720
          %s722 = sshll.u32 [#allocation12], 4
          %s723 = int_to_ptr.vmem [resolvable:$true] %s722
          %728 = dma.hbm_to_vmem [thread:$0]  %s3, 1024, %s723, [#allocation13], 128, 128, 8
        $region24: #{tpu_custom_call.1} parent=11 // pred_fallthru
          _
        // Predicated region
        $region25: #{tpu_custom_call.1} parent=11 // pred_check
          %p729 = pneg %p161
        $region26: #{tpu_custom_call.1} parent=11 // pred_check_branch
          %731 = sbr.rel (%p729) target = $region28
        $region27: #{tpu_custom_call.1} parent=11 // pred_region
          _
        $region28: #{tpu_custom_call.1} parent=11 // pred_fallthru
          _
        // Predicated region
        $region29: #{tpu_custom_call.1} parent=11 // pred_check
          %p732 = pneg %p182
        $region30: #{tpu_custom_call.1} parent=11 // pred_check_branch
          %734 = sbr.rel (%p732) target = $region32
        $region31: #{tpu_custom_call.1} parent=11 // pred_region
          _
        $region32: #{tpu_custom_call.1} parent=11 // pred_fallthru
          _
        // Predicated region
        $region33: #{tpu_custom_call.1} parent=11 // pred_check
          %p735 = pneg %p203
        $region34: #{tpu_custom_call.1} parent=11 // pred_check_branch
          %737 = sbr.rel (%p735) target = $region36
        $region35: #{tpu_custom_call.1} parent=11 // pred_region
          %s739 = ssub.s32 2048, 2048
          %740 = vsyncadd [#allocation13], %s739
          %s741 = sshll.u32 [#allocation14], 4
          %s742 = int_to_ptr.vmem [resolvable:$true] %s741
          %747 = dma.hbm_to_vmem [thread:$0]  %s6, 2048, %s742, [#allocation13], 128, 128, 8
        $region36: #{tpu_custom_call.1} parent=11 // pred_fallthru
          _
        // Predicated region
        $region37: #{tpu_custom_call.1} parent=11 // pred_check
          %p748 = pneg %p224
        $region38: #{tpu_custom_call.1} parent=11 // pred_check_branch
          %750 = sbr.rel (%p748) target = $region40
        $region39: #{tpu_custom_call.1} parent=11 // pred_region
          %s752 = ssub.s32 2048, 2048
          %753 = vsyncadd [#allocation16], %s752
          %s754 = sshll.u32 [#allocation15], 4
          %s755 = int_to_ptr.vmem [resolvable:$true] %s754
          %760 = dma.hbm_to_vmem [thread:$0]  %s7, 2048, %s755, [#allocation16], 128, 128, 8
        $region40: #{tpu_custom_call.1} parent=11 // pred_fallthru
          _
        // Predicated region
        $region41: #{tpu_custom_call.1} parent=11 // pred_check
          %p761 = pneg %p245
        $region42: #{tpu_custom_call.1} parent=11 // pred_check_branch
          %763 = sbr.rel (%p761) target = $region44
        $region43: #{tpu_custom_call.1} parent=11 // pred_region
          %s765 = ssub.s32 2048, 2048
          %766 = vsyncadd [#allocation16], %s765
          %s767 = sshll.u32 [#allocation17], 4
          %s768 = int_to_ptr.vmem [resolvable:$true] %s767
          %773 = dma.hbm_to_vmem [thread:$0]  %s8, 2048, %s768, [#allocation16], 128, 128, 8
        $region44: #{tpu_custom_call.1} parent=11 // pred_fallthru
          _
        // Predicated region
        $region45: #{tpu_custom_call.1} parent=11 // pred_check
          %p774 = pneg %p266
        $region46: #{tpu_custom_call.1} parent=11 // pred_check_branch
          %776 = sbr.rel (%p774) target = $region48
        $region47: #{tpu_custom_call.1} parent=11 // pred_region
          _
        $region48: #{tpu_custom_call.1} parent=11 // pred_fallthru
          _
        // Predicated region
        $region49: #{tpu_custom_call.1} parent=11 // pred_check
          %p777 = pneg %p287
        $region50: #{tpu_custom_call.1} parent=11 // pred_check_branch
          %779 = sbr.rel (%p777) target = $region52
        $region51: #{tpu_custom_call.1} parent=11 // pred_region
          _
        $region52: #{tpu_custom_call.1} parent=11 // pred_fallthru
          _
        // Predicated region
        $region53: #{tpu_custom_call.1} parent=11 // pred_check
          %p780 = pneg %p308
        $region54: #{tpu_custom_call.1} parent=11 // pred_check_branch
          %782 = sbr.rel (%p780) target = $region56
        $region55: #{tpu_custom_call.1} parent=11 // pred_region
          %s784 = ssub.s32 2048, 2048
          %785 = vsyncadd [#allocation19], %s784
          %s786 = sshll.u32 [#allocation18], 4
          %s787 = int_to_ptr.vmem [resolvable:$true] %s786
          %792 = dma.hbm_to_vmem [thread:$0]  %s11, 2048, %s787, [#allocation19], 128, 128, 8
        $region56: #{tpu_custom_call.1} parent=11 // pred_fallthru
          _
        // Predicated region
        $region57: #{tpu_custom_call.1} parent=11 // pred_check
          %p793 = pneg %p329
        $region58: #{tpu_custom_call.1} parent=11 // pred_check_branch
          %795 = sbr.rel (%p793) target = $region60
        $region59: #{tpu_custom_call.1} parent=11 // pred_region
          _
        $region60: #{tpu_custom_call.1} parent=11 // pred_fallthru
          _
        // Predicated region
        $region61: #{tpu_custom_call.1} parent=11 // pred_check
          %p796 = pneg %p350
        $region62: #{tpu_custom_call.1} parent=11 // pred_check_branch
          %798 = sbr.rel (%p796) target = $region64
        $region63: #{tpu_custom_call.1} parent=11 // pred_region
          _
        $region64: #{tpu_custom_call.1} parent=11 // pred_fallthru
          _
        // Predicated region
        $region65: #{tpu_custom_call.1} parent=11 // pred_check
          %p799 = pneg %p371
        $region66: #{tpu_custom_call.1} parent=11 // pred_check_branch
          %801 = sbr.rel (%p799) target = $region68
        $region67: #{tpu_custom_call.1} parent=11 // pred_region
          %s803 = ssub.s32 2048, 2048
          %804 = vsyncadd [#allocation19], %s803
          %s805 = sshll.u32 [#allocation20], 4
          %s806 = int_to_ptr.vmem [resolvable:$true] %s805
          %811 = dma.hbm_to_vmem [thread:$0]  %s14, 2048, %s806, [#allocation19], 128, 128, 8
        $region68: #{tpu_custom_call.1} parent=11 // pred_fallthru
          _
        // Predicated region
        $region69: #{tpu_custom_call.1} parent=11 // pred_check
          %p812 = pneg %p392
        $region70: #{tpu_custom_call.1} parent=11 // pred_check_branch
          %814 = sbr.rel (%p812) target = $region72
        $region71: #{tpu_custom_call.1} parent=11 // pred_region
          %s816 = ssub.s32 2048, 2048
          %817 = vsyncadd [#allocation22], %s816
          %s818 = sshll.u32 [#allocation21], 4
          %s819 = int_to_ptr.vmem [resolvable:$true] %s818
          %824 = dma.hbm_to_vmem [thread:$0]  %s15, 2048, %s819, [#allocation22], 128, 128, 8
        $region72: #{tpu_custom_call.1} parent=11 // pred_fallthru
          _
        // Predicated region
        $region73: #{tpu_custom_call.1} parent=11 // pred_check
          %p825 = pneg %p413
        $region74: #{tpu_custom_call.1} parent=11 // pred_check_branch
          %827 = sbr.rel (%p825) target = $region76
        $region75: #{tpu_custom_call.1} parent=11 // pred_region
          %s829 = ssub.s32 2048, 2048
          %830 = vsyncadd [#allocation22], %s829
          %s831 = sshll.u32 [#allocation23], 4
          %s832 = int_to_ptr.vmem [resolvable:$true] %s831
          %837 = dma.hbm_to_vmem [thread:$0]  %s16, 2048, %s832, [#allocation22], 128, 128, 8
        $region76: #{tpu_custom_call.1} parent=11 // pred_fallthru
          _
        // Predicated region
        $region77: #{tpu_custom_call.1} parent=11 // pred_check
          %p838 = pneg %p434
        $region78: #{tpu_custom_call.1} parent=11 // pred_check_branch
          %840 = sbr.rel (%p838) target = $region80
        $region79: #{tpu_custom_call.1} parent=11 // pred_region
          _
        $region80: #{tpu_custom_call.1} parent=11 // pred_fallthru
          _
        // Predicated region
        $region81: #{tpu_custom_call.1} parent=11 // pred_check
          %p841 = pneg %p455
        $region82: #{tpu_custom_call.1} parent=11 // pred_check_branch
          %843 = sbr.rel (%p841) target = $region84
        $region83: #{tpu_custom_call.1} parent=11 // pred_region
          _
        $region84: #{tpu_custom_call.1} parent=11 // pred_fallthru
          _
        // Predicated region
        $region85: #{tpu_custom_call.1} parent=11 // pred_check
          %p844 = pneg %p476
        $region86: #{tpu_custom_call.1} parent=11 // pred_check_branch
          %846 = sbr.rel (%p844) target = $region88
        $region87: #{tpu_custom_call.1} parent=11 // pred_region
          %s848 = ssub.s32 2048, 2048
          %849 = vsyncadd [#allocation25], %s848
          %s850 = sshll.u32 [#allocation24], 4
          %s851 = int_to_ptr.vmem [resolvable:$true] %s850
          %856 = dma.hbm_to_vmem [thread:$0]  %s19, 2048, %s851, [#allocation25], 128, 128, 8
        $region88: #{tpu_custom_call.1} parent=11 // pred_fallthru
          _
        // Predicated region
        $region89: #{tpu_custom_call.1} parent=11 // pred_check
          %p857 = pneg %p497
        $region90: #{tpu_custom_call.1} parent=11 // pred_check_branch
          %859 = sbr.rel (%p857) target = $region92
        $region91: #{tpu_custom_call.1} parent=11 // pred_region
          %s861 = ssub.s32 2048, 2048
          %862 = vsyncadd [#allocation25], %s861
          %s863 = sshll.u32 [#allocation26], 4
          %s864 = int_to_ptr.vmem [resolvable:$true] %s863
          %869 = dma.hbm_to_vmem [thread:$0]  %s20, 2048, %s864, [#allocation25], 128, 128, 8
        $region92: #{tpu_custom_call.1} parent=11 // pred_fallthru
          _
        // Predicated region
        $region93: #{tpu_custom_call.1} parent=11 // pred_check
          %p870 = pneg %p518
        $region94: #{tpu_custom_call.1} parent=11 // pred_check_branch
          %872 = sbr.rel (%p870) target = $region96
        $region95: #{tpu_custom_call.1} parent=11 // pred_region
          %s874 = ssub.s32 2048, 2048
          %875 = vsyncadd [#allocation28], %s874
          %s876 = sshll.u32 [#allocation27], 4
          %s877 = int_to_ptr.vmem [resolvable:$true] %s876
          %882 = dma.hbm_to_vmem [thread:$0]  %s21, 2048, %s877, [#allocation28], 128, 128, 8
        $region96: #{tpu_custom_call.1} parent=11 // pred_fallthru
          _
        // Predicated region
        $region97: #{tpu_custom_call.1} parent=11 // pred_check
          %p883 = pneg %p539
        $region98: #{tpu_custom_call.1} parent=11 // pred_check_branch
          %885 = sbr.rel (%p883) target = $region100
        $region99: #{tpu_custom_call.1} parent=11 // pred_region
          _
        $region100: #{tpu_custom_call.1} parent=11 // pred_fallthru
          _
        // Predicated region
        $region101: #{tpu_custom_call.1} parent=11 // pred_check
          %p886 = pneg %p560
        $region102: #{tpu_custom_call.1} parent=11 // pred_check_branch
          %888 = sbr.rel (%p886) target = $region104
        $region103: #{tpu_custom_call.1} parent=11 // pred_region
          _
        $region104: #{tpu_custom_call.1} parent=11 // pred_fallthru
          _
        // Predicated region
        $region105: #{tpu_custom_call.1} parent=11 // pred_check
          %p889 = pneg %p581
        $region106: #{tpu_custom_call.1} parent=11 // pred_check_branch
          %891 = sbr.rel (%p889) target = $region108
        $region107: #{tpu_custom_call.1} parent=11 // pred_region
          %s893 = ssub.s32 4096, 4096
          %894 = vsyncadd [#allocation28], %s893
          %s895 = sshll.u32 [#allocation29], 4
          %s896 = int_to_ptr.vmem [resolvable:$true] %s895
          %901 = dma.hbm_to_vmem [thread:$0]  %s24, 4096, %s896, [#allocation28], 256, 256, 16
        $region108: #{tpu_custom_call.1} parent=11 // pred_fallthru
          _
        // Predicated region
        $region109: #{tpu_custom_call.1} parent=11 // pred_check
          %p902 = pneg %p602
        $region110: #{tpu_custom_call.1} parent=11 // pred_check_branch
          %904 = sbr.rel (%p902) target = $region112
        $region111: #{tpu_custom_call.1} parent=11 // pred_region
          _
        $region112: #{tpu_custom_call.1} parent=11 // pred_fallthru
          _
        // Predicated region
        $region113: #{tpu_custom_call.1} parent=11 // pred_check
          %p905 = pneg %p623
        $region114: #{tpu_custom_call.1} parent=11 // pred_check_branch
          %907 = sbr.rel (%p905) target = $region116
        $region115: #{tpu_custom_call.1} parent=11 // pred_region
          _
        $region116: #{tpu_custom_call.1} parent=11 // pred_fallthru
          _
      $region12: #{tpu_custom_call.1} parent=5 // pred_fallthru
        _
      %p908 = scmp.lt.s32.totalorder %s51, 2
      // Predicated region
      $region117: #{tpu_custom_call.1} parent=5 // pred_check
        %p909 = pneg %p908
      $region118: #{tpu_custom_call.1} parent=5 // pred_check_branch
        %911 = sbr.rel (%p909) target = $region120
      $region119: #{tpu_custom_call.1} parent=5 // pred_region
        // Predicated region
        $region121: #{tpu_custom_call.1} parent=119 // pred_check
          %p912 = pneg %p71
        $region122: #{tpu_custom_call.1} parent=119 // pred_check_branch
          %914 = sbr.rel (%p912) target = $region124
        $region123: #{tpu_custom_call.1} parent=119 // pred_region
          %s915 = sand.u32 %s61, 1
          %s916 = scalar_lea.sflag [#allocation7], %s915
          %s917 = sand.u32 %s61, 1
          %s918 = smul.addr %s917, 16
          %s919 = scalar_lea.vmem [#allocation6], %s918
          %s921 = ssub.s32 256, 256
          %922 = vsyncadd %s916, %s921
          %s923 = smul.addr %s51, 2
          %s924 = smul.addr %s923, 128
          %s925 = scalar_lea.hbm %s0, %s924
          %s926 = sshll.u32 %s919, 4
          %s927 = int_to_ptr.vmem [resolvable:$true] %s926
          %932 = dma.hbm_to_vmem [thread:$0]  %s925, 256, %s927, %s916, 128, 128, 8
        $region124: #{tpu_custom_call.1} parent=119 // pred_fallthru
          _
      $region120: #{tpu_custom_call.1} parent=5 // pred_fallthru
        _
      %p933 = scmp.le.s32.totalorder 1, %s51
      %p934 = scmp.lt.s32.totalorder %s51, 3
      %p935 = pnand %p933, %p934
      %p936 = pneg %p935
      // Predicated region
      $region125: #{tpu_custom_call.1} parent=5 // pred_check
        _
      $region126: #{tpu_custom_call.1} parent=5 // pred_check_branch
        %938 = sbr.rel (%p935) target = $region128
      $region127: #{tpu_custom_call.1} parent=5 // pred_region
        %s939 = ssub.s32 %s51, 1
        %s940 = sand.u32 %s64, 1
        %s941 = scalar_lea.sflag [#allocation7], %s940
        %s942 = sand.u32 %s64, 1
        %s943 = smul.addr %s942, 16
        %s944 = scalar_lea.vmem [#allocation6], %s943
        // Predicated region
        $region129: #{tpu_custom_call.1} parent=127 // pred_check
          %p945 = pneg %p77
        $region130: #{tpu_custom_call.1} parent=127 // pred_check_branch
          %947 = sbr.rel (%p945) target = $region132
        $region131: #{tpu_custom_call.1} parent=127 // pred_region
          %948 = dma.done %s941, 256
        $region132: #{tpu_custom_call.1} parent=127 // pred_fallthru
          _
        // Predicated region
        $region133: #{tpu_custom_call.1} parent=127 // pred_check
          %p949 = pneg %p98
        $region134: #{tpu_custom_call.1} parent=127 // pred_check_branch
          %951 = sbr.rel (%p949) target = $region136
        $region135: #{tpu_custom_call.1} parent=127 // pred_region
          %952 = dma.done [#allocation10], 1024
        $region136: #{tpu_custom_call.1} parent=127 // pred_fallthru
          _
        // Predicated region
        $region137: #{tpu_custom_call.1} parent=127 // pred_check
          %p953 = pneg %p119
        $region138: #{tpu_custom_call.1} parent=127 // pred_check_branch
          %955 = sbr.rel (%p953) target = $region140
        $region139: #{tpu_custom_call.1} parent=127 // pred_region
          %956 = dma.done [#allocation10], 1024
        $region140: #{tpu_custom_call.1} parent=127 // pred_fallthru
          _
        // Predicated region
        $region141: #{tpu_custom_call.1} parent=127 // pred_check
          %p957 = pneg %p140
        $region142: #{tpu_custom_call.1} parent=127 // pred_check_branch
          %959 = sbr.rel (%p957) target = $region144
        $region143: #{tpu_custom_call.1} parent=127 // pred_region
          %960 = dma.done [#allocation13], 1024
        $region144: #{tpu_custom_call.1} parent=127 // pred_fallthru
          _
        // Predicated region
        $region145: #{tpu_custom_call.1} parent=127 // pred_check
          %p961 = pneg %p203
        $region146: #{tpu_custom_call.1} parent=127 // pred_check_branch
          %963 = sbr.rel (%p961) target = $region148
        $region147: #{tpu_custom_call.1} parent=127 // pred_region
          %964 = dma.done [#allocation13], 2048
        $region148: #{tpu_custom_call.1} parent=127 // pred_fallthru
          _
        // Predicated region
        $region149: #{tpu_custom_call.1} parent=127 // pred_check
          %p965 = pneg %p224
        $region150: #{tpu_custom_call.1} parent=127 // pred_check_branch
          %967 = sbr.rel (%p965) target = $region152
        $region151: #{tpu_custom_call.1} parent=127 // pred_region
          %968 = dma.done [#allocation16], 2048
        $region152: #{tpu_custom_call.1} parent=127 // pred_fallthru
          _
        // Predicated region
        $region153: #{tpu_custom_call.1} parent=127 // pred_check
          %p969 = pneg %p245
        $region154: #{tpu_custom_call.1} parent=127 // pred_check_branch
          %971 = sbr.rel (%p969) target = $region156
        $region155: #{tpu_custom_call.1} parent=127 // pred_region
          %972 = dma.done [#allocation16], 2048
        $region156: #{tpu_custom_call.1} parent=127 // pred_fallthru
          _
        // Predicated region
        $region157: #{tpu_custom_call.1} parent=127 // pred_check
          %p973 = pneg %p308
        $region158: #{tpu_custom_call.1} parent=127 // pred_check_branch
          %975 = sbr.rel (%p973) target = $region160
        $region159: #{tpu_custom_call.1} parent=127 // pred_region
          %976 = dma.done [#allocation19], 2048
        $region160: #{tpu_custom_call.1} parent=127 // pred_fallthru
          _
        // Predicated region
        $region161: #{tpu_custom_call.1} parent=127 // pred_check
          %p977 = pneg %p371
        $region162: #{tpu_custom_call.1} parent=127 // pred_check_branch
          %979 = sbr.rel (%p977) target = $region164
        $region163: #{tpu_custom_call.1} parent=127 // pred_region
          %980 = dma.done [#allocation19], 2048
        $region164: #{tpu_custom_call.1} parent=127 // pred_fallthru
          _
        // Predicated region
        $region165: #{tpu_custom_call.1} parent=127 // pred_check
          %p981 = pneg %p392
        $region166: #{tpu_custom_call.1} parent=127 // pred_check_branch
          %983 = sbr.rel (%p981) target = $region168
        $region167: #{tpu_custom_call.1} parent=127 // pred_region
          %984 = dma.done [#allocation22], 2048
        $region168: #{tpu_custom_call.1} parent=127 // pred_fallthru
          _
        // Predicated region
        $region169: #{tpu_custom_call.1} parent=127 // pred_check
          %p985 = pneg %p413
        $region170: #{tpu_custom_call.1} parent=127 // pred_check_branch
          %987 = sbr.rel (%p985) target = $region172
        $region171: #{tpu_custom_call.1} parent=127 // pred_region
          %988 = dma.done [#allocation22], 2048
        $region172: #{tpu_custom_call.1} parent=127 // pred_fallthru
          _
        // Predicated region
        $region173: #{tpu_custom_call.1} parent=127 // pred_check
          %p989 = pneg %p476
        $region174: #{tpu_custom_call.1} parent=127 // pred_check_branch
          %991 = sbr.rel (%p989) target = $region176
        $region175: #{tpu_custom_call.1} parent=127 // pred_region
          %992 = dma.done [#allocation25], 2048
        $region176: #{tpu_custom_call.1} parent=127 // pred_fallthru
          _
        // Predicated region
        $region177: #{tpu_custom_call.1} parent=127 // pred_check
          %p993 = pneg %p497
        $region178: #{tpu_custom_call.1} parent=127 // pred_check_branch
          %995 = sbr.rel (%p993) target = $region180
        $region179: #{tpu_custom_call.1} parent=127 // pred_region
          %996 = dma.done [#allocation25], 2048
        $region180: #{tpu_custom_call.1} parent=127 // pred_fallthru
          _
        // Predicated region
        $region181: #{tpu_custom_call.1} parent=127 // pred_check
          %p997 = pneg %p518
        $region182: #{tpu_custom_call.1} parent=127 // pred_check_branch
          %999 = sbr.rel (%p997) target = $region184
        $region183: #{tpu_custom_call.1} parent=127 // pred_region
          %1000 = dma.done [#allocation28], 2048
        $region184: #{tpu_custom_call.1} parent=127 // pred_fallthru
          _
        // Predicated region
        $region185: #{tpu_custom_call.1} parent=127 // pred_check
          %p1001 = pneg %p581
        $region186: #{tpu_custom_call.1} parent=127 // pred_check_branch
          %1003 = sbr.rel (%p1001) target = $region188
        $region187: #{tpu_custom_call.1} parent=127 // pred_region
          %1004 = dma.done [#allocation28], 4096
        $region188: #{tpu_custom_call.1} parent=127 // pred_fallthru
          _
        %s1005 = sand.u32 %s64, 1
        %s1006 = scalar_lea.sflag [#allocation7], %s1005
        %s1007 = sand.u32 %s64, 1
        %s1008 = smul.addr %s1007, 16
        %s1009 = scalar_lea.vmem [#allocation6], %s1008
        %p1010 = pneg %p77
        %p1011 = pneg %p74
        %p1012 = pneg %p98
        %p1013 = pneg %p95
        %p1014 = pneg %p119
        %p1015 = pneg %p116
        %p1016 = pneg %p140
        %p1017 = pneg %p137
        %p1018 = pneg %p161
        %p1019 = pneg %p158
        %p1020 = pneg %p182
        %p1021 = pneg %p179
        %p1022 = pneg %p203
        %p1023 = pneg %p200
        %p1024 = pneg %p224
        %p1025 = pneg %p221
        %p1026 = pneg %p245
        %p1027 = pneg %p242
        %p1028 = pneg %p266
        %p1029 = pneg %p263
        %p1030 = pneg %p287
        %p1031 = pneg %p284
        %p1032 = pneg %p308
        %p1033 = pneg %p305
        %p1034 = pneg %p329
        %p1035 = pneg %p326
        %p1036 = pneg %p350
        %p1037 = pneg %p347
        %p1038 = pneg %p371
        %p1039 = pneg %p368
        %p1040 = pneg %p392
        %p1041 = pneg %p389
        %p1042 = pneg %p413
        %p1043 = pneg %p410
        %p1044 = pneg %p434
        %p1045 = pneg %p431
        %p1046 = pneg %p455
        %p1047 = pneg %p452
        %p1048 = pneg %p476
        %p1049 = pneg %p473
        %p1050 = pneg %p497
        %p1051 = pneg %p494
        %p1052 = pneg %p518
        %p1053 = pneg %p515
        %p1054 = pneg %p539
        %p1055 = pneg %p536
        %p1056 = pneg %p560
        %p1057 = pneg %p557
        %p1058 = pneg %p581
        %p1059 = pneg %p578
        %p1060 = pneg %p602
        %p1061 = pneg %p599
        %p1062 = pneg %p623
        %p1063 = pneg %p620
        %p1064 = pneg %p649
        %p1065 = pneg %p646
        %s1066 = sand.u32 %s636, 1
        %s1067 = scalar_lea.sflag [#allocation8], %s1066
        %s1068 = sand.u32 %s636, 1
        %s1069 = smul.addr %s1068, 16
        %s1070 = scalar_lea.vmem [#allocation30], %s1069
        %p1071 = pneg %p675
        %p1072 = pneg %p672
        %s1073 = sand.u32 %s662, 1
        %s1074 = scalar_lea.sflag [#allocation32], %s1073
        %s1075 = sand.u32 %s662, 1
        %s1076 = smul.addr %s1075, 16
        %s1077 = scalar_lea.vmem [#allocation31], %s1076
        %v1078 = vld [vmem:[%s944] sm:$0xff]
        %v1079 = vld [vmem:[%s944 + $0x8] sm:$0xff]
        %vm1080 = vcmask 516096
        %1081 = vst.msk [vmem:[#allocation2] sm:$0x1] %vm1080, 0.0
        %1082 = vst.msk [vmem:[#allocation2 + $0x11] sm:$0x1] %vm1080, 0.0
        %vm1083 = vcmask 523264
        %1084 = vst.msk [vmem:[#allocation2 + $0x1] sm:$0xff] %vm1083, %v1078
        %1085 = vst.msk [vmem:[#allocation2 + $0x9] sm:$0xff] %vm1083, %v1079
        %v1086 = vld [vmem:[#allocation2] sm:$0xff]
        %v1087 = vld [vmem:[#allocation2 + $0x8] sm:$0xff]
        %v1088 = vld [vmem:[#allocation9] sm:$0xff]
        %v1089 = vld [vmem:[#allocation9 + $0x8] sm:$0xff]
        %v1090 = vld [vmem:[#allocation9 + $0x10] sm:$0xff]
        %v1091 = vld [vmem:[#allocation9 + $0x18] sm:$0xff]
        %v1092 = vld [vmem:[#allocation9 + $0x20] sm:$0xff]
        %v1093 = vld [vmem:[#allocation9 + $0x28] sm:$0xff]
        %v1094 = vld [vmem:[#allocation9 + $0x30] sm:$0xff]
        %v1095 = vld [vmem:[#allocation9 + $0x38] sm:$0xff]
        %v1096 = vld [vmem:[#allocation2 + $0x1] sm:$0xff]
        %v1097 = vld [vmem:[#allocation2 + $0x9] sm:$0xff]
        %v1098 = vld [vmem:[#allocation11] sm:$0xff]
        %v1099 = vld [vmem:[#allocation11 + $0x8] sm:$0xff]
        %v1100 = vld [vmem:[#allocation11 + $0x10] sm:$0xff]
        %v1101 = vld [vmem:[#allocation11 + $0x18] sm:$0xff]
        %v1102 = vld [vmem:[#allocation11 + $0x20] sm:$0xff]
        %v1103 = vld [vmem:[#allocation11 + $0x28] sm:$0xff]
        %v1104 = vld [vmem:[#allocation11 + $0x30] sm:$0xff]
        %v1105 = vld [vmem:[#allocation11 + $0x38] sm:$0xff]
        %v1107 = vsel %vm1083, %v1096, 0
        %v1110 = vsel %vm1083, %v1097, 0
        %1112 = vmatprep.subr.mxu0 0.0
        %1113 = vmatpush1.msra.mxu0 %v1098
        %1114 = vmatprep.subr.mxu0 0.0
        %1115 = vmatpush1.msra.mxu0 %v1099
        %1116 = vmatprep.subr.mxu0 0.0
        %1117 = vmatpush1.msra.mxu0 %v1100
        %1118 = vmatprep.subr.mxu0 0.0
        %1119 = vmatpush1.msra.mxu0 %v1101
        %1120 = vmatprep.subr.mxu0 0.0
        %1121 = vmatpush1.msra.mxu0 %v1102
        %1122 = vmatprep.subr.mxu0 0.0
        %1123 = vmatpush1.msra.mxu0 %v1103
        %1124 = vmatprep.subr.mxu0 0.0
        %1125 = vmatpush1.msra.mxu0 %v1104
        %1126 = vmatprep.subr.mxu0 0.0
        %1127 = vmatpush1.msra.mxu0 %v1105
        %1128 = vmatprep.subr.mxu0 0.0
        %1129 = vmatpush1.msra.mxu0 0.0
        %1130 = vmatprep.subr.mxu0 0.0
        %1131 = vmatpush1.msra.mxu0 0.0
        %1132 = vmatprep.subr.mxu0 0.0
        %1133 = vmatpush1.msra.mxu0 0.0
        %1134 = vmatprep.subr.mxu0 0.0
        %1135 = vmatpush1.msra.mxu0 0.0
        %1136 = vmatprep.subr.mxu0 0.0
        %1137 = vmatpush1.msra.mxu0 0.0
        %1138 = vmatprep.subr.mxu0 0.0
        %1139 = vmatpush1.msra.mxu0 0.0
        %1140 = vmatprep.subr.mxu0 0.0
        %1141 = vmatpush1.msra.mxu0 0.0
        %1142 = vmatprep.subr.mxu0 0.0
        %1143 = vmatpush1.msra.mxu0 0.0
        %1144 = vmatprep.subr.mxu0 0.0
        %1145 = vmatpush1.msra.mxu0 0.0
        %1146 = vmatprep.subr.mxu0 0.0
        %1147 = vmatpush1.msra.mxu0 0.0
        %1148 = vmatprep.subr.mxu0 0.0
        %1149 = vmatpush1.msra.mxu0 0.0
        %1150 = vmatprep.subr.mxu0 0.0
        %1151 = vmatpush1.msra.mxu0 0.0
        %1152 = vmatprep.subr.mxu0 0.0
        %1153 = vmatpush1.msra.mxu0 0.0
        %1154 = vmatprep.subr.mxu0 0.0
        %1155 = vmatpush1.msra.mxu0 0.0
        %1156 = vmatprep.subr.mxu0 0.0
        %1157 = vmatpush1.msra.mxu0 0.0
        %1158 = vmatprep.subr.mxu0 0.0
        %1159 = vmatpush1.msra.mxu0 0.0
        %1160 = vmatprep.subr.mxu0 0.0
        %1161 = vmatpush1.msra.mxu0 0.0
        %1162 = vmatprep.subr.mxu0 0.0
        %1163 = vmatpush1.msra.mxu0 0.0
        %1164 = vmatprep.subr.mxu0 0.0
        %1165 = vmatpush1.msra.mxu0 0.0
        %1166 = vmatprep.subr.mxu0 0.0
        %1167 = vmatpush1.msra.mxu0 0.0
        %1168 = vmatprep.subr.mxu0 0.0
        %1169 = vmatpush1.msra.mxu0 0.0
        %1170 = vmatprep.subr.mxu0 0.0
        %1171 = vmatpush1.msra.mxu0 0.0
        %1172 = vmatprep.subr.mxu0 0.0
        %1173 = vmatpush1.msra.mxu0 0.0
        %1174 = vmatprep.subr.mxu0 0.0
        %1175 = vmatpush1.msra.mxu0 0.0
        %1176 = vmatprep.mubr.f32.mxu0 0.0
        %1177 = vmatmul.mubr.f32.gmra.mrb[0].mxu0 %v1107
        %v1178 = vpop.f32.mrb[0].mxu0
        %v1179 = vadd.f32 0.0, %v1178
        %v1180 = vpop.f32.mrb[0].mxu0
        %1181 = vmatprep.mubr.f32.mxu0 0.0
        %1182 = vmatmul.mubr.f32.gmra.mrb[0].mxu0 %v1110
        %v1183 = vpop.f32.mrb[0].mxu0
        %v1184 = vadd.f32 0.0, %v1183
        %v1185 = vpop.f32.mrb[0].mxu0
        %1186 = vdwg.mxu0
        %v1188 = vsel %vm1083, %v1086, 0
        %v1191 = vsel %vm1083, %v1087, 0
        %1193 = vmatprep.subr.mxu0 0.0
        %1194 = vmatpush1.msra.mxu0 %v1088
        %1195 = vmatprep.subr.mxu0 0.0
        %1196 = vmatpush1.msra.mxu0 %v1089
        %1197 = vmatprep.subr.mxu0 0.0
        %1198 = vmatpush1.msra.mxu0 %v1090
        %1199 = vmatprep.subr.mxu0 0.0
        %1200 = vmatpush1.msra.mxu0 %v1091
        %1201 = vmatprep.subr.mxu0 0.0
        %1202 = vmatpush1.msra.mxu0 %v1092
        %1203 = vmatprep.subr.mxu0 0.0
        %1204 = vmatpush1.msra.mxu0 %v1093
        %1205 = vmatprep.subr.mxu0 0.0
        %1206 = vmatpush1.msra.mxu0 %v1094
        %1207 = vmatprep.subr.mxu0 0.0
        %1208 = vmatpush1.msra.mxu0 %v1095
        %1209 = vmatprep.subr.mxu0 0.0
        %1210 = vmatpush1.msra.mxu0 0.0
        %1211 = vmatprep.subr.mxu0 0.0
        %1212 = vmatpush1.msra.mxu0 0.0
        %1213 = vmatprep.subr.mxu0 0.0
        %1214 = vmatpush1.msra.mxu0 0.0
        %1215 = vmatprep.subr.mxu0 0.0
        %1216 = vmatpush1.msra.mxu0 0.0
        %1217 = vmatprep.subr.mxu0 0.0
        %1218 = vmatpush1.msra.mxu0 0.0
        %1219 = vmatprep.subr.mxu0 0.0
        %1220 = vmatpush1.msra.mxu0 0.0
        %1221 = vmatprep.subr.mxu0 0.0
        %1222 = vmatpush1.msra.mxu0 0.0
        %1223 = vmatprep.subr.mxu0 0.0
        %1224 = vmatpush1.msra.mxu0 0.0
        %1225 = vmatprep.subr.mxu0 0.0
        %1226 = vmatpush1.msra.mxu0 0.0
        %1227 = vmatprep.subr.mxu0 0.0
        %1228 = vmatpush1.msra.mxu0 0.0
        %1229 = vmatprep.subr.mxu0 0.0
        %1230 = vmatpush1.msra.mxu0 0.0
        %1231 = vmatprep.subr.mxu0 0.0
        %1232 = vmatpush1.msra.mxu0 0.0
        %1233 = vmatprep.subr.mxu0 0.0
        %1234 = vmatpush1.msra.mxu0 0.0
        %1235 = vmatprep.subr.mxu0 0.0
        %1236 = vmatpush1.msra.mxu0 0.0
        %1237 = vmatprep.subr.mxu0 0.0
        %1238 = vmatpush1.msra.mxu0 0.0
        %1239 = vmatprep.subr.mxu0 0.0
        %1240 = vmatpush1.msra.mxu0 0.0
        %1241 = vmatprep.subr.mxu0 0.0
        %1242 = vmatpush1.msra.mxu0 0.0
        %1243 = vmatprep.subr.mxu0 0.0
        %1244 = vmatpush1.msra.mxu0 0.0
        %1245 = vmatprep.subr.mxu0 0.0
        %1246 = vmatpush1.msra.mxu0 0.0
        %1247 = vmatprep.subr.mxu0 0.0
        %1248 = vmatpush1.msra.mxu0 0.0
        %1249 = vmatprep.subr.mxu0 0.0
        %1250 = vmatpush1.msra.mxu0 0.0
        %1251 = vmatprep.subr.mxu0 0.0
        %1252 = vmatpush1.msra.mxu0 0.0
        %1253 = vmatprep.subr.mxu0 0.0
        %1254 = vmatpush1.msra.mxu0 0.0
        %1255 = vmatprep.subr.mxu0 0.0
        %1256 = vmatpush1.msra.mxu0 0.0
        %1257 = vmatprep.mubr.f32.mxu0 0.0
        %1258 = vmatmul.mubr.f32.gmra.mrb[0].mxu0 %v1188
        %v1259 = vpop.f32.mrb[0].mxu0
        %v1260 = vadd.f32 %v1179, %v1259
        %v1261 = vpop.f32.mrb[0].mxu0
        %1262 = vmatprep.mubr.f32.mxu0 0.0
        %1263 = vmatmul.mubr.f32.gmra.mrb[0].mxu0 %v1191
        %v1264 = vpop.f32.mrb[0].mxu0
        %v1265 = vadd.f32 %v1184, %v1264
        %v1266 = vpop.f32.mrb[0].mxu0
        %1267 = vdwg.mxu0
        %v1268 = vld [vmem:[#allocation2 + $0x2] sm:$0xff]
        %v1269 = vld [vmem:[#allocation2 + $0xa] sm:$0xff]
        %v1270 = vld [vmem:[#allocation12] sm:$0xff]
        %v1271 = vld [vmem:[#allocation12 + $0x8] sm:$0xff]
        %v1272 = vld [vmem:[#allocation12 + $0x10] sm:$0xff]
        %v1273 = vld [vmem:[#allocation12 + $0x18] sm:$0xff]
        %v1274 = vld [vmem:[#allocation12 + $0x20] sm:$0xff]
        %v1275 = vld [vmem:[#allocation12 + $0x28] sm:$0xff]
        %v1276 = vld [vmem:[#allocation12 + $0x30] sm:$0xff]
        %v1277 = vld [vmem:[#allocation12 + $0x38] sm:$0xff]
        %v1279 = vsel %vm1083, %v1268, 0
        %v1282 = vsel %vm1083, %v1269, 0
        %1284 = vmatprep.subr.mxu0 0.0
        %1285 = vmatpush1.msra.mxu0 %v1270
        %1286 = vmatprep.subr.mxu0 0.0
        %1287 = vmatpush1.msra.mxu0 %v1271
        %1288 = vmatprep.subr.mxu0 0.0
        %1289 = vmatpush1.msra.mxu0 %v1272
        %1290 = vmatprep.subr.mxu0 0.0
        %1291 = vmatpush1.msra.mxu0 %v1273
        %1292 = vmatprep.subr.mxu0 0.0
        %1293 = vmatpush1.msra.mxu0 %v1274
        %1294 = vmatprep.subr.mxu0 0.0
        %1295 = vmatpush1.msra.mxu0 %v1275
        %1296 = vmatprep.subr.mxu0 0.0
        %1297 = vmatpush1.msra.mxu0 %v1276
        %1298 = vmatprep.subr.mxu0 0.0
        %1299 = vmatpush1.msra.mxu0 %v1277
        %1300 = vmatprep.subr.mxu0 0.0
        %1301 = vmatpush1.msra.mxu0 0.0
        %1302 = vmatprep.subr.mxu0 0.0
        %1303 = vmatpush1.msra.mxu0 0.0
        %1304 = vmatprep.subr.mxu0 0.0
        %1305 = vmatpush1.msra.mxu0 0.0
        %1306 = vmatprep.subr.mxu0 0.0
        %1307 = vmatpush1.msra.mxu0 0.0
        %1308 = vmatprep.subr.mxu0 0.0
        %1309 = vmatpush1.msra.mxu0 0.0
        %1310 = vmatprep.subr.mxu0 0.0
        %1311 = vmatpush1.msra.mxu0 0.0
        %1312 = vmatprep.subr.mxu0 0.0
        %1313 = vmatpush1.msra.mxu0 0.0
        %1314 = vmatprep.subr.mxu0 0.0
        %1315 = vmatpush1.msra.mxu0 0.0
        %1316 = vmatprep.subr.mxu0 0.0
        %1317 = vmatpush1.msra.mxu0 0.0
        %1318 = vmatprep.subr.mxu0 0.0
        %1319 = vmatpush1.msra.mxu0 0.0
        %1320 = vmatprep.subr.mxu0 0.0
        %1321 = vmatpush1.msra.mxu0 0.0
        %1322 = vmatprep.subr.mxu0 0.0
        %1323 = vmatpush1.msra.mxu0 0.0
        %1324 = vmatprep.subr.mxu0 0.0
        %1325 = vmatpush1.msra.mxu0 0.0
        %1326 = vmatprep.subr.mxu0 0.0
        %1327 = vmatpush1.msra.mxu0 0.0
        %1328 = vmatprep.subr.mxu0 0.0
        %1329 = vmatpush1.msra.mxu0 0.0
        %1330 = vmatprep.subr.mxu0 0.0
        %1331 = vmatpush1.msra.mxu0 0.0
        %1332 = vmatprep.subr.mxu0 0.0
        %1333 = vmatpush1.msra.mxu0 0.0
        %1334 = vmatprep.subr.mxu0 0.0
        %1335 = vmatpush1.msra.mxu0 0.0
        %1336 = vmatprep.subr.mxu0 0.0
        %1337 = vmatpush1.msra.mxu0 0.0
        %1338 = vmatprep.subr.mxu0 0.0
        %1339 = vmatpush1.msra.mxu0 0.0
        %1340 = vmatprep.subr.mxu0 0.0
        %1341 = vmatpush1.msra.mxu0 0.0
        %1342 = vmatprep.subr.mxu0 0.0
        %1343 = vmatpush1.msra.mxu0 0.0
        %1344 = vmatprep.subr.mxu0 0.0
        %1345 = vmatpush1.msra.mxu0 0.0
        %1346 = vmatprep.subr.mxu0 0.0
        %1347 = vmatpush1.msra.mxu0 0.0
        %1348 = vmatprep.mubr.f32.mxu0 0.0
        %1349 = vmatmul.mubr.f32.gmra.mrb[0].mxu0 %v1279
        %v1350 = vpop.f32.mrb[0].mxu0
        %v1351 = vadd.f32 0.0, %v1350
        %v1352 = vpop.f32.mrb[0].mxu0
        %1353 = vmatprep.mubr.f32.mxu0 0.0
        %1354 = vmatmul.mubr.f32.gmra.mrb[0].mxu0 %v1282
        %v1355 = vpop.f32.mrb[0].mxu0
        %v1356 = vadd.f32 0.0, %v1355
        %v1357 = vpop.f32.mrb[0].mxu0
        %1358 = vdwg.mxu0
        %v1359 = vadd.f32 %v1260, %v1351
        %v1360 = vadd.f32 %v1265, %v1356
        %v1361 = vld [vmem:[%s4] sm:$0x1]
        %v1363 = vlaneseq
        %v1364 = vshrl.u32 %v1363, 7
        %v1365 = vsub.s32 0, %v1364
        %v1366 = vrot.slane %v1361, %v1365
        %v1368 = vmul.f32 %v1359, %v1366
        %v1369 = vmul.f32 %v1360, %v1366
        %v1370 = vld [vmem:[%s5] sm:$0x1]
        %v1372 = vlaneseq
        %v1373 = vshrl.u32 %v1372, 7
        %v1374 = vsub.s32 0, %v1373
        %v1375 = vrot.slane %v1370, %v1374
        %v1377 = vadd.f32 %v1368, %v1375
        %v1378 = vadd.f32 %v1369, %v1375
        %v1379 = vmax.f32 %v1377, 0.0
        %v1380 = vmax.f32 %v1378, 0.0
        %1381 = vst [vmem:[#allocation3] sm:$0x1] 0.0
        %1382 = vst [vmem:[#allocation3 + $0x11] sm:$0x1] 0.0
        %1383 = vst [vmem:[#allocation3 + $0x1] sm:$0xff] %v1379
        %1384 = vst [vmem:[#allocation3 + $0x9] sm:$0xff] %v1380
        %v1385 = vld [vmem:[#allocation3] sm:$0xff]
        %v1386 = vld [vmem:[#allocation3 + $0x8] sm:$0xff]
        %v1387 = vld [vmem:[#allocation14] sm:$0xff]
        %v1388 = vld [vmem:[#allocation14 + $0x8] sm:$0xff]
        %v1389 = vld [vmem:[#allocation14 + $0x10] sm:$0xff]
        %v1390 = vld [vmem:[#allocation14 + $0x18] sm:$0xff]
        %v1391 = vld [vmem:[#allocation14 + $0x20] sm:$0xff]
        %v1392 = vld [vmem:[#allocation14 + $0x28] sm:$0xff]
        %v1393 = vld [vmem:[#allocation14 + $0x30] sm:$0xff]
        %v1394 = vld [vmem:[#allocation14 + $0x38] sm:$0xff]
        %v1395 = vld [vmem:[#allocation14 + $0x40] sm:$0xff]
        %v1396 = vld [vmem:[#allocation14 + $0x48] sm:$0xff]
        %v1397 = vld [vmem:[#allocation14 + $0x50] sm:$0xff]
        %v1398 = vld [vmem:[#allocation14 + $0x58] sm:$0xff]
        %v1399 = vld [vmem:[#allocation14 + $0x60] sm:$0xff]
        %v1400 = vld [vmem:[#allocation14 + $0x68] sm:$0xff]
        %v1401 = vld [vmem:[#allocation14 + $0x70] sm:$0xff]
        %v1402 = vld [vmem:[#allocation14 + $0x78] sm:$0xff]
        %v1403 = vld [vmem:[#allocation3 + $0x1] sm:$0xff]
        %v1404 = vld [vmem:[#allocation3 + $0x9] sm:$0xff]
        %v1405 = vld [vmem:[#allocation15] sm:$0xff]
        %v1406 = vld [vmem:[#allocation15 + $0x8] sm:$0xff]
        %v1407 = vld [vmem:[#allocation15 + $0x10] sm:$0xff]
        %v1408 = vld [vmem:[#allocation15 + $0x18] sm:$0xff]
        %v1409 = vld [vmem:[#allocation15 + $0x20] sm:$0xff]
        %v1410 = vld [vmem:[#allocation15 + $0x28] sm:$0xff]
        %v1411 = vld [vmem:[#allocation15 + $0x30] sm:$0xff]
        %v1412 = vld [vmem:[#allocation15 + $0x38] sm:$0xff]
        %v1413 = vld [vmem:[#allocation15 + $0x40] sm:$0xff]
        %v1414 = vld [vmem:[#allocation15 + $0x48] sm:$0xff]
        %v1415 = vld [vmem:[#allocation15 + $0x50] sm:$0xff]
        %v1416 = vld [vmem:[#allocation15 + $0x58] sm:$0xff]
        %v1417 = vld [vmem:[#allocation15 + $0x60] sm:$0xff]
        %v1418 = vld [vmem:[#allocation15 + $0x68] sm:$0xff]
        %v1419 = vld [vmem:[#allocation15 + $0x70] sm:$0xff]
        %v1420 = vld [vmem:[#allocation15 + $0x78] sm:$0xff]
        %1421 = vmatprep.subr.mxu0 0.0
        %1422 = vmatpush1.msra.mxu0 %v1405
        %1423 = vmatprep.subr.mxu0 0.0
        %1424 = vmatpush1.msra.mxu0 %v1406
        %1425 = vmatprep.subr.mxu0 0.0
        %1426 = vmatpush1.msra.mxu0 %v1407
        %1427 = vmatprep.subr.mxu0 0.0
        %1428 = vmatpush1.msra.mxu0 %v1408
        %1429 = vmatprep.subr.mxu0 0.0
        %1430 = vmatpush1.msra.mxu0 %v1409
        %1431 = vmatprep.subr.mxu0 0.0
        %1432 = vmatpush1.msra.mxu0 %v1410
        %1433 = vmatprep.subr.mxu0 0.0
        %1434 = vmatpush1.msra.mxu0 %v1411
        %1435 = vmatprep.subr.mxu0 0.0
        %1436 = vmatpush1.msra.mxu0 %v1412
        %1437 = vmatprep.subr.mxu0 0.0
        %1438 = vmatpush1.msra.mxu0 %v1413
        %1439 = vmatprep.subr.mxu0 0.0
        %1440 = vmatpush1.msra.mxu0 %v1414
        %1441 = vmatprep.subr.mxu0 0.0
        %1442 = vmatpush1.msra.mxu0 %v1415
        %1443 = vmatprep.subr.mxu0 0.0
        %1444 = vmatpush1.msra.mxu0 %v1416
        %1445 = vmatprep.subr.mxu0 0.0
        %1446 = vmatpush1.msra.mxu0 %v1417
        %1447 = vmatprep.subr.mxu0 0.0
        %1448 = vmatpush1.msra.mxu0 %v1418
        %1449 = vmatprep.subr.mxu0 0.0
        %1450 = vmatpush1.msra.mxu0 %v1419
        %1451 = vmatprep.subr.mxu0 0.0
        %1452 = vmatpush1.msra.mxu0 %v1420
        %1453 = vmatprep.subr.mxu0 0.0
        %1454 = vmatpush1.msra.mxu0 0.0
        %1455 = vmatprep.subr.mxu0 0.0
        %1456 = vmatpush1.msra.mxu0 0.0
        %1457 = vmatprep.subr.mxu0 0.0
        %1458 = vmatpush1.msra.mxu0 0.0
        %1459 = vmatprep.subr.mxu0 0.0
        %1460 = vmatpush1.msra.mxu0 0.0
        %1461 = vmatprep.subr.mxu0 0.0
        %1462 = vmatpush1.msra.mxu0 0.0
        %1463 = vmatprep.subr.mxu0 0.0
        %1464 = vmatpush1.msra.mxu0 0.0
        %1465 = vmatprep.subr.mxu0 0.0
        %1466 = vmatpush1.msra.mxu0 0.0
        %1467 = vmatprep.subr.mxu0 0.0
        %1468 = vmatpush1.msra.mxu0 0.0
        %1469 = vmatprep.subr.mxu0 0.0
        %1470 = vmatpush1.msra.mxu0 0.0
        %1471 = vmatprep.subr.mxu0 0.0
        %1472 = vmatpush1.msra.mxu0 0.0
        %1473 = vmatprep.subr.mxu0 0.0
        %1474 = vmatpush1.msra.mxu0 0.0
        %1475 = vmatprep.subr.mxu0 0.0
        %1476 = vmatpush1.msra.mxu0 0.0
        %1477 = vmatprep.subr.mxu0 0.0
        %1478 = vmatpush1.msra.mxu0 0.0
        %1479 = vmatprep.subr.mxu0 0.0
        %1480 = vmatpush1.msra.mxu0 0.0
        %1481 = vmatprep.subr.mxu0 0.0
        %1482 = vmatpush1.msra.mxu0 0.0
        %1483 = vmatprep.subr.mxu0 0.0
        %1484 = vmatpush1.msra.mxu0 0.0
        %1485 = vmatprep.mubr.f32.mxu0 0.0
        %1486 = vmatmul.mubr.f32.gmra.mrb[0].mxu0 %v1403
        %v1487 = vpop.f32.mrb[0].mxu0
        %v1488 = vadd.f32 0.0, %v1487
        %v1489 = vpop.f32.mrb[0].mxu0
        %1490 = vmatprep.mubr.f32.mxu0 0.0
        %1491 = vmatmul.mubr.f32.gmra.mrb[0].mxu0 %v1404
        %v1492 = vpop.f32.mrb[0].mxu0
        %v1493 = vadd.f32 0.0, %v1492
        %v1494 = vpop.f32.mrb[0].mxu0
        %1495 = vdwg.mxu0
        %1496 = vmatprep.subr.mxu0 0.0
        %1497 = vmatpush1.msra.mxu0 %v1387
        %1498 = vmatprep.subr.mxu0 0.0
        %1499 = vmatpush1.msra.mxu0 %v1388
        %1500 = vmatprep.subr.mxu0 0.0
        %1501 = vmatpush1.msra.mxu0 %v1389
        %1502 = vmatprep.subr.mxu0 0.0
        %1503 = vmatpush1.msra.mxu0 %v1390
        %1504 = vmatprep.subr.mxu0 0.0
        %1505 = vmatpush1.msra.mxu0 %v1391
        %1506 = vmatprep.subr.mxu0 0.0
        %1507 = vmatpush1.msra.mxu0 %v1392
        %1508 = vmatprep.subr.mxu0 0.0
        %1509 = vmatpush1.msra.mxu0 %v1393
        %1510 = vmatprep.subr.mxu0 0.0
        %1511 = vmatpush1.msra.mxu0 %v1394
        %1512 = vmatprep.subr.mxu0 0.0
        %1513 = vmatpush1.msra.mxu0 %v1395
        %1514 = vmatprep.subr.mxu0 0.0
        %1515 = vmatpush1.msra.mxu0 %v1396
        %1516 = vmatprep.subr.mxu0 0.0
        %1517 = vmatpush1.msra.mxu0 %v1397
        %1518 = vmatprep.subr.mxu0 0.0
        %1519 = vmatpush1.msra.mxu0 %v1398
        %1520 = vmatprep.subr.mxu0 0.0
        %1521 = vmatpush1.msra.mxu0 %v1399
        %1522 = vmatprep.subr.mxu0 0.0
        %1523 = vmatpush1.msra.mxu0 %v1400
        %1524 = vmatprep.subr.mxu0 0.0
        %1525 = vmatpush1.msra.mxu0 %v1401
        %1526 = vmatprep.subr.mxu0 0.0
        %1527 = vmatpush1.msra.mxu0 %v1402
        %1528 = vmatprep.subr.mxu0 0.0
        %1529 = vmatpush1.msra.mxu0 0.0
        %1530 = vmatprep.subr.mxu0 0.0
        %1531 = vmatpush1.msra.mxu0 0.0
        %1532 = vmatprep.subr.mxu0 0.0
        %1533 = vmatpush1.msra.mxu0 0.0
        %1534 = vmatprep.subr.mxu0 0.0
        %1535 = vmatpush1.msra.mxu0 0.0
        %1536 = vmatprep.subr.mxu0 0.0
        %1537 = vmatpush1.msra.mxu0 0.0
        %1538 = vmatprep.subr.mxu0 0.0
        %1539 = vmatpush1.msra.mxu0 0.0
        %1540 = vmatprep.subr.mxu0 0.0
        %1541 = vmatpush1.msra.mxu0 0.0
        %1542 = vmatprep.subr.mxu0 0.0
        %1543 = vmatpush1.msra.mxu0 0.0
        %1544 = vmatprep.subr.mxu0 0.0
        %1545 = vmatpush1.msra.mxu0 0.0
        %1546 = vmatprep.subr.mxu0 0.0
        %1547 = vmatpush1.msra.mxu0 0.0
        %1548 = vmatprep.subr.mxu0 0.0
        %1549 = vmatpush1.msra.mxu0 0.0
        %1550 = vmatprep.subr.mxu0 0.0
        %1551 = vmatpush1.msra.mxu0 0.0
        %1552 = vmatprep.subr.mxu0 0.0
        %1553 = vmatpush1.msra.mxu0 0.0
        %1554 = vmatprep.subr.mxu0 0.0
        %1555 = vmatpush1.msra.mxu0 0.0
        %1556 = vmatprep.subr.mxu0 0.0
        %1557 = vmatpush1.msra.mxu0 0.0
        %1558 = vmatprep.subr.mxu0 0.0
        %1559 = vmatpush1.msra.mxu0 0.0
        %1560 = vmatprep.mubr.f32.mxu0 0.0
        %1561 = vmatmul.mubr.f32.gmra.mrb[0].mxu0 %v1385
        %v1562 = vpop.f32.mrb[0].mxu0
        %v1563 = vadd.f32 %v1488, %v1562
        %v1564 = vpop.f32.mrb[0].mxu0
        %1565 = vmatprep.mubr.f32.mxu0 0.0
        %1566 = vmatmul.mubr.f32.gmra.mrb[0].mxu0 %v1386
        %v1567 = vpop.f32.mrb[0].mxu0
        %v1568 = vadd.f32 %v1493, %v1567
        %v1569 = vpop.f32.mrb[0].mxu0
        %1570 = vdwg.mxu0
        %v1571 = vld [vmem:[#allocation3 + $0x2] sm:$0xff]
        %v1572 = vld [vmem:[#allocation3 + $0xa] sm:$0xff]
        %v1573 = vld [vmem:[#allocation17] sm:$0xff]
        %v1574 = vld [vmem:[#allocation17 + $0x8] sm:$0xff]
        %v1575 = vld [vmem:[#allocation17 + $0x10] sm:$0xff]
        %v1576 = vld [vmem:[#allocation17 + $0x18] sm:$0xff]
        %v1577 = vld [vmem:[#allocation17 + $0x20] sm:$0xff]
        %v1578 = vld [vmem:[#allocation17 + $0x28] sm:$0xff]
        %v1579 = vld [vmem:[#allocation17 + $0x30] sm:$0xff]
        %v1580 = vld [vmem:[#allocation17 + $0x38] sm:$0xff]
        %v1581 = vld [vmem:[#allocation17 + $0x40] sm:$0xff]
        %v1582 = vld [vmem:[#allocation17 + $0x48] sm:$0xff]
        %v1583 = vld [vmem:[#allocation17 + $0x50] sm:$0xff]
        %v1584 = vld [vmem:[#allocation17 + $0x58] sm:$0xff]
        %v1585 = vld [vmem:[#allocation17 + $0x60] sm:$0xff]
        %v1586 = vld [vmem:[#allocation17 + $0x68] sm:$0xff]
        %v1587 = vld [vmem:[#allocation17 + $0x70] sm:$0xff]
        %v1588 = vld [vmem:[#allocation17 + $0x78] sm:$0xff]
        %1589 = vmatprep.subr.mxu0 0.0
        %1590 = vmatpush1.msra.mxu0 %v1573
        %1591 = vmatprep.subr.mxu0 0.0
        %1592 = vmatpush1.msra.mxu0 %v1574
        %1593 = vmatprep.subr.mxu0 0.0
        %1594 = vmatpush1.msra.mxu0 %v1575
        %1595 = vmatprep.subr.mxu0 0.0
        %1596 = vmatpush1.msra.mxu0 %v1576
        %1597 = vmatprep.subr.mxu0 0.0
        %1598 = vmatpush1.msra.mxu0 %v1577
        %1599 = vmatprep.subr.mxu0 0.0
        %1600 = vmatpush1.msra.mxu0 %v1578
        %1601 = vmatprep.subr.mxu0 0.0
        %1602 = vmatpush1.msra.mxu0 %v1579
        %1603 = vmatprep.subr.mxu0 0.0
        %1604 = vmatpush1.msra.mxu0 %v1580
        %1605 = vmatprep.subr.mxu0 0.0
        %1606 = vmatpush1.msra.mxu0 %v1581
        %1607 = vmatprep.subr.mxu0 0.0
        %1608 = vmatpush1.msra.mxu0 %v1582
        %1609 = vmatprep.subr.mxu0 0.0
        %1610 = vmatpush1.msra.mxu0 %v1583
        %1611 = vmatprep.subr.mxu0 0.0
        %1612 = vmatpush1.msra.mxu0 %v1584
        %1613 = vmatprep.subr.mxu0 0.0
        %1614 = vmatpush1.msra.mxu0 %v1585
        %1615 = vmatprep.subr.mxu0 0.0
        %1616 = vmatpush1.msra.mxu0 %v1586
        %1617 = vmatprep.subr.mxu0 0.0
        %1618 = vmatpush1.msra.mxu0 %v1587
        %1619 = vmatprep.subr.mxu0 0.0
        %1620 = vmatpush1.msra.mxu0 %v1588
        %1621 = vmatprep.subr.mxu0 0.0
        %1622 = vmatpush1.msra.mxu0 0.0
        %1623 = vmatprep.subr.mxu0 0.0
        %1624 = vmatpush1.msra.mxu0 0.0
        %1625 = vmatprep.subr.mxu0 0.0
        %1626 = vmatpush1.msra.mxu0 0.0
        %1627 = vmatprep.subr.mxu0 0.0
        %1628 = vmatpush1.msra.mxu0 0.0
        %1629 = vmatprep.subr.mxu0 0.0
        %1630 = vmatpush1.msra.mxu0 0.0
        %1631 = vmatprep.subr.mxu0 0.0
        %1632 = vmatpush1.msra.mxu0 0.0
        %1633 = vmatprep.subr.mxu0 0.0
        %1634 = vmatpush1.msra.mxu0 0.0
        %1635 = vmatprep.subr.mxu0 0.0
        %1636 = vmatpush1.msra.mxu0 0.0
        %1637 = vmatprep.subr.mxu0 0.0
        %1638 = vmatpush1.msra.mxu0 0.0
        %1639 = vmatprep.subr.mxu0 0.0
        %1640 = vmatpush1.msra.mxu0 0.0
        %1641 = vmatprep.subr.mxu0 0.0
        %1642 = vmatpush1.msra.mxu0 0.0
        %1643 = vmatprep.subr.mxu0 0.0
        %1644 = vmatpush1.msra.mxu0 0.0
        %1645 = vmatprep.subr.mxu0 0.0
        %1646 = vmatpush1.msra.mxu0 0.0
        %1647 = vmatprep.subr.mxu0 0.0
        %1648 = vmatpush1.msra.mxu0 0.0
        %1649 = vmatprep.subr.mxu0 0.0
        %1650 = vmatpush1.msra.mxu0 0.0
        %1651 = vmatprep.subr.mxu0 0.0
        %1652 = vmatpush1.msra.mxu0 0.0
        %1653 = vmatprep.mubr.f32.mxu0 0.0
        %1654 = vmatmul.mubr.f32.gmra.mrb[0].mxu0 %v1571
        %v1655 = vpop.f32.mrb[0].mxu0
        %v1656 = vadd.f32 0.0, %v1655
        %v1657 = vpop.f32.mrb[0].mxu0
        %1658 = vmatprep.mubr.f32.mxu0 0.0
        %1659 = vmatmul.mubr.f32.gmra.mrb[0].mxu0 %v1572
        %v1660 = vpop.f32.mrb[0].mxu0
        %v1661 = vadd.f32 0.0, %v1660
        %v1662 = vpop.f32.mrb[0].mxu0
        %1663 = vdwg.mxu0
        %v1664 = vadd.f32 %v1563, %v1656
        %v1665 = vadd.f32 %v1568, %v1661
        %v1666 = vld [vmem:[%s9] sm:$0x1]
        %v1668 = vlaneseq
        %v1669 = vshrl.u32 %v1668, 7
        %v1670 = vsub.s32 0, %v1669
        %v1671 = vrot.slane %v1666, %v1670
        %v1673 = vmul.f32 %v1664, %v1671
        %v1674 = vmul.f32 %v1665, %v1671
        %v1675 = vld [vmem:[%s10] sm:$0x1]
        %v1677 = vlaneseq
        %v1678 = vshrl.u32 %v1677, 7
        %v1679 = vsub.s32 0, %v1678
        %v1680 = vrot.slane %v1675, %v1679
        %v1682 = vadd.f32 %v1673, %v1680
        %v1683 = vadd.f32 %v1674, %v1680
        %v1684 = vmax.f32 %v1682, 0.0
        %v1685 = vmax.f32 %v1683, 0.0
        %v1686 = vld [vmem:[#allocation18] sm:$0xff]
        %v1687 = vld [vmem:[#allocation18 + $0x8] sm:$0xff]
        %v1688 = vld [vmem:[#allocation18 + $0x10] sm:$0xff]
        %v1689 = vld [vmem:[#allocation18 + $0x18] sm:$0xff]
        %v1690 = vld [vmem:[#allocation18 + $0x20] sm:$0xff]
        %v1691 = vld [vmem:[#allocation18 + $0x28] sm:$0xff]
        %v1692 = vld [vmem:[#allocation18 + $0x30] sm:$0xff]
        %v1693 = vld [vmem:[#allocation18 + $0x38] sm:$0xff]
        %v1694 = vld [vmem:[#allocation18 + $0x40] sm:$0xff]
        %v1695 = vld [vmem:[#allocation18 + $0x48] sm:$0xff]
        %v1696 = vld [vmem:[#allocation18 + $0x50] sm:$0xff]
        %v1697 = vld [vmem:[#allocation18 + $0x58] sm:$0xff]
        %v1698 = vld [vmem:[#allocation18 + $0x60] sm:$0xff]
        %v1699 = vld [vmem:[#allocation18 + $0x68] sm:$0xff]
        %v1700 = vld [vmem:[#allocation18 + $0x70] sm:$0xff]
        %v1701 = vld [vmem:[#allocation18 + $0x78] sm:$0xff]
        %1702 = vmatprep.subr.mxu0 0.0
        %1703 = vmatpush1.msra.mxu0 %v1686
        %1704 = vmatprep.subr.mxu0 0.0
        %1705 = vmatpush1.msra.mxu0 %v1687
        %1706 = vmatprep.subr.mxu0 0.0
        %1707 = vmatpush1.msra.mxu0 %v1688
        %1708 = vmatprep.subr.mxu0 0.0
        %1709 = vmatpush1.msra.mxu0 %v1689
        %1710 = vmatprep.subr.mxu0 0.0
        %1711 = vmatpush1.msra.mxu0 %v1690
        %1712 = vmatprep.subr.mxu0 0.0
        %1713 = vmatpush1.msra.mxu0 %v1691
        %1714 = vmatprep.subr.mxu0 0.0
        %1715 = vmatpush1.msra.mxu0 %v1692
        %1716 = vmatprep.subr.mxu0 0.0
        %1717 = vmatpush1.msra.mxu0 %v1693
        %1718 = vmatprep.subr.mxu0 0.0
        %1719 = vmatpush1.msra.mxu0 %v1694
        %1720 = vmatprep.subr.mxu0 0.0
        %1721 = vmatpush1.msra.mxu0 %v1695
        %1722 = vmatprep.subr.mxu0 0.0
        %1723 = vmatpush1.msra.mxu0 %v1696
        %1724 = vmatprep.subr.mxu0 0.0
        %1725 = vmatpush1.msra.mxu0 %v1697
        %1726 = vmatprep.subr.mxu0 0.0
        %1727 = vmatpush1.msra.mxu0 %v1698
        %1728 = vmatprep.subr.mxu0 0.0
        %1729 = vmatpush1.msra.mxu0 %v1699
        %1730 = vmatprep.subr.mxu0 0.0
        %1731 = vmatpush1.msra.mxu0 %v1700
        %1732 = vmatprep.subr.mxu0 0.0
        %1733 = vmatpush1.msra.mxu0 %v1701
        %1734 = vmatprep.subr.mxu0 0.0
        %1735 = vmatpush1.msra.mxu0 0.0
        %1736 = vmatprep.subr.mxu0 0.0
        %1737 = vmatpush1.msra.mxu0 0.0
        %1738 = vmatprep.subr.mxu0 0.0
        %1739 = vmatpush1.msra.mxu0 0.0
        %1740 = vmatprep.subr.mxu0 0.0
        %1741 = vmatpush1.msra.mxu0 0.0
        %1742 = vmatprep.subr.mxu0 0.0
        %1743 = vmatpush1.msra.mxu0 0.0
        %1744 = vmatprep.subr.mxu0 0.0
        %1745 = vmatpush1.msra.mxu0 0.0
        %1746 = vmatprep.subr.mxu0 0.0
        %1747 = vmatpush1.msra.mxu0 0.0
        %1748 = vmatprep.subr.mxu0 0.0
        %1749 = vmatpush1.msra.mxu0 0.0
        %1750 = vmatprep.subr.mxu0 0.0
        %1751 = vmatpush1.msra.mxu0 0.0
        %1752 = vmatprep.subr.mxu0 0.0
        %1753 = vmatpush1.msra.mxu0 0.0
        %1754 = vmatprep.subr.mxu0 0.0
        %1755 = vmatpush1.msra.mxu0 0.0
        %1756 = vmatprep.subr.mxu0 0.0
        %1757 = vmatpush1.msra.mxu0 0.0
        %1758 = vmatprep.subr.mxu0 0.0
        %1759 = vmatpush1.msra.mxu0 0.0
        %1760 = vmatprep.subr.mxu0 0.0
        %1761 = vmatpush1.msra.mxu0 0.0
        %1762 = vmatprep.subr.mxu0 0.0
        %1763 = vmatpush1.msra.mxu0 0.0
        %1764 = vmatprep.subr.mxu0 0.0
        %1765 = vmatpush1.msra.mxu0 0.0
        %1766 = vmatprep.mubr.f32.mxu0 0.0
        %1767 = vmatmul.mubr.f32.gmra.mrb[0].mxu0 %v1684
        %v1768 = vpop.f32.mrb[0].mxu0
        %v1769 = vadd.f32 0.0, %v1768
        %v1770 = vpop.f32.mrb[0].mxu0
        %1771 = vmatprep.mubr.f32.mxu0 0.0
        %1772 = vmatmul.mubr.f32.gmra.mrb[0].mxu0 %v1685
        %v1773 = vpop.f32.mrb[0].mxu0
        %v1774 = vadd.f32 0.0, %v1773
        %v1775 = vpop.f32.mrb[0].mxu0
        %1776 = vdwg.mxu0
        %v1777 = vld [vmem:[%s12] sm:$0x1]
        %v1779 = vlaneseq
        %v1780 = vshrl.u32 %v1779, 7
        %v1781 = vsub.s32 0, %v1780
        %v1782 = vrot.slane %v1777, %v1781
        %v1784 = vmul.f32 %v1769, %v1782
        %v1785 = vmul.f32 %v1774, %v1782
        %v1786 = vld [vmem:[%s13] sm:$0x1]
        %v1788 = vlaneseq
        %v1789 = vshrl.u32 %v1788, 7
        %v1790 = vsub.s32 0, %v1789
        %v1791 = vrot.slane %v1786, %v1790
        %v1793 = vadd.f32 %v1784, %v1791
        %v1794 = vadd.f32 %v1785, %v1791
        %v1795 = vmax.f32 %v1793, 0.0
        %v1796 = vmax.f32 %v1794, 0.0
        %1797 = vst [vmem:[%s1070] sm:$0xff] %v1795
        %1798 = vst [vmem:[%s1070 + $0x8] sm:$0xff] %v1796
        %1799 = vst [vmem:[#allocation4] sm:$0x1] 0.0
        %1800 = vst [vmem:[#allocation4 + $0x11] sm:$0x1] 0.0
        %1801 = vst [vmem:[#allocation4 + $0x1] sm:$0xff] %v1684
        %1802 = vst [vmem:[#allocation4 + $0x9] sm:$0xff] %v1685
        %v1803 = vld [vmem:[#allocation4] ss:$2 sm:$0xff]
        %v1804 = vld [vmem:[#allocation20] sm:$0xff]
        %v1805 = vld [vmem:[#allocation20 + $0x8] sm:$0xff]
        %v1806 = vld [vmem:[#allocation20 + $0x10] sm:$0xff]
        %v1807 = vld [vmem:[#allocation20 + $0x18] sm:$0xff]
        %v1808 = vld [vmem:[#allocation20 + $0x20] sm:$0xff]
        %v1809 = vld [vmem:[#allocation20 + $0x28] sm:$0xff]
        %v1810 = vld [vmem:[#allocation20 + $0x30] sm:$0xff]
        %v1811 = vld [vmem:[#allocation20 + $0x38] sm:$0xff]
        %v1812 = vld [vmem:[#allocation20 + $0x40] sm:$0xff]
        %v1813 = vld [vmem:[#allocation20 + $0x48] sm:$0xff]
        %v1814 = vld [vmem:[#allocation20 + $0x50] sm:$0xff]
        %v1815 = vld [vmem:[#allocation20 + $0x58] sm:$0xff]
        %v1816 = vld [vmem:[#allocation20 + $0x60] sm:$0xff]
        %v1817 = vld [vmem:[#allocation20 + $0x68] sm:$0xff]
        %v1818 = vld [vmem:[#allocation20 + $0x70] sm:$0xff]
        %v1819 = vld [vmem:[#allocation20 + $0x78] sm:$0xff]
        %s1820 = scalar_lea.vmem [#allocation4], 1
        %v1821 = vld [vmem:[%s1820] ss:$2 sm:$0xff]
        %v1822 = vld [vmem:[#allocation21] sm:$0xff]
        %v1823 = vld [vmem:[#allocation21 + $0x8] sm:$0xff]
        %v1824 = vld [vmem:[#allocation21 + $0x10] sm:$0xff]
        %v1825 = vld [vmem:[#allocation21 + $0x18] sm:$0xff]
        %v1826 = vld [vmem:[#allocation21 + $0x20] sm:$0xff]
        %v1827 = vld [vmem:[#allocation21 + $0x28] sm:$0xff]
        %v1828 = vld [vmem:[#allocation21 + $0x30] sm:$0xff]
        %v1829 = vld [vmem:[#allocation21 + $0x38] sm:$0xff]
        %v1830 = vld [vmem:[#allocation21 + $0x40] sm:$0xff]
        %v1831 = vld [vmem:[#allocation21 + $0x48] sm:$0xff]
        %v1832 = vld [vmem:[#allocation21 + $0x50] sm:$0xff]
        %v1833 = vld [vmem:[#allocation21 + $0x58] sm:$0xff]
        %v1834 = vld [vmem:[#allocation21 + $0x60] sm:$0xff]
        %v1835 = vld [vmem:[#allocation21 + $0x68] sm:$0xff]
        %v1836 = vld [vmem:[#allocation21 + $0x70] sm:$0xff]
        %v1837 = vld [vmem:[#allocation21 + $0x78] sm:$0xff]
        %1838 = vmatprep.subr.mxu0 0.0
        %1839 = vmatpush1.msra.mxu0 %v1822
        %1840 = vmatprep.subr.mxu0 0.0
        %1841 = vmatpush1.msra.mxu0 %v1823
        %1842 = vmatprep.subr.mxu0 0.0
        %1843 = vmatpush1.msra.mxu0 %v1824
        %1844 = vmatprep.subr.mxu0 0.0
        %1845 = vmatpush1.msra.mxu0 %v1825
        %1846 = vmatprep.subr.mxu0 0.0
        %1847 = vmatpush1.msra.mxu0 %v1826
        %1848 = vmatprep.subr.mxu0 0.0
        %1849 = vmatpush1.msra.mxu0 %v1827
        %1850 = vmatprep.subr.mxu0 0.0
        %1851 = vmatpush1.msra.mxu0 %v1828
        %1852 = vmatprep.subr.mxu0 0.0
        %1853 = vmatpush1.msra.mxu0 %v1829
        %1854 = vmatprep.subr.mxu0 0.0
        %1855 = vmatpush1.msra.mxu0 %v1830
        %1856 = vmatprep.subr.mxu0 0.0
        %1857 = vmatpush1.msra.mxu0 %v1831
        %1858 = vmatprep.subr.mxu0 0.0
        %1859 = vmatpush1.msra.mxu0 %v1832
        %1860 = vmatprep.subr.mxu0 0.0
        %1861 = vmatpush1.msra.mxu0 %v1833
        %1862 = vmatprep.subr.mxu0 0.0
        %1863 = vmatpush1.msra.mxu0 %v1834
        %1864 = vmatprep.subr.mxu0 0.0
        %1865 = vmatpush1.msra.mxu0 %v1835
        %1866 = vmatprep.subr.mxu0 0.0
        %1867 = vmatpush1.msra.mxu0 %v1836
        %1868 = vmatprep.subr.mxu0 0.0
        %1869 = vmatpush1.msra.mxu0 %v1837
        %1870 = vmatprep.subr.mxu0 0.0
        %1871 = vmatpush1.msra.mxu0 0.0
        %1872 = vmatprep.subr.mxu0 0.0
        %1873 = vmatpush1.msra.mxu0 0.0
        %1874 = vmatprep.subr.mxu0 0.0
        %1875 = vmatpush1.msra.mxu0 0.0
        %1876 = vmatprep.subr.mxu0 0.0
        %1877 = vmatpush1.msra.mxu0 0.0
        %1878 = vmatprep.subr.mxu0 0.0
        %1879 = vmatpush1.msra.mxu0 0.0
        %1880 = vmatprep.subr.mxu0 0.0
        %1881 = vmatpush1.msra.mxu0 0.0
        %1882 = vmatprep.subr.mxu0 0.0
        %1883 = vmatpush1.msra.mxu0 0.0
        %1884 = vmatprep.subr.mxu0 0.0
        %1885 = vmatpush1.msra.mxu0 0.0
        %1886 = vmatprep.subr.mxu0 0.0
        %1887 = vmatpush1.msra.mxu0 0.0
        %1888 = vmatprep.subr.mxu0 0.0
        %1889 = vmatpush1.msra.mxu0 0.0
        %1890 = vmatprep.subr.mxu0 0.0
        %1891 = vmatpush1.msra.mxu0 0.0
        %1892 = vmatprep.subr.mxu0 0.0
        %1893 = vmatpush1.msra.mxu0 0.0
        %1894 = vmatprep.subr.mxu0 0.0
        %1895 = vmatpush1.msra.mxu0 0.0
        %1896 = vmatprep.subr.mxu0 0.0
        %1897 = vmatpush1.msra.mxu0 0.0
        %1898 = vmatprep.subr.mxu0 0.0
        %1899 = vmatpush1.msra.mxu0 0.0
        %1900 = vmatprep.subr.mxu0 0.0
        %1901 = vmatpush1.msra.mxu0 0.0
        %1902 = vmatprep.mubr.f32.mxu0 0.0
        %1903 = vmatmul.mubr.f32.gmra.mrb[0].mxu0 %v1821
        %v1904 = vpop.f32.mrb[0].mxu0
        %v1905 = vadd.f32 0.0, %v1904
        %v1906 = vpop.f32.mrb[0].mxu0
        %1907 = vdwg.mxu0
        %1908 = vmatprep.subr.mxu0 0.0
        %1909 = vmatpush1.msra.mxu0 %v1804
        %1910 = vmatprep.subr.mxu0 0.0
        %1911 = vmatpush1.msra.mxu0 %v1805
        %1912 = vmatprep.subr.mxu0 0.0
        %1913 = vmatpush1.msra.mxu0 %v1806
        %1914 = vmatprep.subr.mxu0 0.0
        %1915 = vmatpush1.msra.mxu0 %v1807
        %1916 = vmatprep.subr.mxu0 0.0
        %1917 = vmatpush1.msra.mxu0 %v1808
        %1918 = vmatprep.subr.mxu0 0.0
        %1919 = vmatpush1.msra.mxu0 %v1809
        %1920 = vmatprep.subr.mxu0 0.0
        %1921 = vmatpush1.msra.mxu0 %v1810
        %1922 = vmatprep.subr.mxu0 0.0
        %1923 = vmatpush1.msra.mxu0 %v1811
        %1924 = vmatprep.subr.mxu0 0.0
        %1925 = vmatpush1.msra.mxu0 %v1812
        %1926 = vmatprep.subr.mxu0 0.0
        %1927 = vmatpush1.msra.mxu0 %v1813
        %1928 = vmatprep.subr.mxu0 0.0
        %1929 = vmatpush1.msra.mxu0 %v1814
        %1930 = vmatprep.subr.mxu0 0.0
        %1931 = vmatpush1.msra.mxu0 %v1815
        %1932 = vmatprep.subr.mxu0 0.0
        %1933 = vmatpush1.msra.mxu0 %v1816
        %1934 = vmatprep.subr.mxu0 0.0
        %1935 = vmatpush1.msra.mxu0 %v1817
        %1936 = vmatprep.subr.mxu0 0.0
        %1937 = vmatpush1.msra.mxu0 %v1818
        %1938 = vmatprep.subr.mxu0 0.0
        %1939 = vmatpush1.msra.mxu0 %v1819
        %1940 = vmatprep.subr.mxu0 0.0
        %1941 = vmatpush1.msra.mxu0 0.0
        %1942 = vmatprep.subr.mxu0 0.0
        %1943 = vmatpush1.msra.mxu0 0.0
        %1944 = vmatprep.subr.mxu0 0.0
        %1945 = vmatpush1.msra.mxu0 0.0
        %1946 = vmatprep.subr.mxu0 0.0
        %1947 = vmatpush1.msra.mxu0 0.0
        %1948 = vmatprep.subr.mxu0 0.0
        %1949 = vmatpush1.msra.mxu0 0.0
        %1950 = vmatprep.subr.mxu0 0.0
        %1951 = vmatpush1.msra.mxu0 0.0
        %1952 = vmatprep.subr.mxu0 0.0
        %1953 = vmatpush1.msra.mxu0 0.0
        %1954 = vmatprep.subr.mxu0 0.0
        %1955 = vmatpush1.msra.mxu0 0.0
        %1956 = vmatprep.subr.mxu0 0.0
        %1957 = vmatpush1.msra.mxu0 0.0
        %1958 = vmatprep.subr.mxu0 0.0
        %1959 = vmatpush1.msra.mxu0 0.0
        %1960 = vmatprep.subr.mxu0 0.0
        %1961 = vmatpush1.msra.mxu0 0.0
        %1962 = vmatprep.subr.mxu0 0.0
        %1963 = vmatpush1.msra.mxu0 0.0
        %1964 = vmatprep.subr.mxu0 0.0
        %1965 = vmatpush1.msra.mxu0 0.0
        %1966 = vmatprep.subr.mxu0 0.0
        %1967 = vmatpush1.msra.mxu0 0.0
        %1968 = vmatprep.subr.mxu0 0.0
        %1969 = vmatpush1.msra.mxu0 0.0
        %1970 = vmatprep.subr.mxu0 0.0
        %1971 = vmatpush1.msra.mxu0 0.0
        %1972 = vmatprep.mubr.f32.mxu0 0.0
        %1973 = vmatmul.mubr.f32.gmra.mrb[0].mxu0 %v1803
        %v1974 = vpop.f32.mrb[0].mxu0
        %v1975 = vadd.f32 %v1905, %v1974
        %v1976 = vpop.f32.mrb[0].mxu0
        %1977 = vdwg.mxu0
        %s1978 = scalar_lea.vmem [#allocation4], 2
        %v1979 = vld [vmem:[%s1978] ss:$2 sm:$0xff]
        %v1980 = vld [vmem:[#allocation23] sm:$0xff]
        %v1981 = vld [vmem:[#allocation23 + $0x8] sm:$0xff]
        %v1982 = vld [vmem:[#allocation23 + $0x10] sm:$0xff]
        %v1983 = vld [vmem:[#allocation23 + $0x18] sm:$0xff]
        %v1984 = vld [vmem:[#allocation23 + $0x20] sm:$0xff]
        %v1985 = vld [vmem:[#allocation23 + $0x28] sm:$0xff]
        %v1986 = vld [vmem:[#allocation23 + $0x30] sm:$0xff]
        %v1987 = vld [vmem:[#allocation23 + $0x38] sm:$0xff]
        %v1988 = vld [vmem:[#allocation23 + $0x40] sm:$0xff]
        %v1989 = vld [vmem:[#allocation23 + $0x48] sm:$0xff]
        %v1990 = vld [vmem:[#allocation23 + $0x50] sm:$0xff]
        %v1991 = vld [vmem:[#allocation23 + $0x58] sm:$0xff]
        %v1992 = vld [vmem:[#allocation23 + $0x60] sm:$0xff]
        %v1993 = vld [vmem:[#allocation23 + $0x68] sm:$0xff]
        %v1994 = vld [vmem:[#allocation23 + $0x70] sm:$0xff]
        %v1995 = vld [vmem:[#allocation23 + $0x78] sm:$0xff]
        %1996 = vmatprep.subr.mxu0 0.0
        %1997 = vmatpush1.msra.mxu0 %v1980
        %1998 = vmatprep.subr.mxu0 0.0
        %1999 = vmatpush1.msra.mxu0 %v1981
        %2000 = vmatprep.subr.mxu0 0.0
        %2001 = vmatpush1.msra.mxu0 %v1982
        %2002 = vmatprep.subr.mxu0 0.0
        %2003 = vmatpush1.msra.mxu0 %v1983
        %2004 = vmatprep.subr.mxu0 0.0
        %2005 = vmatpush1.msra.mxu0 %v1984
        %2006 = vmatprep.subr.mxu0 0.0
        %2007 = vmatpush1.msra.mxu0 %v1985
        %2008 = vmatprep.subr.mxu0 0.0
        %2009 = vmatpush1.msra.mxu0 %v1986
        %2010 = vmatprep.subr.mxu0 0.0
        %2011 = vmatpush1.msra.mxu0 %v1987
        %2012 = vmatprep.subr.mxu0 0.0
        %2013 = vmatpush1.msra.mxu0 %v1988
        %2014 = vmatprep.subr.mxu0 0.0
        %2015 = vmatpush1.msra.mxu0 %v1989
        %2016 = vmatprep.subr.mxu0 0.0
        %2017 = vmatpush1.msra.mxu0 %v1990
        %2018 = vmatprep.subr.mxu0 0.0
        %2019 = vmatpush1.msra.mxu0 %v1991
        %2020 = vmatprep.subr.mxu0 0.0
        %2021 = vmatpush1.msra.mxu0 %v1992
        %2022 = vmatprep.subr.mxu0 0.0
        %2023 = vmatpush1.msra.mxu0 %v1993
        %2024 = vmatprep.subr.mxu0 0.0
        %2025 = vmatpush1.msra.mxu0 %v1994
        %2026 = vmatprep.subr.mxu0 0.0
        %2027 = vmatpush1.msra.mxu0 %v1995
        %2028 = vmatprep.subr.mxu0 0.0
        %2029 = vmatpush1.msra.mxu0 0.0
        %2030 = vmatprep.subr.mxu0 0.0
        %2031 = vmatpush1.msra.mxu0 0.0
        %2032 = vmatprep.subr.mxu0 0.0
        %2033 = vmatpush1.msra.mxu0 0.0
        %2034 = vmatprep.subr.mxu0 0.0
        %2035 = vmatpush1.msra.mxu0 0.0
        %2036 = vmatprep.subr.mxu0 0.0
        %2037 = vmatpush1.msra.mxu0 0.0
        %2038 = vmatprep.subr.mxu0 0.0
        %2039 = vmatpush1.msra.mxu0 0.0
        %2040 = vmatprep.subr.mxu0 0.0
        %2041 = vmatpush1.msra.mxu0 0.0
        %2042 = vmatprep.subr.mxu0 0.0
        %2043 = vmatpush1.msra.mxu0 0.0
        %2044 = vmatprep.subr.mxu0 0.0
        %2045 = vmatpush1.msra.mxu0 0.0
        %2046 = vmatprep.subr.mxu0 0.0
        %2047 = vmatpush1.msra.mxu0 0.0
        %2048 = vmatprep.subr.mxu0 0.0
        %2049 = vmatpush1.msra.mxu0 0.0
        %2050 = vmatprep.subr.mxu0 0.0
        %2051 = vmatpush1.msra.mxu0 0.0
        %2052 = vmatprep.subr.mxu0 0.0
        %2053 = vmatpush1.msra.mxu0 0.0
        %2054 = vmatprep.subr.mxu0 0.0
        %2055 = vmatpush1.msra.mxu0 0.0
        %2056 = vmatprep.subr.mxu0 0.0
        %2057 = vmatpush1.msra.mxu0 0.0
        %2058 = vmatprep.subr.mxu0 0.0
        %2059 = vmatpush1.msra.mxu0 0.0
        %2060 = vmatprep.mubr.f32.mxu0 0.0
        %2061 = vmatmul.mubr.f32.gmra.mrb[0].mxu0 %v1979
        %v2062 = vpop.f32.mrb[0].mxu0
        %v2063 = vadd.f32 0.0, %v2062
        %v2064 = vpop.f32.mrb[0].mxu0
        %2065 = vdwg.mxu0
        %v2066 = vadd.f32 %v1975, %v2063
        %v2067 = vld [vmem:[%s17] sm:$0x1]
        %v2069 = vlaneseq
        %v2070 = vshrl.u32 %v2069, 7
        %v2071 = vsub.s32 0, %v2070
        %v2072 = vrot.slane %v2067, %v2071
        %v2074 = vmul.f32 %v2066, %v2072
        %v2075 = vld [vmem:[%s18] sm:$0x1]
        %v2077 = vlaneseq
        %v2078 = vshrl.u32 %v2077, 7
        %v2079 = vsub.s32 0, %v2078
        %v2080 = vrot.slane %v2075, %v2079
        %v2082 = vadd.f32 %v2074, %v2080
        %v2083 = vmax.f32 %v2082, 0.0
        %2084 = vst [vmem:[#allocation5] sm:$0x1] 0.0
        %2085 = vst [vmem:[#allocation5 + $0x9] sm:$0x1] 0.0
        %2086 = vst [vmem:[#allocation5 + $0x1] sm:$0xff] %v2083
        %v2087 = vld [vmem:[#allocation5] sm:$0xff]
        %v2088 = vld [vmem:[#allocation24] sm:$0xff]
        %v2089 = vld [vmem:[#allocation24 + $0x8] sm:$0xff]
        %v2090 = vld [vmem:[#allocation24 + $0x10] sm:$0xff]
        %v2091 = vld [vmem:[#allocation24 + $0x18] sm:$0xff]
        %v2092 = vld [vmem:[#allocation24 + $0x20] sm:$0xff]
        %v2093 = vld [vmem:[#allocation24 + $0x28] sm:$0xff]
        %v2094 = vld [vmem:[#allocation24 + $0x30] sm:$0xff]
        %v2095 = vld [vmem:[#allocation24 + $0x38] sm:$0xff]
        %v2096 = vld [vmem:[#allocation24 + $0x40] sm:$0xff]
        %v2097 = vld [vmem:[#allocation24 + $0x48] sm:$0xff]
        %v2098 = vld [vmem:[#allocation24 + $0x50] sm:$0xff]
        %v2099 = vld [vmem:[#allocation24 + $0x58] sm:$0xff]
        %v2100 = vld [vmem:[#allocation24 + $0x60] sm:$0xff]
        %v2101 = vld [vmem:[#allocation24 + $0x68] sm:$0xff]
        %v2102 = vld [vmem:[#allocation24 + $0x70] sm:$0xff]
        %v2103 = vld [vmem:[#allocation24 + $0x78] sm:$0xff]
        %v2104 = vld [vmem:[#allocation5 + $0x1] sm:$0xff]
        %v2105 = vld [vmem:[#allocation26] sm:$0xff]
        %v2106 = vld [vmem:[#allocation26 + $0x8] sm:$0xff]
        %v2107 = vld [vmem:[#allocation26 + $0x10] sm:$0xff]
        %v2108 = vld [vmem:[#allocation26 + $0x18] sm:$0xff]
        %v2109 = vld [vmem:[#allocation26 + $0x20] sm:$0xff]
        %v2110 = vld [vmem:[#allocation26 + $0x28] sm:$0xff]
        %v2111 = vld [vmem:[#allocation26 + $0x30] sm:$0xff]
        %v2112 = vld [vmem:[#allocation26 + $0x38] sm:$0xff]
        %v2113 = vld [vmem:[#allocation26 + $0x40] sm:$0xff]
        %v2114 = vld [vmem:[#allocation26 + $0x48] sm:$0xff]
        %v2115 = vld [vmem:[#allocation26 + $0x50] sm:$0xff]
        %v2116 = vld [vmem:[#allocation26 + $0x58] sm:$0xff]
        %v2117 = vld [vmem:[#allocation26 + $0x60] sm:$0xff]
        %v2118 = vld [vmem:[#allocation26 + $0x68] sm:$0xff]
        %v2119 = vld [vmem:[#allocation26 + $0x70] sm:$0xff]
        %v2120 = vld [vmem:[#allocation26 + $0x78] sm:$0xff]
        %2121 = vmatprep.subr.mxu0 0.0
        %2122 = vmatpush1.msra.mxu0 %v2105
        %2123 = vmatprep.subr.mxu0 0.0
        %2124 = vmatpush1.msra.mxu0 %v2106
        %2125 = vmatprep.subr.mxu0 0.0
        %2126 = vmatpush1.msra.mxu0 %v2107
        %2127 = vmatprep.subr.mxu0 0.0
        %2128 = vmatpush1.msra.mxu0 %v2108
        %2129 = vmatprep.subr.mxu0 0.0
        %2130 = vmatpush1.msra.mxu0 %v2109
        %2131 = vmatprep.subr.mxu0 0.0
        %2132 = vmatpush1.msra.mxu0 %v2110
        %2133 = vmatprep.subr.mxu0 0.0
        %2134 = vmatpush1.msra.mxu0 %v2111
        %2135 = vmatprep.subr.mxu0 0.0
        %2136 = vmatpush1.msra.mxu0 %v2112
        %2137 = vmatprep.subr.mxu0 0.0
        %2138 = vmatpush1.msra.mxu0 %v2113
        %2139 = vmatprep.subr.mxu0 0.0
        %2140 = vmatpush1.msra.mxu0 %v2114
        %2141 = vmatprep.subr.mxu0 0.0
        %2142 = vmatpush1.msra.mxu0 %v2115
        %2143 = vmatprep.subr.mxu0 0.0
        %2144 = vmatpush1.msra.mxu0 %v2116
        %2145 = vmatprep.subr.mxu0 0.0
        %2146 = vmatpush1.msra.mxu0 %v2117
        %2147 = vmatprep.subr.mxu0 0.0
        %2148 = vmatpush1.msra.mxu0 %v2118
        %2149 = vmatprep.subr.mxu0 0.0
        %2150 = vmatpush1.msra.mxu0 %v2119
        %2151 = vmatprep.subr.mxu0 0.0
        %2152 = vmatpush1.msra.mxu0 %v2120
        %2153 = vmatprep.subr.mxu0 0.0
        %2154 = vmatpush1.msra.mxu0 0.0
        %2155 = vmatprep.subr.mxu0 0.0
        %2156 = vmatpush1.msra.mxu0 0.0
        %2157 = vmatprep.subr.mxu0 0.0
        %2158 = vmatpush1.msra.mxu0 0.0
        %2159 = vmatprep.subr.mxu0 0.0
        %2160 = vmatpush1.msra.mxu0 0.0
        %2161 = vmatprep.subr.mxu0 0.0
        %2162 = vmatpush1.msra.mxu0 0.0
        %2163 = vmatprep.subr.mxu0 0.0
        %2164 = vmatpush1.msra.mxu0 0.0
        %2165 = vmatprep.subr.mxu0 0.0
        %2166 = vmatpush1.msra.mxu0 0.0
        %2167 = vmatprep.subr.mxu0 0.0
        %2168 = vmatpush1.msra.mxu0 0.0
        %2169 = vmatprep.subr.mxu0 0.0
        %2170 = vmatpush1.msra.mxu0 0.0
        %2171 = vmatprep.subr.mxu0 0.0
        %2172 = vmatpush1.msra.mxu0 0.0
        %2173 = vmatprep.subr.mxu0 0.0
        %2174 = vmatpush1.msra.mxu0 0.0
        %2175 = vmatprep.subr.mxu0 0.0
        %2176 = vmatpush1.msra.mxu0 0.0
        %2177 = vmatprep.subr.mxu0 0.0
        %2178 = vmatpush1.msra.mxu0 0.0
        %2179 = vmatprep.subr.mxu0 0.0
        %2180 = vmatpush1.msra.mxu0 0.0
        %2181 = vmatprep.subr.mxu0 0.0
        %2182 = vmatpush1.msra.mxu0 0.0
        %2183 = vmatprep.subr.mxu0 0.0
        %2184 = vmatpush1.msra.mxu0 0.0
        %2185 = vmatprep.mubr.f32.mxu0 0.0
        %2186 = vmatmul.mubr.f32.gmra.mrb[0].mxu0 %v2104
        %v2187 = vpop.f32.mrb[0].mxu0
        %v2188 = vadd.f32 0.0, %v2187
        %v2189 = vpop.f32.mrb[0].mxu0
        %2190 = vdwg.mxu0
        %2191 = vmatprep.subr.mxu0 0.0
        %2192 = vmatpush1.msra.mxu0 %v2088
        %2193 = vmatprep.subr.mxu0 0.0
        %2194 = vmatpush1.msra.mxu0 %v2089
        %2195 = vmatprep.subr.mxu0 0.0
        %2196 = vmatpush1.msra.mxu0 %v2090
        %2197 = vmatprep.subr.mxu0 0.0
        %2198 = vmatpush1.msra.mxu0 %v2091
        %2199 = vmatprep.subr.mxu0 0.0
        %2200 = vmatpush1.msra.mxu0 %v2092
        %2201 = vmatprep.subr.mxu0 0.0
        %2202 = vmatpush1.msra.mxu0 %v2093
        %2203 = vmatprep.subr.mxu0 0.0
        %2204 = vmatpush1.msra.mxu0 %v2094
        %2205 = vmatprep.subr.mxu0 0.0
        %2206 = vmatpush1.msra.mxu0 %v2095
        %2207 = vmatprep.subr.mxu0 0.0
        %2208 = vmatpush1.msra.mxu0 %v2096
        %2209 = vmatprep.subr.mxu0 0.0
        %2210 = vmatpush1.msra.mxu0 %v2097
        %2211 = vmatprep.subr.mxu0 0.0
        %2212 = vmatpush1.msra.mxu0 %v2098
        %2213 = vmatprep.subr.mxu0 0.0
        %2214 = vmatpush1.msra.mxu0 %v2099
        %2215 = vmatprep.subr.mxu0 0.0
        %2216 = vmatpush1.msra.mxu0 %v2100
        %2217 = vmatprep.subr.mxu0 0.0
        %2218 = vmatpush1.msra.mxu0 %v2101
        %2219 = vmatprep.subr.mxu0 0.0
        %2220 = vmatpush1.msra.mxu0 %v2102
        %2221 = vmatprep.subr.mxu0 0.0
        %2222 = vmatpush1.msra.mxu0 %v2103
        %2223 = vmatprep.subr.mxu0 0.0
        %2224 = vmatpush1.msra.mxu0 0.0
        %2225 = vmatprep.subr.mxu0 0.0
        %2226 = vmatpush1.msra.mxu0 0.0
        %2227 = vmatprep.subr.mxu0 0.0
        %2228 = vmatpush1.msra.mxu0 0.0
        %2229 = vmatprep.subr.mxu0 0.0
        %2230 = vmatpush1.msra.mxu0 0.0
        %2231 = vmatprep.subr.mxu0 0.0
        %2232 = vmatpush1.msra.mxu0 0.0
        %2233 = vmatprep.subr.mxu0 0.0
        %2234 = vmatpush1.msra.mxu0 0.0
        %2235 = vmatprep.subr.mxu0 0.0
        %2236 = vmatpush1.msra.mxu0 0.0
        %2237 = vmatprep.subr.mxu0 0.0
        %2238 = vmatpush1.msra.mxu0 0.0
        %2239 = vmatprep.subr.mxu0 0.0
        %2240 = vmatpush1.msra.mxu0 0.0
        %2241 = vmatprep.subr.mxu0 0.0
        %2242 = vmatpush1.msra.mxu0 0.0
        %2243 = vmatprep.subr.mxu0 0.0
        %2244 = vmatpush1.msra.mxu0 0.0
        %2245 = vmatprep.subr.mxu0 0.0
        %2246 = vmatpush1.msra.mxu0 0.0
        %2247 = vmatprep.subr.mxu0 0.0
        %2248 = vmatpush1.msra.mxu0 0.0
        %2249 = vmatprep.subr.mxu0 0.0
        %2250 = vmatpush1.msra.mxu0 0.0
        %2251 = vmatprep.subr.mxu0 0.0
        %2252 = vmatpush1.msra.mxu0 0.0
        %2253 = vmatprep.subr.mxu0 0.0
        %2254 = vmatpush1.msra.mxu0 0.0
        %2255 = vmatprep.mubr.f32.mxu0 0.0
        %2256 = vmatmul.mubr.f32.gmra.mrb[0].mxu0 %v2087
        %v2257 = vpop.f32.mrb[0].mxu0
        %v2258 = vadd.f32 %v2188, %v2257
        %v2259 = vpop.f32.mrb[0].mxu0
        %2260 = vdwg.mxu0
        %v2261 = vld [vmem:[#allocation5 + $0x2] sm:$0xff]
        %v2262 = vld [vmem:[#allocation27] sm:$0xff]
        %v2263 = vld [vmem:[#allocation27 + $0x8] sm:$0xff]
        %v2264 = vld [vmem:[#allocation27 + $0x10] sm:$0xff]
        %v2265 = vld [vmem:[#allocation27 + $0x18] sm:$0xff]
        %v2266 = vld [vmem:[#allocation27 + $0x20] sm:$0xff]
        %v2267 = vld [vmem:[#allocation27 + $0x28] sm:$0xff]
        %v2268 = vld [vmem:[#allocation27 + $0x30] sm:$0xff]
        %v2269 = vld [vmem:[#allocation27 + $0x38] sm:$0xff]
        %v2270 = vld [vmem:[#allocation27 + $0x40] sm:$0xff]
        %v2271 = vld [vmem:[#allocation27 + $0x48] sm:$0xff]
        %v2272 = vld [vmem:[#allocation27 + $0x50] sm:$0xff]
        %v2273 = vld [vmem:[#allocation27 + $0x58] sm:$0xff]
        %v2274 = vld [vmem:[#allocation27 + $0x60] sm:$0xff]
        %v2275 = vld [vmem:[#allocation27 + $0x68] sm:$0xff]
        %v2276 = vld [vmem:[#allocation27 + $0x70] sm:$0xff]
        %v2277 = vld [vmem:[#allocation27 + $0x78] sm:$0xff]
        %2278 = vmatprep.subr.mxu0 0.0
        %2279 = vmatpush1.msra.mxu0 %v2262
        %2280 = vmatprep.subr.mxu0 0.0
        %2281 = vmatpush1.msra.mxu0 %v2263
        %2282 = vmatprep.subr.mxu0 0.0
        %2283 = vmatpush1.msra.mxu0 %v2264
        %2284 = vmatprep.subr.mxu0 0.0
        %2285 = vmatpush1.msra.mxu0 %v2265
        %2286 = vmatprep.subr.mxu0 0.0
        %2287 = vmatpush1.msra.mxu0 %v2266
        %2288 = vmatprep.subr.mxu0 0.0
        %2289 = vmatpush1.msra.mxu0 %v2267
        %2290 = vmatprep.subr.mxu0 0.0
        %2291 = vmatpush1.msra.mxu0 %v2268
        %2292 = vmatprep.subr.mxu0 0.0
        %2293 = vmatpush1.msra.mxu0 %v2269
        %2294 = vmatprep.subr.mxu0 0.0
        %2295 = vmatpush1.msra.mxu0 %v2270
        %2296 = vmatprep.subr.mxu0 0.0
        %2297 = vmatpush1.msra.mxu0 %v2271
        %2298 = vmatprep.subr.mxu0 0.0
        %2299 = vmatpush1.msra.mxu0 %v2272
        %2300 = vmatprep.subr.mxu0 0.0
        %2301 = vmatpush1.msra.mxu0 %v2273
        %2302 = vmatprep.subr.mxu0 0.0
        %2303 = vmatpush1.msra.mxu0 %v2274
        %2304 = vmatprep.subr.mxu0 0.0
        %2305 = vmatpush1.msra.mxu0 %v2275
        %2306 = vmatprep.subr.mxu0 0.0
        %2307 = vmatpush1.msra.mxu0 %v2276
        %2308 = vmatprep.subr.mxu0 0.0
        %2309 = vmatpush1.msra.mxu0 %v2277
        %2310 = vmatprep.subr.mxu0 0.0
        %2311 = vmatpush1.msra.mxu0 0.0
        %2312 = vmatprep.subr.mxu0 0.0
        %2313 = vmatpush1.msra.mxu0 0.0
        %2314 = vmatprep.subr.mxu0 0.0
        %2315 = vmatpush1.msra.mxu0 0.0
        %2316 = vmatprep.subr.mxu0 0.0
        %2317 = vmatpush1.msra.mxu0 0.0
        %2318 = vmatprep.subr.mxu0 0.0
        %2319 = vmatpush1.msra.mxu0 0.0
        %2320 = vmatprep.subr.mxu0 0.0
        %2321 = vmatpush1.msra.mxu0 0.0
        %2322 = vmatprep.subr.mxu0 0.0
        %2323 = vmatpush1.msra.mxu0 0.0
        %2324 = vmatprep.subr.mxu0 0.0
        %2325 = vmatpush1.msra.mxu0 0.0
        %2326 = vmatprep.subr.mxu0 0.0
        %2327 = vmatpush1.msra.mxu0 0.0
        %2328 = vmatprep.subr.mxu0 0.0
        %2329 = vmatpush1.msra.mxu0 0.0
        %2330 = vmatprep.subr.mxu0 0.0
        %2331 = vmatpush1.msra.mxu0 0.0
        %2332 = vmatprep.subr.mxu0 0.0
        %2333 = vmatpush1.msra.mxu0 0.0
        %2334 = vmatprep.subr.mxu0 0.0
        %2335 = vmatpush1.msra.mxu0 0.0
        %2336 = vmatprep.subr.mxu0 0.0
        %2337 = vmatpush1.msra.mxu0 0.0
        %2338 = vmatprep.subr.mxu0 0.0
        %2339 = vmatpush1.msra.mxu0 0.0
        %2340 = vmatprep.subr.mxu0 0.0
        %2341 = vmatpush1.msra.mxu0 0.0
        %2342 = vmatprep.mubr.f32.mxu0 0.0
        %2343 = vmatmul.mubr.f32.gmra.mrb[0].mxu0 %v2261
        %v2344 = vpop.f32.mrb[0].mxu0
        %v2345 = vadd.f32 0.0, %v2344
        %v2346 = vpop.f32.mrb[0].mxu0
        %2347 = vdwg.mxu0
        %v2348 = vadd.f32 %v2258, %v2345
        %v2349 = vld [vmem:[%s22] sm:$0x1]
        %v2351 = vlaneseq
        %v2352 = vshrl.u32 %v2351, 7
        %v2353 = vsub.s32 0, %v2352
        %v2354 = vrot.slane %v2349, %v2353
        %v2356 = vmul.f32 %v2348, %v2354
        %v2357 = vld [vmem:[%s23] sm:$0x1]
        %v2359 = vlaneseq
        %v2360 = vshrl.u32 %v2359, 7
        %v2361 = vsub.s32 0, %v2360
        %v2362 = vrot.slane %v2357, %v2361
        %v2364 = vadd.f32 %v2356, %v2362
        %v2365 = vmax.f32 %v2364, 0.0
        %v2366 = vld [vmem:[#allocation29] sm:$0xff]
        %v2367 = vld [vmem:[#allocation29 + $0x8] sm:$0xff]
        %v2368 = vld [vmem:[#allocation29 + $0x10] sm:$0xff]
        %v2369 = vld [vmem:[#allocation29 + $0x18] sm:$0xff]
        %v2370 = vld [vmem:[#allocation29 + $0x20] sm:$0xff]
        %v2371 = vld [vmem:[#allocation29 + $0x28] sm:$0xff]
        %v2372 = vld [vmem:[#allocation29 + $0x30] sm:$0xff]
        %v2373 = vld [vmem:[#allocation29 + $0x38] sm:$0xff]
        %v2374 = vld [vmem:[#allocation29 + $0x40] sm:$0xff]
        %v2375 = vld [vmem:[#allocation29 + $0x48] sm:$0xff]
        %v2376 = vld [vmem:[#allocation29 + $0x50] sm:$0xff]
        %v2377 = vld [vmem:[#allocation29 + $0x58] sm:$0xff]
        %v2378 = vld [vmem:[#allocation29 + $0x60] sm:$0xff]
        %v2379 = vld [vmem:[#allocation29 + $0x68] sm:$0xff]
        %v2380 = vld [vmem:[#allocation29 + $0x70] sm:$0xff]
        %v2381 = vld [vmem:[#allocation29 + $0x78] sm:$0xff]
        %v2382 = vld [vmem:[#allocation29 + $0x80] sm:$0xff]
        %v2383 = vld [vmem:[#allocation29 + $0x88] sm:$0xff]
        %v2384 = vld [vmem:[#allocation29 + $0x90] sm:$0xff]
        %v2385 = vld [vmem:[#allocation29 + $0x98] sm:$0xff]
        %v2386 = vld [vmem:[#allocation29 + $0xa0] sm:$0xff]
        %v2387 = vld [vmem:[#allocation29 + $0xa8] sm:$0xff]
        %v2388 = vld [vmem:[#allocation29 + $0xb0] sm:$0xff]
        %v2389 = vld [vmem:[#allocation29 + $0xb8] sm:$0xff]
        %v2390 = vld [vmem:[#allocation29 + $0xc0] sm:$0xff]
        %v2391 = vld [vmem:[#allocation29 + $0xc8] sm:$0xff]
        %v2392 = vld [vmem:[#allocation29 + $0xd0] sm:$0xff]
        %v2393 = vld [vmem:[#allocation29 + $0xd8] sm:$0xff]
        %v2394 = vld [vmem:[#allocation29 + $0xe0] sm:$0xff]
        %v2395 = vld [vmem:[#allocation29 + $0xe8] sm:$0xff]
        %v2396 = vld [vmem:[#allocation29 + $0xf0] sm:$0xff]
        %v2397 = vld [vmem:[#allocation29 + $0xf8] sm:$0xff]
        %2398 = vmatprep.subr.mxu0 %v2367
        %2399 = vmatpush1.msra.mxu0 %v2366
        %2400 = vmatprep.subr.mxu0 %v2369
        %2401 = vmatpush1.msra.mxu0 %v2368
        %2402 = vmatprep.subr.mxu0 %v2371
        %2403 = vmatpush1.msra.mxu0 %v2370
        %2404 = vmatprep.subr.mxu0 %v2373
        %2405 = vmatpush1.msra.mxu0 %v2372
        %2406 = vmatprep.subr.mxu0 %v2375
        %2407 = vmatpush1.msra.mxu0 %v2374
        %2408 = vmatprep.subr.mxu0 %v2377
        %2409 = vmatpush1.msra.mxu0 %v2376
        %2410 = vmatprep.subr.mxu0 %v2379
        %2411 = vmatpush1.msra.mxu0 %v2378
        %2412 = vmatprep.subr.mxu0 %v2381
        %2413 = vmatpush1.msra.mxu0 %v2380
        %2414 = vmatprep.subr.mxu0 %v2383
        %2415 = vmatpush1.msra.mxu0 %v2382
        %2416 = vmatprep.subr.mxu0 %v2385
        %2417 = vmatpush1.msra.mxu0 %v2384
        %2418 = vmatprep.subr.mxu0 %v2387
        %2419 = vmatpush1.msra.mxu0 %v2386
        %2420 = vmatprep.subr.mxu0 %v2389
        %2421 = vmatpush1.msra.mxu0 %v2388
        %2422 = vmatprep.subr.mxu0 %v2391
        %2423 = vmatpush1.msra.mxu0 %v2390
        %2424 = vmatprep.subr.mxu0 %v2393
        %2425 = vmatpush1.msra.mxu0 %v2392
        %2426 = vmatprep.subr.mxu0 %v2395
        %2427 = vmatpush1.msra.mxu0 %v2394
        %2428 = vmatprep.subr.mxu0 %v2397
        %2429 = vmatpush1.msra.mxu0 %v2396
        %2430 = vmatprep.subr.mxu0 0.0
        %2431 = vmatpush1.msra.mxu0 0.0
        %2432 = vmatprep.subr.mxu0 0.0
        %2433 = vmatpush1.msra.mxu0 0.0
        %2434 = vmatprep.subr.mxu0 0.0
        %2435 = vmatpush1.msra.mxu0 0.0
        %2436 = vmatprep.subr.mxu0 0.0
        %2437 = vmatpush1.msra.mxu0 0.0
        %2438 = vmatprep.subr.mxu0 0.0
        %2439 = vmatpush1.msra.mxu0 0.0
        %2440 = vmatprep.subr.mxu0 0.0
        %2441 = vmatpush1.msra.mxu0 0.0
        %2442 = vmatprep.subr.mxu0 0.0
        %2443 = vmatpush1.msra.mxu0 0.0
        %2444 = vmatprep.subr.mxu0 0.0
        %2445 = vmatpush1.msra.mxu0 0.0
        %2446 = vmatprep.subr.mxu0 0.0
        %2447 = vmatpush1.msra.mxu0 0.0
        %2448 = vmatprep.subr.mxu0 0.0
        %2449 = vmatpush1.msra.mxu0 0.0
        %2450 = vmatprep.subr.mxu0 0.0
        %2451 = vmatpush1.msra.mxu0 0.0
        %2452 = vmatprep.subr.mxu0 0.0
        %2453 = vmatpush1.msra.mxu0 0.0
        %2454 = vmatprep.subr.mxu0 0.0
        %2455 = vmatpush1.msra.mxu0 0.0
        %2456 = vmatprep.subr.mxu0 0.0
        %2457 = vmatpush1.msra.mxu0 0.0
        %2458 = vmatprep.subr.mxu0 0.0
        %2459 = vmatpush1.msra.mxu0 0.0
        %2460 = vmatprep.subr.mxu0 0.0
        %2461 = vmatpush1.msra.mxu0 0.0
        %2462 = vmatprep.mubr.f32.mxu0 0.0
        %2463 = vmatmul.mubr.f32.gmra.mrb[0].mxu0 %v2365
        %v2464 = vpop.f32.mrb[0].mxu0
        %v2465 = vadd.f32 0.0, %v2464
        %v2466 = vpop.f32.mrb[0].mxu0
        %v2467 = vadd.f32 0.0, %v2466
        %2468 = vdwg.mxu0
        %v2469 = vld [vmem:[%s25] sm:$0x3]
        %v2471 = vlaneseq
        %v2472 = vshrl.u32 %v2471, 7
        %v2473 = vsub.s32 0, %v2472
        %v2474 = vrot.slane %v2469, %v2473
        %v2475 = vlaneseq
        %v2476 = vshrl.u32 %v2475, 7
        %v2477 = vsub.s32 1, %v2476
        %v2478 = vrot.slane %v2469, %v2477
        %v2481 = vmul.f32 %v2465, %v2474
        %v2482 = vmul.f32 %v2467, %v2478
        %v2483 = vld [vmem:[%s26] sm:$0x3]
        %v2485 = vlaneseq
        %v2486 = vshrl.u32 %v2485, 7
        %v2487 = vsub.s32 0, %v2486
        %v2488 = vrot.slane %v2483, %v2487
        %v2489 = vlaneseq
        %v2490 = vshrl.u32 %v2489, 7
        %v2491 = vsub.s32 1, %v2490
        %v2492 = vrot.slane %v2483, %v2491
        %v2495 = vadd.f32 %v2481, %v2488
        %v2496 = vadd.f32 %v2482, %v2492
        %v2497 = vmax.f32 %v2495, 0.0
        %v2498 = vmax.f32 %v2496, 0.0
        %2499 = vst [vmem:[%s1077] sm:$0xff] %v2497
        %2500 = vst [vmem:[%s1077 + $0x8] sm:$0xff] %v2498
        %s2501 = sand.u32 %s636, 1
        %s2502 = scalar_lea.sflag [#allocation8], %s2501
        %s2503 = sand.u32 %s636, 1
        %s2504 = smul.addr %s2503, 16
        %s2505 = scalar_lea.vmem [#allocation30], %s2504
        %s2506 = sand.u32 %s662, 1
        %s2507 = scalar_lea.sflag [#allocation32], %s2506
        %s2508 = sand.u32 %s662, 1
        %s2509 = smul.addr %s2508, 16
        %s2510 = scalar_lea.vmem [#allocation31], %s2509
        // Predicated region
        $region189: #{tpu_custom_call.1} parent=127 // pred_check
          %p2511 = pneg %p646
        $region190: #{tpu_custom_call.1} parent=127 // pred_check_branch
          %2513 = sbr.rel (%p2511) target = $region192
        $region191: #{tpu_custom_call.1} parent=127 // pred_region
          %s2515 = ssub.s32 256, 256
          %2516 = vsyncadd %s2502, %s2515
          %s2517 = smul.addr %s56, 2
          %s2518 = smul.addr %s2517, 128
          %s2519 = scalar_lea.hbm %s27, %s2518
          %s2520 = sshll.u32 %s2505, 4
          %s2521 = int_to_ptr.vmem [resolvable:$true] %s2520
          %2526 = dma.vmem_to_hbm [thread:$0]  %s2521, 256, %s2519, %s2502, 128, 128, 8
        $region192: #{tpu_custom_call.1} parent=127 // pred_fallthru
          _
        // Predicated region
        $region193: #{tpu_custom_call.1} parent=127 // pred_check
          %p2527 = pneg %p672
        $region194: #{tpu_custom_call.1} parent=127 // pred_check_branch
          %2529 = sbr.rel (%p2527) target = $region196
        $region195: #{tpu_custom_call.1} parent=127 // pred_region
          %s2531 = ssub.s32 256, 256
          %2532 = vsyncadd %s2507, %s2531
          %s2533 = smul.addr %s56, 2
          %s2534 = smul.addr %s2533, 128
          %s2535 = scalar_lea.hbm %s28, %s2534
          %s2537 = sshll.u32 %s2510, 4
          %s2538 = int_to_ptr.vmem [resolvable:$true] %s2537
          %2540 = dma.vmem_to_hbm [thread:$0]  %s2538, 256, %s2535, %s2507
        $region196: #{tpu_custom_call.1} parent=127 // pred_fallthru
          _
      $region128: #{tpu_custom_call.1} parent=5 // pred_fallthru
        _
      %p2541 = scmp.le.s32.totalorder 2, %s51
      // Predicated region
      $region197: #{tpu_custom_call.1} parent=5 // pred_check
        %p2542 = pneg %p2541
      $region198: #{tpu_custom_call.1} parent=5 // pred_check_branch
        %2544 = sbr.rel (%p2542) target = $region200
      $region199: #{tpu_custom_call.1} parent=5 // pred_region
        %s2545 = ssub.s32 %s51, 2
        // Predicated region
        $region201: #{tpu_custom_call.1} parent=199 // pred_check
          %p2546 = pneg %p652
        $region202: #{tpu_custom_call.1} parent=199 // pred_check_branch
          %2548 = sbr.rel (%p2546) target = $region204
        $region203: #{tpu_custom_call.1} parent=199 // pred_region
          %s2549 = sand.u32 %s637, 1
          %s2550 = scalar_lea.sflag [#allocation8], %s2549
          %s2551 = sand.u32 %s637, 1
          %s2552 = smul.addr %s2551, 16
          %s2553 = scalar_lea.vmem [#allocation30], %s2552
          %2554 = dma.done %s2550, 256
        $region204: #{tpu_custom_call.1} parent=199 // pred_fallthru
          _
        // Predicated region
        $region205: #{tpu_custom_call.1} parent=199 // pred_check
          %p2555 = pneg %p678
        $region206: #{tpu_custom_call.1} parent=199 // pred_check_branch
          %2557 = sbr.rel (%p2555) target = $region208
        $region207: #{tpu_custom_call.1} parent=199 // pred_region
          %s2558 = sand.u32 %s663, 1
          %s2559 = scalar_lea.sflag [#allocation32], %s2558
          %s2560 = sand.u32 %s663, 1
          %s2561 = smul.addr %s2560, 16
          %s2562 = scalar_lea.vmem [#allocation31], %s2561
          %2563 = dma.done %s2559, 256
        $region208: #{tpu_custom_call.1} parent=199 // pred_fallthru
          _
      $region200: #{tpu_custom_call.1} parent=5 // pred_fallthru
        _
    $region6: #{tpu_custom_call.1} parent=1 // loop_footer
      %s55 = sadd.s32 1, %s51
    $region7: #{tpu_custom_call.1} parent=1 // loop_footer_branch
      %50 = sbr.rel target = $region3
    $region8: #{tpu_custom_call.1} parent=1 // loop_exit
      _
    %2564 = vsyncpa [#allocation7], 1
    %s2565 = scalar_lea.sflag [#allocation7], 1
    %2566 = vsyncpa %s2565, 1
    %2567 = vsyncpa [#allocation10], 1
    %2568 = vsyncpa [#allocation13], 1
    %2569 = vsyncpa [#allocation16], 1
    %2570 = vsyncpa [#allocation19], 1
    %2571 = vsyncpa [#allocation22], 1
    %2572 = vsyncpa [#allocation25], 1
    %2573 = vsyncpa [#allocation28], 1
    %2574 = vsyncpa [#allocation8], 1
    %s2575 = scalar_lea.sflag [#allocation8], 1
    %2576 = vsyncpa %s2575, 1
    %2577 = vsyncpa [#allocation32], 1
    %s2578 = scalar_lea.sflag [#allocation32], 1
    %2579 = vsyncpa %s2578, 1

</llo_original>
